<compile_context>
chip_gen: v7x
topology: tpu7x:2x2x1
jax: 0.10.0
libtpu: 0.0.40
codegen_flags: <defaults>
</compile_context>

<pallas_src>
import numpy as np
import jax
import jax.numpy as jnp
from jax.experimental import pallas as pl
from jax.experimental.pallas import tpu as pltpu

NUM_FEAT = 10
HIDDEN = 20
NUM_CLASSES = 2
NUM_LAYERS = 3
BN_EPS = 1e-5
NEG_SLOPE = 0.2

FP = HIDDEN           # common (padded) input width for every layer (10 -> 20 for layer 0)
WEXT = HIDDEN + 2     # fused [h | alpha_src | alpha_dst] width
OUT_PAD = 128         # lane-dense output width


# ----------------------------- kernel -----------------------------------------
def _make_kernel(num_blocks, sb, graphs_pad, n_pad, inv_cnt):
    gn = num_blocks * sb          # == graphs_pad * n_pad

    def kernel(x_ref, adj_ref, mask_ref, w_ref, vec_ref, fc_ref,
               logits_ref, node_ref, graph_ref):
        h = x_ref[...]                           # (GN, FP) flat node features (f32)
        edge_mask = adj_ref[...] > 0             # (NB, sb, sb) bool; [b,i,j]=edge j->i
        node_mask = mask_ref[...]                # (GN, 1) 1.0 for real nodes
        vec = vec_ref[...]                       # (3*L, H): bias/gamma/beta rows (f32)

        for l in range(NUM_LAYERS):
            w_ext = w_ref[l]                                     # (FP, H+2) bf16
            bias = vec[3 * l + 0].reshape(1, HIDDEN)
            gamma = vec[3 * l + 1].reshape(1, HIDDEN)
            beta = vec[3 * l + 2].reshape(1, HIDDEN)

            # ---- GATConv (heads=1, no self loops) ----------------------------
            # bf16 operands, f32 accumulation (MXU-native on v5e/v6e/v7x).
            hz = jnp.dot(h.astype(jnp.bfloat16), w_ext,
                         preferred_element_type=jnp.float32)     # (GN, H+2)
            hz3 = hz.reshape(num_blocks, sb, WEXT)               # super-blocks
            hfeat = hz3[:, :, :HIDDEN]                           # (NB, sb, H)
            alpha_d = hz3[:, :, HIDDEN + 1:HIDDEN + 2]           # (NB, sb, 1)
            alpha_s = jnp.swapaxes(hz3[:, :, HIDDEN:HIDDEN + 1], 1, 2)   # (NB, 1, sb)
            e = alpha_d + alpha_s                                # (NB, sb, sb)
            e = jnp.where(e > 0, e, NEG_SLOPE * e)               # LeakyReLU(0.2)
            e = jnp.where(edge_mask, e, jnp.float32(-1e30))      # mask (also cross-graph)
            m = jnp.max(e, axis=2, keepdims=True)
            p = jnp.where(edge_mask, jnp.exp(e - m), jnp.float32(0.0))
            denom = jnp.sum(p, axis=2, keepdims=True)
            attn = p * pl.reciprocal(jnp.maximum(denom, jnp.float32(1e-30)),
                                     approx=True)
            # lane-dense K ~= 128 aggregation matmuls (NB of them), bf16 in / f32 acc
            agg = jnp.einsum('bij,bjh->bih',
                             attn.astype(jnp.bfloat16),
                             hfeat.astype(jnp.bfloat16),
                             preferred_element_type=jnp.float32)  # (NB, sb, H)
            h = agg.reshape(gn, HIDDEN) + bias

            # ---- BatchNorm1d (training-mode stats over real nodes) + ReLU ----
            hm = h * node_mask
            mean = jnp.sum(hm, axis=0, keepdims=True) * inv_cnt
            d = (h - mean) * node_mask
            var = jnp.sum(d * d, axis=0, keepdims=True) * inv_cnt
            hn = (h - mean) * jax.lax.rsqrt(var + BN_EPS)
            h = jnp.maximum(hn * gamma + beta, 0.0) * node_mask
            # TODO(synk): F.dropout with p=0 is a no-op; nonzero dropout would need pltpu PRNG.

        # ---- outputs: lane-dense 128-wide slabs (unmasked stores) -------------
        zpad_n = jnp.zeros((gn, OUT_PAD - HIDDEN), jnp.float32)
        node_ref[...] = jnp.concatenate([h, zpad_n], axis=1)
        g_emb = jnp.sum(h.reshape(graphs_pad, n_pad, HIDDEN), axis=1)    # add-pool
        zpad_g = jnp.zeros((graphs_pad, OUT_PAD - HIDDEN), jnp.float32)
        graph_ref[...] = jnp.concatenate([g_emb, zpad_g], axis=1)
        fc = fc_ref[...]                                                 # (H+1, 128) bf16
        logits_ref[...] = (jnp.dot(g_emb.astype(jnp.bfloat16), fc[:HIDDEN, :],
                                   preferred_element_type=jnp.float32)
                           + fc[HIDDEN:HIDDEN + 1, :].astype(jnp.float32))

    return kernel


# ----------------------------- wrapper -----------------------------------------
def gat_forward(x, edge_index, batch, params, num_graphs):
    f32 = jnp.float32
    bf16 = jnp.bfloat16
    n_total = int(x.shape[0])
    batch_np = np.asarray(batch)
    assert np.all(np.diff(batch_np) >= 0), "batch must group nodes per graph (PyG convention)"
    counts = np.bincount(batch_np, minlength=num_graphs)
    n_pad = int(max(8, -(-int(counts.max()) // 8) * 8))      # sublane-aligned per-graph block

    # Super-block packing: S graphs share one lane-dense (sb x sb) attention block.
    S = max(1, 128 // n_pad)
    graphs_pad = -(-num_graphs // S) * S                      # pad graph count to multiple of S
    num_blocks = graphs_pad // S
    sb = S * n_pad
    gn = graphs_pad * n_pad                                   # == num_blocks * sb

    offsets = np.concatenate([[0], np.cumsum(counts)[:-1]])
    pos = jnp.asarray(np.arange(n_total) - offsets[batch_np], jnp.int32)
    batch = jnp.asarray(batch_np, jnp.int32)
    flat_idx = batch * n_pad + pos                            # row in the flat (GN, .) layout
    blk = batch // S                                          # super-block index
    row = (batch % S) * n_pad + pos                           # row within super-block

    # TODO(synk): these scatters (x_flat, adj) and the post-kernel node gather are
    # separate XLA kernels per call; for production either cache the padded layout
    # per batch structure or pull the gather into the kernel via PrefetchScalarGridSpec.
    x_pad = jnp.pad(x.astype(f32), ((0, 0), (0, FP - NUM_FEAT)))
    x_flat = jnp.zeros((gn, FP), f32).at[flat_idx].set(x_pad)
    node_mask = jnp.zeros((gn,), f32).at[flat_idx].set(1.0).reshape(gn, 1)

    # Block-diagonal bf16 adjacency super-blocks: adj[b, i, j] = 1 iff edge j -> i.
    src, dst = edge_index[0], edge_index[1]
    adj = (jnp.zeros((num_blocks, sb, sb), f32)
           .at[blk[dst], row[dst], row[src]].set(1.0)
           .astype(bf16))

    # Fused + stacked layer params: W_ext = [W^T | W^T a_src | W^T a_dst], Fin padded to FP.
    w_list, vec_rows = [], []
    for layer in params["layers"]:
        w_t = layer["w"].T.astype(f32)                                # (Fin, H)
        a_s = layer["a_src"].reshape(HIDDEN, 1).astype(f32)
        a_d = layer["a_dst"].reshape(HIDDEN, 1).astype(f32)
        w_ext = jnp.concatenate([w_t, w_t @ a_s, w_t @ a_d], axis=1)  # (Fin, H+2)
        w_ext = jnp.pad(w_ext, ((0, FP - w_ext.shape[0]), (0, 0)))
        w_list.append(w_ext)
        vec_rows += [layer["bias"].astype(f32), layer["gamma"].astype(f32),
                     layer["beta"].astype(f32)]
    w_stack = jnp.stack(w_list).astype(bf16)                          # (L, FP, H+2) bf16
    vec_stack = jnp.stack(vec_rows)                                   # (3L, H) f32

    fc_pack = jnp.zeros((HIDDEN + 1, OUT_PAD), f32)
    fc_pack = fc_pack.at[:HIDDEN, :NUM_CLASSES].set(params["fc_w"].T.astype(f32))
    fc_pack = fc_pack.at[HIDDEN, :NUM_CLASSES].set(params["fc_b"].astype(f32))
    fc_pack = fc_pack.astype(bf16)

    kernel = _make_kernel(num_blocks, sb, graphs_pad, n_pad, 1.0 / n_total)
    vmem = pl.BlockSpec(memory_space=pltpu.MemorySpace.VMEM)
    out_shapes = (
        jax.ShapeDtypeStruct((graphs_pad, OUT_PAD), f32),    # logits slab
        jax.ShapeDtypeStruct((gn, OUT_PAD), f32),            # node-emb slab
        jax.ShapeDtypeStruct((graphs_pad, OUT_PAD), f32),    # graph-emb slab
    )

    flops = NUM_LAYERS * (2 * gn * FP * WEXT
                          + 2 * num_blocks * sb * sb * HIDDEN
                          + 8 * num_blocks * sb * sb
                          + 10 * gn * HIDDEN) + 2 * graphs_pad * HIDDEN * OUT_PAD
    in_bytes = (4 * (x_flat.size + node_mask.size + vec_stack.size)
                + 2 * (adj.size + w_stack.size + fc_pack.size))
    out_bytes = 4 * sum(int(np.prod(s.shape)) for s in out_shapes)
    interm_bytes = 4 * (gn * WEXT + 3 * num_blocks * sb * sb + 4 * gn * HIDDEN)
    vmem_limit = int(min(max(2 * (in_bytes + out_bytes + interm_bytes), 32 << 20),
                         64 << 20))

    # TODO(synk): a per-super-block grid (megacore on v7x) requires cross-core exchange
    # of BatchNorm statistics (stats span all graphs) via CMEM partial sums + barrier;
    # kept single-step here.
    logits_slab, node_slab, graph_slab = pl.pallas_call(
        kernel,
        out_shape=out_shapes,
        in_specs=[vmem] * 6,
        out_specs=(vmem, vmem, vmem),
        compiler_params=pltpu.CompilerParams(vmem_limit_bytes=vmem_limit),
        cost_estimate=pl.CostEstimate(
            flops=int(flops),
            transcendentals=int(NUM_LAYERS * num_blocks * sb * (sb + 1)),
            bytes_accessed=int(in_bytes + out_bytes)),
    )(x_flat, adj, node_mask, w_stack, vec_stack, fc_pack)

    out = logits_slab[:num_graphs, :NUM_CLASSES]
    node_embs = node_slab[flat_idx, :HIDDEN]       # back to original node order
    graph_emb = graph_slab[:num_graphs, :HIDDEN]
    return out, node_embs, graph_emb


# -------------------------- deterministic params --------------------------------
def init_params(key):
    layers = []
    in_dims = [NUM_FEAT] + [HIDDEN] * (NUM_LAYERS - 1)
    for i, fin in enumerate(in_dims):
        k = jax.random.fold_in(key, i)
        kw, ks, kd = jax.random.split(k, 3)
        layers.append(dict(
            w=jax.random.normal(kw, (HIDDEN, fin), jnp.float32) * 0.3,
            a_src=jax.random.normal(ks, (HIDDEN,), jnp.float32) * 0.3,
            a_dst=jax.random.normal(kd, (HIDDEN,), jnp.float32) * 0.3,
            bias=jnp.zeros((HIDDEN,), jnp.float32),
            gamma=jnp.ones((HIDDEN,), jnp.float32),
            beta=jnp.zeros((HIDDEN,), jnp.float32),
        ))
    kf = jax.random.fold_in(key, 100)
    fc_w = jax.random.normal(kf, (NUM_CLASSES, HIDDEN), jnp.float32) * 0.3
    fc_b = jnp.zeros((NUM_CLASSES,), jnp.float32)
    return dict(layers=layers, fc_w=fc_w, fc_b=fc_b)


# --------------------------------- main ------------------------------------------
if __name__ == "__main__":
    key = jax.random.PRNGKey(0)
    params = init_params(key)

    # Small synthetic batch: 2 graphs of 8 nodes each (16 nodes total).
    N = 16
    NUM_GRAPHS = 2
    x = jax.random.normal(jax.random.fold_in(key, 7), (N, NUM_FEAT), jnp.float32)
    batch = jnp.array([0] * 8 + [1] * 8, jnp.int32)

    # Bidirectional ring within each graph -> every node has incoming edges.
    srcs, dsts = [], []
    for g in range(NUM_GRAPHS):
        base = g * 8
        for i in range(8):
            a, b = base + i, base + (i + 1) % 8
            srcs += [a, b]
            dsts += [b, a]
    edge_index = jnp.array([srcs, dsts], jnp.int32)

    out, node_embs, graph_emb = gat_forward(x, edge_index, batch, params, NUM_GRAPHS)
    jax.block_until_ready((out, node_embs, graph_emb))

    assert out.shape == (NUM_GRAPHS, NUM_CLASSES)
    assert node_embs.shape == (N, HIDDEN)
    assert graph_emb.shape == (NUM_GRAPHS, HIDDEN)
    assert bool(jnp.all(jnp.isfinite(out)))
    assert bool(jnp.all(jnp.isfinite(node_embs)))
    assert bool(jnp.all(jnp.isfinite(graph_emb)))
    print("KERNEL_OK")
</pallas_src>

<mosaic_0001>
module attributes {stable_mosaic.version = 11 : i64} {
  func.func @kernel(%arg0: memref<128x20xf32, #tpu.memory_space<vmem>>, %arg1: memref<1x128x128xbf16, #tpu.memory_space<vmem>>, %arg2: memref<128x1xf32, #tpu.memory_space<vmem>>, %arg3: memref<3x20x22xbf16, #tpu.memory_space<vmem>>, %arg4: memref<9x20xf32, #tpu.memory_space<vmem>>, %arg5: memref<21x128xbf16, #tpu.memory_space<vmem>>, %arg6: memref<16x128xf32, #tpu.memory_space<vmem>>, %arg7: memref<128x128xf32, #tpu.memory_space<vmem>>, %arg8: memref<16x128xf32, #tpu.memory_space<vmem>>) attributes {dimension_semantics = [], scalar_prefetch = 0 : i64, scratch_operands = 0 : i64, tpu.core_type = #tpu.core_type<tc>} {
    %c0 = arith.constant 0 : index
    %c0_0 = arith.constant 0 : index
    %0 = vector.load %arg0[%c0, %c0_0] : memref<128x20xf32, #tpu.memory_space<vmem>>, vector<128x20xf32>
    %c0_1 = arith.constant 0 : index
    %c0_2 = arith.constant 0 : index
    %c0_3 = arith.constant 0 : index
    %1 = vector.load %arg1[%c0_1, %c0_2, %c0_3] : memref<1x128x128xbf16, #tpu.memory_space<vmem>>, vector<1x128x128xbf16>
    %cst = arith.constant 0.000000e+00 : bf16
    %2 = vector.broadcast %cst : bf16 to vector<1x128x128xbf16>
    %3 = arith.cmpf ogt, %1, %2 : vector<1x128x128xbf16>
    %c0_4 = arith.constant 0 : index
    %c0_5 = arith.constant 0 : index
    %4 = vector.load %arg2[%c0_4, %c0_5] : memref<128x1xf32, #tpu.memory_space<vmem>>, vector<128x1xf32>
    %c0_6 = arith.constant 0 : index
    %c0_7 = arith.constant 0 : index
    %5 = vector.load %arg4[%c0_6, %c0_7] : memref<9x20xf32, #tpu.memory_space<vmem>>, vector<9x20xf32>
    %c0_8 = arith.constant 0 : index
    %c0_9 = arith.constant 0 : index
    %c0_10 = arith.constant 0 : index
    %6 = vector.load %arg3[%c0_8, %c0_9, %c0_10] : memref<3x20x22xbf16, #tpu.memory_space<vmem>>, vector<1x20x22xbf16>
    %7 = vector.shape_cast %6 : vector<1x20x22xbf16> to vector<20x22xbf16>
    %8 = vector.extract_strided_slice %5 {offsets = [0, 0], sizes = [1, 20], strides = [1, 1]} : vector<9x20xf32> to vector<1x20xf32>
    %9 = vector.shape_cast %8 : vector<1x20xf32> to vector<20xf32>
    %10 = vector.shape_cast %9 : vector<20xf32> to vector<1x20xf32>
    %11 = vector.extract_strided_slice %5 {offsets = [1, 0], sizes = [1, 20], strides = [1, 1]} : vector<9x20xf32> to vector<1x20xf32>
    %12 = vector.shape_cast %11 : vector<1x20xf32> to vector<20xf32>
    %13 = vector.shape_cast %12 : vector<20xf32> to vector<1x20xf32>
    %14 = vector.extract_strided_slice %5 {offsets = [2, 0], sizes = [1, 20], strides = [1, 1]} : vector<9x20xf32> to vector<1x20xf32>
    %15 = vector.shape_cast %14 : vector<1x20xf32> to vector<20xf32>
    %16 = vector.shape_cast %15 : vector<20xf32> to vector<1x20xf32>
    %17 = arith.truncf %0 : vector<128x20xf32> to vector<128x20xbf16>
    %cst_11 = arith.constant dense<0.000000e+00> : vector<128x22xf32>
    %18 = tpu.matmul %17, %7, %cst_11 {dimension_numbers = #tpu.dot_dimension_numbers<[1], [0], [0], [1], [0, 0, 1, 1], [], []>} : vector<128x20xbf16>, vector<20x22xbf16>, vector<128x22xf32> -> vector<128x22xf32>
    %19 = vector.shape_cast %18 : vector<128x22xf32> to vector<1x128x22xf32>
    %20 = vector.extract_strided_slice %19 {offsets = [0, 0, 0], sizes = [1, 128, 20], strides = [1, 1, 1]} : vector<1x128x22xf32> to vector<1x128x20xf32>
    %21 = vector.extract_strided_slice %19 {offsets = [0, 0, 21], sizes = [1, 128, 1], strides = [1, 1, 1]} : vector<1x128x22xf32> to vector<1x128x1xf32>
    %22 = vector.extract_strided_slice %19 {offsets = [0, 0, 20], sizes = [1, 128, 1], strides = [1, 1, 1]} : vector<1x128x22xf32> to vector<1x128x1xf32>
    %23 = tpu.transpose %22, [0, 2, 1] : vector<1x128x1xf32> -> vector<1x1x128xf32>
    %24 = vector.broadcast %21 : vector<1x128x1xf32> to vector<1x128x128xf32>
    %25 = vector.broadcast %23 : vector<1x1x128xf32> to vector<1x128x128xf32>
    %26 = arith.addf %24, %25 : vector<1x128x128xf32>
    %cst_12 = arith.constant 0.000000e+00 : f32
    %27 = vector.broadcast %cst_12 : f32 to vector<1x128x128xf32>
    %28 = arith.cmpf ogt, %26, %27 : vector<1x128x128xf32>
    %cst_13 = arith.constant 2.000000e-01 : f32
    %29 = vector.broadcast %cst_13 : f32 to vector<1x128x128xf32>
    %30 = arith.mulf %29, %26 : vector<1x128x128xf32>
    %31 = arith.select %28, %26, %30 : vector<1x128x128xi1>, vector<1x128x128xf32>
    %cst_14 = arith.constant -1.000000e+30 : f32
    %32 = vector.broadcast %cst_14 : f32 to vector<1x128x128xf32>
    %33 = arith.select %3, %31, %32 : vector<1x128x128xi1>, vector<1x128x128xf32>
    %cst_15 = arith.constant dense<0xFF800000> : vector<1x128xf32>
    %34 = vector.multi_reduction <maximumf>, %33, %cst_15 [2] : vector<1x128x128xf32> to vector<1x128xf32>
    %35 = vector.shape_cast %34 : vector<1x128xf32> to vector<1x128x1xf32>
    %36 = vector.broadcast %35 : vector<1x128x1xf32> to vector<1x128x128xf32>
    %37 = arith.subf %33, %36 : vector<1x128x128xf32>
    %38 = math.exp %37 : vector<1x128x128xf32>
    %cst_16 = arith.constant 0.000000e+00 : f32
    %39 = vector.broadcast %cst_16 : f32 to vector<1x128x128xf32>
    %40 = arith.select %3, %38, %39 : vector<1x128x128xi1>, vector<1x128x128xf32>
    %cst_17 = arith.constant dense<0.000000e+00> : vector<1x128xf32>
    %41 = vector.multi_reduction <add>, %40, %cst_17 [2] : vector<1x128x128xf32> to vector<1x128xf32>
    %42 = vector.shape_cast %41 : vector<1x128xf32> to vector<1x128x1xf32>
    %cst_18 = arith.constant 1.000000e-30 : f32
    %43 = vector.broadcast %cst_18 : f32 to vector<1x128x1xf32>
    %44 = arith.maximumf %42, %43 : vector<1x128x1xf32>
    %45 = tpu.reciprocal %44 {approx = true} : vector<1x128x1xf32> -> vector<1x128x1xf32>
    %46 = vector.broadcast %45 : vector<1x128x1xf32> to vector<1x128x128xf32>
    %47 = arith.mulf %40, %46 : vector<1x128x128xf32>
    %48 = arith.truncf %47 : vector<1x128x128xf32> to vector<1x128x128xbf16>
    %49 = arith.truncf %20 : vector<1x128x20xf32> to vector<1x128x20xbf16>
    "tpu.trace_start"() <{level = 10 : i32, message = "bij,bjh->bih"}> : () -> ()
    %cst_19 = arith.constant dense<0.000000e+00> : vector<1x128x20xf32>
    %50 = tpu.matmul %48, %49, %cst_19 {dimension_numbers = #tpu.dot_dimension_numbers<[2], [1], [1], [2], [0, 0, 0, 1, 1, 2], [0], [0]>} : vector<1x128x128xbf16>, vector<1x128x20xbf16>, vector<1x128x20xf32> -> vector<1x128x20xf32>
    "tpu.trace_stop"() : () -> ()
    %51 = vector.shape_cast %50 : vector<1x128x20xf32> to vector<128x20xf32>
    %52 = vector.broadcast %10 : vector<1x20xf32> to vector<128x20xf32>
    %53 = arith.addf %51, %52 : vector<128x20xf32>
    %54 = vector.broadcast %4 : vector<128x1xf32> to vector<128x20xf32>
    %55 = arith.mulf %53, %54 : vector<128x20xf32>
    %cst_20 = arith.constant dense<0.000000e+00> : vector<20xf32>
    %56 = vector.multi_reduction <add>, %55, %cst_20 [0] : vector<128x20xf32> to vector<20xf32>
    %57 = vector.shape_cast %56 : vector<20xf32> to vector<1x20xf32>
    %cst_21 = arith.constant 6.250000e-02 : f32
    %58 = vector.broadcast %cst_21 : f32 to vector<1x20xf32>
    %59 = arith.mulf %57, %58 : vector<1x20xf32>
    %60 = vector.broadcast %59 : vector<1x20xf32> to vector<128x20xf32>
    %61 = arith.subf %53, %60 : vector<128x20xf32>
    %62 = vector.broadcast %4 : vector<128x1xf32> to vector<128x20xf32>
    %63 = arith.mulf %61, %62 : vector<128x20xf32>
    %64 = arith.mulf %63, %63 : vector<128x20xf32>
    %cst_22 = arith.constant dense<0.000000e+00> : vector<20xf32>
    %65 = vector.multi_reduction <add>, %64, %cst_22 [0] : vector<128x20xf32> to vector<20xf32>
    %66 = vector.shape_cast %65 : vector<20xf32> to vector<1x20xf32>
    %cst_23 = arith.constant 6.250000e-02 : f32
    %67 = vector.broadcast %cst_23 : f32 to vector<1x20xf32>
    %68 = arith.mulf %66, %67 : vector<1x20xf32>
    %69 = vector.broadcast %59 : vector<1x20xf32> to vector<128x20xf32>
    %70 = arith.subf %53, %69 : vector<128x20xf32>
    %cst_24 = arith.constant 9.99999974E-6 : f32
    %71 = vector.broadcast %cst_24 : f32 to vector<1x20xf32>
    %72 = arith.addf %68, %71 : vector<1x20xf32>
    %73 = math.rsqrt %72 : vector<1x20xf32>
    %74 = vector.broadcast %73 : vector<1x20xf32> to vector<128x20xf32>
    %75 = arith.mulf %70, %74 : vector<128x20xf32>
    %76 = vector.broadcast %13 : vector<1x20xf32> to vector<128x20xf32>
    %77 = arith.mulf %75, %76 : vector<128x20xf32>
    %78 = vector.broadcast %16 : vector<1x20xf32> to vector<128x20xf32>
    %79 = arith.addf %77, %78 : vector<128x20xf32>
    %cst_25 = arith.constant 0.000000e+00 : f32
    %80 = vector.broadcast %cst_25 : f32 to vector<128x20xf32>
    %81 = arith.maximumf %79, %80 : vector<128x20xf32>
    %82 = vector.broadcast %4 : vector<128x1xf32> to vector<128x20xf32>
    %83 = arith.mulf %81, %82 : vector<128x20xf32>
    %c1 = arith.constant 1 : index
    %c0_26 = arith.constant 0 : index
    %c0_27 = arith.constant 0 : index
    %84 = vector.load %arg3[%c1, %c0_26, %c0_27] : memref<3x20x22xbf16, #tpu.memory_space<vmem>>, vector<1x20x22xbf16>
    %85 = vector.shape_cast %84 : vector<1x20x22xbf16> to vector<20x22xbf16>
    %86 = vector.extract_strided_slice %5 {offsets = [3, 0], sizes = [1, 20], strides = [1, 1]} : vector<9x20xf32> to vector<1x20xf32>
    %87 = vector.shape_cast %86 : vector<1x20xf32> to vector<20xf32>
    %88 = vector.shape_cast %87 : vector<20xf32> to vector<1x20xf32>
    %89 = vector.extract_strided_slice %5 {offsets = [4, 0], sizes = [1, 20], strides = [1, 1]} : vector<9x20xf32> to vector<1x20xf32>
    %90 = vector.shape_cast %89 : vector<1x20xf32> to vector<20xf32>
    %91 = vector.shape_cast %90 : vector<20xf32> to vector<1x20xf32>
    %92 = vector.extract_strided_slice %5 {offsets = [5, 0], sizes = [1, 20], strides = [1, 1]} : vector<9x20xf32> to vector<1x20xf32>
    %93 = vector.shape_cast %92 : vector<1x20xf32> to vector<20xf32>
    %94 = vector.shape_cast %93 : vector<20xf32> to vector<1x20xf32>
    %95 = arith.truncf %83 : vector<128x20xf32> to vector<128x20xbf16>
    %cst_28 = arith.constant dense<0.000000e+00> : vector<128x22xf32>
    %96 = tpu.matmul %95, %85, %cst_28 {dimension_numbers = #tpu.dot_dimension_numbers<[1], [0], [0], [1], [0, 0, 1, 1], [], []>} : vector<128x20xbf16>, vector<20x22xbf16>, vector<128x22xf32> -> vector<128x22xf32>
    %97 = vector.shape_cast %96 : vector<128x22xf32> to vector<1x128x22xf32>
    %98 = vector.extract_strided_slice %97 {offsets = [0, 0, 0], sizes = [1, 128, 20], strides = [1, 1, 1]} : vector<1x128x22xf32> to vector<1x128x20xf32>
    %99 = vector.extract_strided_slice %97 {offsets = [0, 0, 21], sizes = [1, 128, 1], strides = [1, 1, 1]} : vector<1x128x22xf32> to vector<1x128x1xf32>
    %100 = vector.extract_strided_slice %97 {offsets = [0, 0, 20], sizes = [1, 128, 1], strides = [1, 1, 1]} : vector<1x128x22xf32> to vector<1x128x1xf32>
    %101 = tpu.transpose %100, [0, 2, 1] : vector<1x128x1xf32> -> vector<1x1x128xf32>
    %102 = vector.broadcast %99 : vector<1x128x1xf32> to vector<1x128x128xf32>
    %103 = vector.broadcast %101 : vector<1x1x128xf32> to vector<1x128x128xf32>
    %104 = arith.addf %102, %103 : vector<1x128x128xf32>
    %cst_29 = arith.constant 0.000000e+00 : f32
    %105 = vector.broadcast %cst_29 : f32 to vector<1x128x128xf32>
    %106 = arith.cmpf ogt, %104, %105 : vector<1x128x128xf32>
    %cst_30 = arith.constant 2.000000e-01 : f32
    %107 = vector.broadcast %cst_30 : f32 to vector<1x128x128xf32>
    %108 = arith.mulf %107, %104 : vector<1x128x128xf32>
    %109 = arith.select %106, %104, %108 : vector<1x128x128xi1>, vector<1x128x128xf32>
    %cst_31 = arith.constant -1.000000e+30 : f32
    %110 = vector.broadcast %cst_31 : f32 to vector<1x128x128xf32>
    %111 = arith.select %3, %109, %110 : vector<1x128x128xi1>, vector<1x128x128xf32>
    %cst_32 = arith.constant dense<0xFF800000> : vector<1x128xf32>
    %112 = vector.multi_reduction <maximumf>, %111, %cst_32 [2] : vector<1x128x128xf32> to vector<1x128xf32>
    %113 = vector.shape_cast %112 : vector<1x128xf32> to vector<1x128x1xf32>
    %114 = vector.broadcast %113 : vector<1x128x1xf32> to vector<1x128x128xf32>
    %115 = arith.subf %111, %114 : vector<1x128x128xf32>
    %116 = math.exp %115 : vector<1x128x128xf32>
    %cst_33 = arith.constant 0.000000e+00 : f32
    %117 = vector.broadcast %cst_33 : f32 to vector<1x128x128xf32>
    %118 = arith.select %3, %116, %117 : vector<1x128x128xi1>, vector<1x128x128xf32>
    %cst_34 = arith.constant dense<0.000000e+00> : vector<1x128xf32>
    %119 = vector.multi_reduction <add>, %118, %cst_34 [2] : vector<1x128x128xf32> to vector<1x128xf32>
    %120 = vector.shape_cast %119 : vector<1x128xf32> to vector<1x128x1xf32>
    %cst_35 = arith.constant 1.000000e-30 : f32
    %121 = vector.broadcast %cst_35 : f32 to vector<1x128x1xf32>
    %122 = arith.maximumf %120, %121 : vector<1x128x1xf32>
    %123 = tpu.reciprocal %122 {approx = true} : vector<1x128x1xf32> -> vector<1x128x1xf32>
    %124 = vector.broadcast %123 : vector<1x128x1xf32> to vector<1x128x128xf32>
    %125 = arith.mulf %118, %124 : vector<1x128x128xf32>
    %126 = arith.truncf %125 : vector<1x128x128xf32> to vector<1x128x128xbf16>
    %127 = arith.truncf %98 : vector<1x128x20xf32> to vector<1x128x20xbf16>
    "tpu.trace_start"() <{level = 10 : i32, message = "bij,bjh->bih"}> : () -> ()
    %cst_36 = arith.constant dense<0.000000e+00> : vector<1x128x20xf32>
    %128 = tpu.matmul %126, %127, %cst_36 {dimension_numbers = #tpu.dot_dimension_numbers<[2], [1], [1], [2], [0, 0, 0, 1, 1, 2], [0], [0]>} : vector<1x128x128xbf16>, vector<1x128x20xbf16>, vector<1x128x20xf32> -> vector<1x128x20xf32>
    "tpu.trace_stop"() : () -> ()
    %129 = vector.shape_cast %128 : vector<1x128x20xf32> to vector<128x20xf32>
    %130 = vector.broadcast %88 : vector<1x20xf32> to vector<128x20xf32>
    %131 = arith.addf %129, %130 : vector<128x20xf32>
    %132 = vector.broadcast %4 : vector<128x1xf32> to vector<128x20xf32>
    %133 = arith.mulf %131, %132 : vector<128x20xf32>
    %cst_37 = arith.constant dense<0.000000e+00> : vector<20xf32>
    %134 = vector.multi_reduction <add>, %133, %cst_37 [0] : vector<128x20xf32> to vector<20xf32>
    %135 = vector.shape_cast %134 : vector<20xf32> to vector<1x20xf32>
    %cst_38 = arith.constant 6.250000e-02 : f32
    %136 = vector.broadcast %cst_38 : f32 to vector<1x20xf32>
    %137 = arith.mulf %135, %136 : vector<1x20xf32>
    %138 = vector.broadcast %137 : vector<1x20xf32> to vector<128x20xf32>
    %139 = arith.subf %131, %138 : vector<128x20xf32>
    %140 = vector.broadcast %4 : vector<128x1xf32> to vector<128x20xf32>
    %141 = arith.mulf %139, %140 : vector<128x20xf32>
    %142 = arith.mulf %141, %141 : vector<128x20xf32>
    %cst_39 = arith.constant dense<0.000000e+00> : vector<20xf32>
    %143 = vector.multi_reduction <add>, %142, %cst_39 [0] : vector<128x20xf32> to vector<20xf32>
    %144 = vector.shape_cast %143 : vector<20xf32> to vector<1x20xf32>
    %cst_40 = arith.constant 6.250000e-02 : f32
    %145 = vector.broadcast %cst_40 : f32 to vector<1x20xf32>
    %146 = arith.mulf %144, %145 : vector<1x20xf32>
    %147 = vector.broadcast %137 : vector<1x20xf32> to vector<128x20xf32>
    %148 = arith.subf %131, %147 : vector<128x20xf32>
    %cst_41 = arith.constant 9.99999974E-6 : f32
    %149 = vector.broadcast %cst_41 : f32 to vector<1x20xf32>
    %150 = arith.addf %146, %149 : vector<1x20xf32>
    %151 = math.rsqrt %150 : vector<1x20xf32>
    %152 = vector.broadcast %151 : vector<1x20xf32> to vector<128x20xf32>
    %153 = arith.mulf %148, %152 : vector<128x20xf32>
    %154 = vector.broadcast %91 : vector<1x20xf32> to vector<128x20xf32>
    %155 = arith.mulf %153, %154 : vector<128x20xf32>
    %156 = vector.broadcast %94 : vector<1x20xf32> to vector<128x20xf32>
    %157 = arith.addf %155, %156 : vector<128x20xf32>
    %cst_42 = arith.constant 0.000000e+00 : f32
    %158 = vector.broadcast %cst_42 : f32 to vector<128x20xf32>
    %159 = arith.maximumf %157, %158 : vector<128x20xf32>
    %160 = vector.broadcast %4 : vector<128x1xf32> to vector<128x20xf32>
    %161 = arith.mulf %159, %160 : vector<128x20xf32>
    %c2 = arith.constant 2 : index
    %c0_43 = arith.constant 0 : index
    %c0_44 = arith.constant 0 : index
    %162 = vector.load %arg3[%c2, %c0_43, %c0_44] : memref<3x20x22xbf16, #tpu.memory_space<vmem>>, vector<1x20x22xbf16>
    %163 = vector.shape_cast %162 : vector<1x20x22xbf16> to vector<20x22xbf16>
    %164 = vector.extract_strided_slice %5 {offsets = [6, 0], sizes = [1, 20], strides = [1, 1]} : vector<9x20xf32> to vector<1x20xf32>
    %165 = vector.shape_cast %164 : vector<1x20xf32> to vector<20xf32>
    %166 = vector.shape_cast %165 : vector<20xf32> to vector<1x20xf32>
    %167 = vector.extract_strided_slice %5 {offsets = [7, 0], sizes = [1, 20], strides = [1, 1]} : vector<9x20xf32> to vector<1x20xf32>
    %168 = vector.shape_cast %167 : vector<1x20xf32> to vector<20xf32>
    %169 = vector.shape_cast %168 : vector<20xf32> to vector<1x20xf32>
    %170 = vector.extract_strided_slice %5 {offsets = [8, 0], sizes = [1, 20], strides = [1, 1]} : vector<9x20xf32> to vector<1x20xf32>
    %171 = vector.shape_cast %170 : vector<1x20xf32> to vector<20xf32>
    %172 = vector.shape_cast %171 : vector<20xf32> to vector<1x20xf32>
    %173 = arith.truncf %161 : vector<128x20xf32> to vector<128x20xbf16>
    %cst_45 = arith.constant dense<0.000000e+00> : vector<128x22xf32>
    %174 = tpu.matmul %173, %163, %cst_45 {dimension_numbers = #tpu.dot_dimension_numbers<[1], [0], [0], [1], [0, 0, 1, 1], [], []>} : vector<128x20xbf16>, vector<20x22xbf16>, vector<128x22xf32> -> vector<128x22xf32>
    %175 = vector.shape_cast %174 : vector<128x22xf32> to vector<1x128x22xf32>
    %176 = vector.extract_strided_slice %175 {offsets = [0, 0, 0], sizes = [1, 128, 20], strides = [1, 1, 1]} : vector<1x128x22xf32> to vector<1x128x20xf32>
    %177 = vector.extract_strided_slice %175 {offsets = [0, 0, 21], sizes = [1, 128, 1], strides = [1, 1, 1]} : vector<1x128x22xf32> to vector<1x128x1xf32>
    %178 = vector.extract_strided_slice %175 {offsets = [0, 0, 20], sizes = [1, 128, 1], strides = [1, 1, 1]} : vector<1x128x22xf32> to vector<1x128x1xf32>
    %179 = tpu.transpose %178, [0, 2, 1] : vector<1x128x1xf32> -> vector<1x1x128xf32>
    %180 = vector.broadcast %177 : vector<1x128x1xf32> to vector<1x128x128xf32>
    %181 = vector.broadcast %179 : vector<1x1x128xf32> to vector<1x128x128xf32>
    %182 = arith.addf %180, %181 : vector<1x128x128xf32>
    %cst_46 = arith.constant 0.000000e+00 : f32
    %183 = vector.broadcast %cst_46 : f32 to vector<1x128x128xf32>
    %184 = arith.cmpf ogt, %182, %183 : vector<1x128x128xf32>
    %cst_47 = arith.constant 2.000000e-01 : f32
    %185 = vector.broadcast %cst_47 : f32 to vector<1x128x128xf32>
    %186 = arith.mulf %185, %182 : vector<1x128x128xf32>
    %187 = arith.select %184, %182, %186 : vector<1x128x128xi1>, vector<1x128x128xf32>
    %cst_48 = arith.constant -1.000000e+30 : f32
    %188 = vector.broadcast %cst_48 : f32 to vector<1x128x128xf32>
    %189 = arith.select %3, %187, %188 : vector<1x128x128xi1>, vector<1x128x128xf32>
    %cst_49 = arith.constant dense<0xFF800000> : vector<1x128xf32>
    %190 = vector.multi_reduction <maximumf>, %189, %cst_49 [2] : vector<1x128x128xf32> to vector<1x128xf32>
    %191 = vector.shape_cast %190 : vector<1x128xf32> to vector<1x128x1xf32>
    %192 = vector.broadcast %191 : vector<1x128x1xf32> to vector<1x128x128xf32>
    %193 = arith.subf %189, %192 : vector<1x128x128xf32>
    %194 = math.exp %193 : vector<1x128x128xf32>
    %cst_50 = arith.constant 0.000000e+00 : f32
    %195 = vector.broadcast %cst_50 : f32 to vector<1x128x128xf32>
    %196 = arith.select %3, %194, %195 : vector<1x128x128xi1>, vector<1x128x128xf32>
    %cst_51 = arith.constant dense<0.000000e+00> : vector<1x128xf32>
    %197 = vector.multi_reduction <add>, %196, %cst_51 [2] : vector<1x128x128xf32> to vector<1x128xf32>
    %198 = vector.shape_cast %197 : vector<1x128xf32> to vector<1x128x1xf32>
    %cst_52 = arith.constant 1.000000e-30 : f32
    %199 = vector.broadcast %cst_52 : f32 to vector<1x128x1xf32>
    %200 = arith.maximumf %198, %199 : vector<1x128x1xf32>
    %201 = tpu.reciprocal %200 {approx = true} : vector<1x128x1xf32> -> vector<1x128x1xf32>
    %202 = vector.broadcast %201 : vector<1x128x1xf32> to vector<1x128x128xf32>
    %203 = arith.mulf %196, %202 : vector<1x128x128xf32>
    %204 = arith.truncf %203 : vector<1x128x128xf32> to vector<1x128x128xbf16>
    %205 = arith.truncf %176 : vector<1x128x20xf32> to vector<1x128x20xbf16>
    "tpu.trace_start"() <{level = 10 : i32, message = "bij,bjh->bih"}> : () -> ()
    %cst_53 = arith.constant dense<0.000000e+00> : vector<1x128x20xf32>
    %206 = tpu.matmul %204, %205, %cst_53 {dimension_numbers = #tpu.dot_dimension_numbers<[2], [1], [1], [2], [0, 0, 0, 1, 1, 2], [0], [0]>} : vector<1x128x128xbf16>, vector<1x128x20xbf16>, vector<1x128x20xf32> -> vector<1x128x20xf32>
    "tpu.trace_stop"() : () -> ()
    %207 = vector.shape_cast %206 : vector<1x128x20xf32> to vector<128x20xf32>
    %208 = vector.broadcast %166 : vector<1x20xf32> to vector<128x20xf32>
    %209 = arith.addf %207, %208 : vector<128x20xf32>
    %210 = vector.broadcast %4 : vector<128x1xf32> to vector<128x20xf32>
    %211 = arith.mulf %209, %210 : vector<128x20xf32>
    %cst_54 = arith.constant dense<0.000000e+00> : vector<20xf32>
    %212 = vector.multi_reduction <add>, %211, %cst_54 [0] : vector<128x20xf32> to vector<20xf32>
    %213 = vector.shape_cast %212 : vector<20xf32> to vector<1x20xf32>
    %cst_55 = arith.constant 6.250000e-02 : f32
    %214 = vector.broadcast %cst_55 : f32 to vector<1x20xf32>
    %215 = arith.mulf %213, %214 : vector<1x20xf32>
    %216 = vector.broadcast %215 : vector<1x20xf32> to vector<128x20xf32>
    %217 = arith.subf %209, %216 : vector<128x20xf32>
    %218 = vector.broadcast %4 : vector<128x1xf32> to vector<128x20xf32>
    %219 = arith.mulf %217, %218 : vector<128x20xf32>
    %220 = arith.mulf %219, %219 : vector<128x20xf32>
    %cst_56 = arith.constant dense<0.000000e+00> : vector<20xf32>
    %221 = vector.multi_reduction <add>, %220, %cst_56 [0] : vector<128x20xf32> to vector<20xf32>
    %222 = vector.shape_cast %221 : vector<20xf32> to vector<1x20xf32>
    %cst_57 = arith.constant 6.250000e-02 : f32
    %223 = vector.broadcast %cst_57 : f32 to vector<1x20xf32>
    %224 = arith.mulf %222, %223 : vector<1x20xf32>
    %225 = vector.broadcast %215 : vector<1x20xf32> to vector<128x20xf32>
    %226 = arith.subf %209, %225 : vector<128x20xf32>
    %cst_58 = arith.constant 9.99999974E-6 : f32
    %227 = vector.broadcast %cst_58 : f32 to vector<1x20xf32>
    %228 = arith.addf %224, %227 : vector<1x20xf32>
    %229 = math.rsqrt %228 : vector<1x20xf32>
    %230 = vector.broadcast %229 : vector<1x20xf32> to vector<128x20xf32>
    %231 = arith.mulf %226, %230 : vector<128x20xf32>
    %232 = vector.broadcast %169 : vector<1x20xf32> to vector<128x20xf32>
    %233 = arith.mulf %231, %232 : vector<128x20xf32>
    %234 = vector.broadcast %172 : vector<1x20xf32> to vector<128x20xf32>
    %235 = arith.addf %233, %234 : vector<128x20xf32>
    %cst_59 = arith.constant 0.000000e+00 : f32
    %236 = vector.broadcast %cst_59 : f32 to vector<128x20xf32>
    %237 = arith.maximumf %235, %236 : vector<128x20xf32>
    %238 = vector.broadcast %4 : vector<128x1xf32> to vector<128x20xf32>
    %239 = arith.mulf %237, %238 : vector<128x20xf32>
    %cst_60 = arith.constant 0.000000e+00 : f32
    %240 = vector.broadcast %cst_60 : f32 to vector<128x108xf32>
    %241 = tpu.concatenate %239, %240 in 1 : vector<128x20xf32>, vector<128x108xf32> -> vector<128x128xf32>
    %c0_61 = arith.constant 0 : index
    %c0_62 = arith.constant 0 : index
    %242 = vector.load %arg7[%c0_61, %c0_62] : memref<128x128xf32, #tpu.memory_space<vmem>>, vector<128x128xf32>
    tpu.vector_store %arg7[%c0_61, %c0_62], %241 {strides = array<i32>} : memref<128x128xf32, #tpu.memory_space<vmem>>, vector<128x128xf32>,
    %243 = vector.shape_cast %239 : vector<128x20xf32> to vector<16x8x20xf32>
    %cst_63 = arith.constant dense<0.000000e+00> : vector<16x20xf32>
    %244 = vector.multi_reduction <add>, %243, %cst_63 [1] : vector<16x8x20xf32> to vector<16x20xf32>
    %cst_64 = arith.constant 0.000000e+00 : f32
    %245 = vector.broadcast %cst_64 : f32 to vector<16x108xf32>
    %246 = tpu.concatenate %244, %245 in 1 : vector<16x20xf32>, vector<16x108xf32> -> vector<16x128xf32>
    %c0_65 = arith.constant 0 : index
    %c0_66 = arith.constant 0 : index
    %247 = vector.load %arg8[%c0_65, %c0_66] : memref<16x128xf32, #tpu.memory_space<vmem>>, vector<16x128xf32>
    tpu.vector_store %arg8[%c0_65, %c0_66], %246 {strides = array<i32>} : memref<16x128xf32, #tpu.memory_space<vmem>>, vector<16x128xf32>,
    %c0_67 = arith.constant 0 : index
    %c0_68 = arith.constant 0 : index
    %248 = vector.load %arg5[%c0_67, %c0_68] : memref<21x128xbf16, #tpu.memory_space<vmem>>, vector<21x128xbf16>
    %249 = arith.truncf %244 : vector<16x20xf32> to vector<16x20xbf16>
    %250 = vector.extract_strided_slice %248 {offsets = [0, 0], sizes = [20, 128], strides = [1, 1]} : vector<21x128xbf16> to vector<20x128xbf16>
    %cst_69 = arith.constant dense<0.000000e+00> : vector<16x128xf32>
    %251 = tpu.matmul %249, %250, %cst_69 {dimension_numbers = #tpu.dot_dimension_numbers<[1], [0], [0], [1], [0, 0, 1, 1], [], []>} : vector<16x20xbf16>, vector<20x128xbf16>, vector<16x128xf32> -> vector<16x128xf32>
    %252 = vector.extract_strided_slice %248 {offsets = [20, 0], sizes = [1, 128], strides = [1, 1]} : vector<21x128xbf16> to vector<1x128xbf16>
    %253 = arith.extf %252 : vector<1x128xbf16> to vector<1x128xf32>
    %254 = vector.broadcast %253 : vector<1x128xf32> to vector<16x128xf32>
    %255 = arith.addf %251, %254 : vector<16x128xf32>
    %c0_70 = arith.constant 0 : index
    %c0_71 = arith.constant 0 : index
    %256 = vector.load %arg6[%c0_70, %c0_71] : memref<16x128xf32, #tpu.memory_space<vmem>>, vector<16x128xf32>
    tpu.vector_store %arg6[%c0_70, %c0_71], %255 {strides = array<i32>} : memref<16x128xf32, #tpu.memory_space<vmem>>, vector<16x128xf32>,
    return
  }
}

</mosaic_0001>

<llo_original>
// kernel: tpu_custom_call.1
$region0: #{tpu_custom_call.1}
  #allocation0 [shape = 'u32[]', space=smem, size = 0x4, offset = 0x4, fixed_abs, tag = 'smem constant byte address 0x4 - core index']
  #allocation1 [shape = 'u32[144,128]{1,0:T(1,128)}', space=vmem, size = 0x12000, scoped, tag = 'internal scratch']
  %s0 = inlined_call_operand.vmem [shape: f32[128,20], index: 0, kind: input, shape index: {}]
  %s1 = inlined_call_operand.vmem [shape: bf16[1,128,128], index: 1, kind: input, shape index: {}]
  %s2 = inlined_call_operand.vmem [shape: f32[128,1], index: 2, kind: input, shape index: {}]
  %s3 = inlined_call_operand.vmem [shape: bf16[3,20,22], index: 3, kind: input, shape index: {}]
  %s4 = inlined_call_operand.vmem [shape: f32[9,20], index: 4, kind: input, shape index: {}]
  %s5 = inlined_call_operand.vmem [shape: bf16[21,128], index: 5, kind: input, shape index: {}]
  %s6 = inlined_call_operand.hbm [shape: f32[16,128], index: 6, kind: output, shape index: {0}]
  %s7 = inlined_call_operand.hbm [shape: f32[128,128], index: 7, kind: output, shape index: {1}]
  %s8 = inlined_call_operand.hbm [shape: f32[16,128], index: 8, kind: output, shape index: {2}]
  %9 = xla_tuple %s6, %s7, %s8
  %s10 = sld [smem:[#allocation0]]
  $region50: #{tpu_custom_call.1} parent=0
    _
  %s12 = ssub.s32 1, %s10
  %s13 = scalar_select 0, %s12, %s10
  $region1: #{tpu_custom_call.1} parent=0
    #allocation2 [shape = 'u8[8192]{0}', space=vmem, size = 0x2000, scoped, tag = 'output window, operand 0, single buffered']
    #allocation3 [shape = 's32[1]{0}', space=sflag, size = 0x4, scoped, tag = 'scoped memory for tpu_custom_call.1']
    #allocation4 [shape = 'u8[65536]{0}', space=vmem, size = 0x10000, scoped, tag = 'output window, operand 1, single buffered']
    #allocation5 [shape = 's32[1]{0}', space=sflag, size = 0x4, scoped, tag = 'scoped memory for tpu_custom_call.1']
    #allocation6 [shape = 'u8[8192]{0}', space=vmem, size = 0x2000, scoped, tag = 'output window, operand 2, single buffered']
    %14 = vsyncpa [#allocation3], 0
    %15 = vsyncpa [#allocation5], 0
    // Predicated region
    $region2: #{tpu_custom_call.1} parent=1 // pred_check
      _
    $region3: #{tpu_custom_call.1} parent=1 // pred_check_branch
      %17 = sbr.rel (0) target = $region5
    $region4: #{tpu_custom_call.1} parent=1 // pred_region
      _
    $region5: #{tpu_custom_call.1} parent=1 // pred_fallthru
      _
    // Predicated region
    $region6: #{tpu_custom_call.1} parent=1 // pred_check
      _
    $region7: #{tpu_custom_call.1} parent=1 // pred_check_branch
      %19 = sbr.rel (0) target = $region9
    $region8: #{tpu_custom_call.1} parent=1 // pred_region
      _
    $region9: #{tpu_custom_call.1} parent=1 // pred_fallthru
      _
    // Predicated region
    $region10: #{tpu_custom_call.1} parent=1 // pred_check
      _
    $region11: #{tpu_custom_call.1} parent=1 // pred_check_branch
      %21 = sbr.rel (0) target = $region13
    $region12: #{tpu_custom_call.1} parent=1 // pred_region
      _
    $region13: #{tpu_custom_call.1} parent=1 // pred_fallthru
      _
    // Predicated region
    $region14: #{tpu_custom_call.1} parent=1 // pred_check
      _
    $region15: #{tpu_custom_call.1} parent=1 // pred_check_branch
      %23 = sbr.rel (0) target = $region17
    $region16: #{tpu_custom_call.1} parent=1 // pred_region
      _
    $region17: #{tpu_custom_call.1} parent=1 // pred_fallthru
      _
    // Predicated region
    $region18: #{tpu_custom_call.1} parent=1 // pred_check
      _
    $region19: #{tpu_custom_call.1} parent=1 // pred_check_branch
      %25 = sbr.rel (0) target = $region21
    $region20: #{tpu_custom_call.1} parent=1 // pred_region
      _
    $region21: #{tpu_custom_call.1} parent=1 // pred_fallthru
      _
    // Predicated region
    $region22: #{tpu_custom_call.1} parent=1 // pred_check
      _
    $region23: #{tpu_custom_call.1} parent=1 // pred_check_branch
      %27 = sbr.rel (0) target = $region25
    $region24: #{tpu_custom_call.1} parent=1 // pred_region
      _
    $region25: #{tpu_custom_call.1} parent=1 // pred_fallthru
      _
    %v31 = vld [vmem:[%s0] sm:$0xff]
    %v32 = vld [vmem:[%s0 + $0x8] sm:$0xff]
    %v33 = vld [vmem:[%s0 + $0x10] sm:$0xff]
    %v34 = vld [vmem:[%s0 + $0x18] sm:$0xff]
    %v35 = vld [vmem:[%s0 + $0x20] sm:$0xff]
    %v36 = vld [vmem:[%s0 + $0x28] sm:$0xff]
    %v37 = vld [vmem:[%s0 + $0x30] sm:$0xff]
    %v38 = vld [vmem:[%s0 + $0x38] sm:$0xff]
    %v39 = vld [vmem:[%s0 + $0x40] sm:$0xff]
    %v40 = vld [vmem:[%s0 + $0x48] sm:$0xff]
    %v41 = vld [vmem:[%s0 + $0x50] sm:$0xff]
    %v42 = vld [vmem:[%s0 + $0x58] sm:$0xff]
    %v43 = vld [vmem:[%s0 + $0x60] sm:$0xff]
    %v44 = vld [vmem:[%s0 + $0x68] sm:$0xff]
    %v45 = vld [vmem:[%s0 + $0x70] sm:$0xff]
    %v46 = vld [vmem:[%s0 + $0x78] sm:$0xff]
    %v47 = vld [vmem:[%s1] sm:$0xf]
    %v48 = vld [vmem:[%s1 + $0x4] sm:$0xf]
    %v49 = vld [vmem:[%s1 + $0x8] sm:$0xf]
    %v50 = vld [vmem:[%s1 + $0xc] sm:$0xf]
    %v51 = vld [vmem:[%s1 + $0x10] sm:$0xf]
    %v52 = vld [vmem:[%s1 + $0x14] sm:$0xf]
    %v53 = vld [vmem:[%s1 + $0x18] sm:$0xf]
    %v54 = vld [vmem:[%s1 + $0x1c] sm:$0xf]
    %v55 = vld [vmem:[%s1 + $0x20] sm:$0xf]
    %v56 = vld [vmem:[%s1 + $0x24] sm:$0xf]
    %v57 = vld [vmem:[%s1 + $0x28] sm:$0xf]
    %v58 = vld [vmem:[%s1 + $0x2c] sm:$0xf]
    %v59 = vld [vmem:[%s1 + $0x30] sm:$0xf]
    %v60 = vld [vmem:[%s1 + $0x34] sm:$0xf]
    %v61 = vld [vmem:[%s1 + $0x38] sm:$0xf]
    %v62 = vld [vmem:[%s1 + $0x3c] sm:$0xf]
    %vm63 = vcmp.gt.bf16.partialorder %v47, 0
    %vm64 = vcmp.gt.bf16.partialorder %v48, 0
    %vm65 = vcmp.gt.bf16.partialorder %v49, 0
    %vm66 = vcmp.gt.bf16.partialorder %v50, 0
    %vm67 = vcmp.gt.bf16.partialorder %v51, 0
    %vm68 = vcmp.gt.bf16.partialorder %v52, 0
    %vm69 = vcmp.gt.bf16.partialorder %v53, 0
    %vm70 = vcmp.gt.bf16.partialorder %v54, 0
    %vm71 = vcmp.gt.bf16.partialorder %v55, 0
    %vm72 = vcmp.gt.bf16.partialorder %v56, 0
    %vm73 = vcmp.gt.bf16.partialorder %v57, 0
    %vm74 = vcmp.gt.bf16.partialorder %v58, 0
    %vm75 = vcmp.gt.bf16.partialorder %v59, 0
    %vm76 = vcmp.gt.bf16.partialorder %v60, 0
    %vm77 = vcmp.gt.bf16.partialorder %v61, 0
    %vm78 = vcmp.gt.bf16.partialorder %v62, 0
    %v79 = vld [vmem:[%s2] sm:$0xff]
    %v80 = vld [vmem:[%s2 + $0x8] sm:$0xff]
    %v81 = vld [vmem:[%s2 + $0x10] sm:$0xff]
    %v82 = vld [vmem:[%s2 + $0x18] sm:$0xff]
    %v83 = vld [vmem:[%s2 + $0x20] sm:$0xff]
    %v84 = vld [vmem:[%s2 + $0x28] sm:$0xff]
    %v85 = vld [vmem:[%s2 + $0x30] sm:$0xff]
    %v86 = vld [vmem:[%s2 + $0x38] sm:$0xff]
    %v87 = vld [vmem:[%s2 + $0x40] sm:$0xff]
    %v88 = vld [vmem:[%s2 + $0x48] sm:$0xff]
    %v89 = vld [vmem:[%s2 + $0x50] sm:$0xff]
    %v90 = vld [vmem:[%s2 + $0x58] sm:$0xff]
    %v91 = vld [vmem:[%s2 + $0x60] sm:$0xff]
    %v92 = vld [vmem:[%s2 + $0x68] sm:$0xff]
    %v93 = vld [vmem:[%s2 + $0x70] sm:$0xff]
    %v94 = vld [vmem:[%s2 + $0x78] sm:$0xff]
    %v95 = vld [vmem:[%s4] sm:$0xff]
    %v96 = vld [vmem:[%s4 + $0x8] sm:$0x1]
    %v97 = vld [vmem:[%s3] sm:$0xf]
    %v98 = vld [vmem:[%s3 + $0x4] sm:$0xf]
    %v99 = vld [vmem:[%s3 + $0x8] sm:$0x3]
    %v100 = vpack.c.bf16 %v32, %v31
    %v101 = vpack.c.bf16 %v34, %v33
    %v102 = vpack.c.bf16 %v36, %v35
    %v103 = vpack.c.bf16 %v38, %v37
    %v104 = vpack.c.bf16 %v40, %v39
    %v105 = vpack.c.bf16 %v42, %v41
    %v106 = vpack.c.bf16 %v44, %v43
    %v107 = vpack.c.bf16 %v46, %v45
    %v111 = vunpack.c.l.b16 %v97
    %v112 = vunpack.c.l.b16 %v98
    %v113 = vunpack.c.l.b16 %v99
    %v114 = vpack.c.b16 %v112, %v111
    %v115 = vpack.c.b16 %v113, %v113
    %vm117 = vcmask 162816
    %v119 = vsel %vm117, %v100, 0
    %v122 = vsel %vm117, %v101, 0
    %v125 = vsel %vm117, %v102, 0
    %v128 = vsel %vm117, %v103, 0
    %v131 = vsel %vm117, %v104, 0
    %v134 = vsel %vm117, %v105, 0
    %v137 = vsel %vm117, %v106, 0
    %v140 = vsel %vm117, %v107, 0
    %vm142 = vcmask 1041408
    %v144 = vsel %vm142, %v115, 0
    %146 = vmatprep.subr.bf16.mxu0 0
    %147 = vmatpush1.bf16.msra.mxu0 %v114
    %148 = vmatprep.subr.bf16.mxu0 0
    %149 = vmatpush1.bf16.msra.mxu0 %v144
    %150 = vmatprep.subr.bf16.mxu0 0
    %151 = vmatpush1.bf16.msra.mxu0 0
    %152 = vmatprep.subr.bf16.mxu0 0
    %153 = vmatpush1.bf16.msra.mxu0 0
    %154 = vmatprep.subr.bf16.mxu0 0
    %155 = vmatpush1.bf16.msra.mxu0 0
    %156 = vmatprep.subr.bf16.mxu0 0
    %157 = vmatpush1.bf16.msra.mxu0 0
    %158 = vmatprep.subr.bf16.mxu0 0
    %159 = vmatpush1.bf16.msra.mxu0 0
    %160 = vmatprep.subr.bf16.mxu0 0
    %161 = vmatpush1.bf16.msra.mxu0 0
    %162 = vmatprep.subr.bf16.mxu0 0
    %163 = vmatpush1.bf16.msra.mxu0 0
    %164 = vmatprep.subr.bf16.mxu0 0
    %165 = vmatpush1.bf16.msra.mxu0 0
    %166 = vmatprep.subr.bf16.mxu0 0
    %167 = vmatpush1.bf16.msra.mxu0 0
    %168 = vmatprep.subr.bf16.mxu0 0
    %169 = vmatpush1.bf16.msra.mxu0 0
    %170 = vmatprep.subr.bf16.mxu0 0
    %171 = vmatpush1.bf16.msra.mxu0 0
    %172 = vmatprep.subr.bf16.mxu0 0
    %173 = vmatpush1.bf16.msra.mxu0 0
    %174 = vmatprep.subr.bf16.mxu0 0
    %175 = vmatpush1.bf16.msra.mxu0 0
    %176 = vmatprep.subr.bf16.mxu0 0
    %177 = vmatpush1.bf16.msra.mxu0 0
    %178 = vmatprep.mubr.bf16.mxu0 0
    %179 = vmatmul.mubr.bf16.gmra.mrb[0].mxu0 %v119
    %v180 = vpop.f32.mrb[0].mxu0
    %v181 = vadd.f32 0.0, %v180
    %v182 = vpop.f32.mrb[0].mxu0
    %v183 = vpop.f32.mrb[0].mxu0
    %v184 = vadd.f32 0.0, %v183
    %v185 = vpop.f32.mrb[0].mxu0
    %186 = vmatprep.mubr.bf16.mxu0 0
    %187 = vmatmul.mubr.bf16.gmra.mrb[0].mxu0 %v122
    %v188 = vpop.f32.mrb[0].mxu0
    %v189 = vadd.f32 0.0, %v188
    %v190 = vpop.f32.mrb[0].mxu0
    %v191 = vpop.f32.mrb[0].mxu0
    %v192 = vadd.f32 0.0, %v191
    %v193 = vpop.f32.mrb[0].mxu0
    %194 = vmatprep.mubr.bf16.mxu0 0
    %195 = vmatmul.mubr.bf16.gmra.mrb[0].mxu0 %v125
    %v196 = vpop.f32.mrb[0].mxu0
    %v197 = vadd.f32 0.0, %v196
    %v198 = vpop.f32.mrb[0].mxu0
    %v199 = vpop.f32.mrb[0].mxu0
    %v200 = vadd.f32 0.0, %v199
    %v201 = vpop.f32.mrb[0].mxu0
    %202 = vmatprep.mubr.bf16.mxu0 0
    %203 = vmatmul.mubr.bf16.gmra.mrb[0].mxu0 %v128
    %v204 = vpop.f32.mrb[0].mxu0
    %v205 = vadd.f32 0.0, %v204
    %v206 = vpop.f32.mrb[0].mxu0
    %v207 = vpop.f32.mrb[0].mxu0
    %v208 = vadd.f32 0.0, %v207
    %v209 = vpop.f32.mrb[0].mxu0
    %210 = vmatprep.mubr.bf16.mxu0 0
    %211 = vmatmul.mubr.bf16.gmra.mrb[0].mxu0 %v131
    %v212 = vpop.f32.mrb[0].mxu0
    %v213 = vadd.f32 0.0, %v212
    %v214 = vpop.f32.mrb[0].mxu0
    %v215 = vpop.f32.mrb[0].mxu0
    %v216 = vadd.f32 0.0, %v215
    %v217 = vpop.f32.mrb[0].mxu0
    %218 = vmatprep.mubr.bf16.mxu0 0
    %219 = vmatmul.mubr.bf16.gmra.mrb[0].mxu0 %v134
    %v220 = vpop.f32.mrb[0].mxu0
    %v221 = vadd.f32 0.0, %v220
    %v222 = vpop.f32.mrb[0].mxu0
    %v223 = vpop.f32.mrb[0].mxu0
    %v224 = vadd.f32 0.0, %v223
    %v225 = vpop.f32.mrb[0].mxu0
    %226 = vmatprep.mubr.bf16.mxu0 0
    %227 = vmatmul.mubr.bf16.gmra.mrb[0].mxu0 %v137
    %v228 = vpop.f32.mrb[0].mxu0
    %v229 = vadd.f32 0.0, %v228
    %v230 = vpop.f32.mrb[0].mxu0
    %v231 = vpop.f32.mrb[0].mxu0
    %v232 = vadd.f32 0.0, %v231
    %v233 = vpop.f32.mrb[0].mxu0
    %234 = vmatprep.mubr.bf16.mxu0 0
    %235 = vmatmul.mubr.bf16.gmra.mrb[0].mxu0 %v140
    %v236 = vpop.f32.mrb[0].mxu0
    %v237 = vadd.f32 0.0, %v236
    %v238 = vpop.f32.mrb[0].mxu0
    %v239 = vpop.f32.mrb[0].mxu0
    %v240 = vadd.f32 0.0, %v239
    %v241 = vpop.f32.mrb[0].mxu0
    %242 = vdwg.mxu0
    %259 = vrot.lane.b32.xlu0 %v181, 108
    %v260 = vpop.permute.xlu0 %259
    %261 = vrot.lane.b32.xlu0 %v184, 108
    %v262 = vpop.permute.xlu0 %261
    %263 = vrot.lane.b32.xlu0 %v189, 108
    %v264 = vpop.permute.xlu0 %263
    %265 = vrot.lane.b32.xlu0 %v192, 108
    %v266 = vpop.permute.xlu0 %265
    %267 = vrot.lane.b32.xlu0 %v197, 108
    %v268 = vpop.permute.xlu0 %267
    %269 = vrot.lane.b32.xlu0 %v200, 108
    %v270 = vpop.permute.xlu0 %269
    %271 = vrot.lane.b32.xlu0 %v205, 108
    %v272 = vpop.permute.xlu0 %271
    %273 = vrot.lane.b32.xlu0 %v208, 108
    %v274 = vpop.permute.xlu0 %273
    %275 = vrot.lane.b32.xlu0 %v213, 108
    %v276 = vpop.permute.xlu0 %275
    %277 = vrot.lane.b32.xlu0 %v216, 108
    %v278 = vpop.permute.xlu0 %277
    %279 = vrot.lane.b32.xlu0 %v221, 108
    %v280 = vpop.permute.xlu0 %279
    %281 = vrot.lane.b32.xlu0 %v224, 108
    %v282 = vpop.permute.xlu0 %281
    %283 = vrot.lane.b32.xlu0 %v229, 108
    %v284 = vpop.permute.xlu0 %283
    %285 = vrot.lane.b32.xlu0 %v232, 108
    %v286 = vpop.permute.xlu0 %285
    %287 = vrot.lane.b32.xlu0 %v237, 108
    %v288 = vpop.permute.xlu0 %287
    %289 = vrot.lane.b32.xlu0 %v240, 108
    %v290 = vpop.permute.xlu0 %289
    %307 = vxpose.xlu0.b32.start [1/16] %v260, 128
    %308 = vxpose.xlu0.b32.cont [2/16] %v262, 128
    %309 = vxpose.xlu0.b32.cont [3/16] %v264, 128
    %310 = vxpose.xlu0.b32.cont [4/16] %v266, 128
    %311 = vxpose.xlu0.b32.cont [5/16] %v268, 128
    %312 = vxpose.xlu0.b32.cont [6/16] %v270, 128
    %313 = vxpose.xlu0.b32.cont [7/16] %v272, 128
    %314 = vxpose.xlu0.b32.cont [8/16] %v274, 128
    %315 = vxpose.xlu0.b32.cont [9/16] %v276, 128
    %316 = vxpose.xlu0.b32.cont [10/16] %v278, 128
    %317 = vxpose.xlu0.b32.cont [11/16] %v280, 128
    %318 = vxpose.xlu0.b32.cont [12/16] %v282, 128
    %319 = vxpose.xlu0.b32.cont [13/16] %v284, 128
    %320 = vxpose.xlu0.b32.cont [14/16] %v286, 128
    %321 = vxpose.xlu0.b32.cont [15/16] %v288, 128
    %322 = vxpose.xlu0.b32.end [16/16] %v290, 128
    %v323 = vpop.trf.xlu0
    %v324 = vpop.trf.xlu0
    %v325 = vpop.trf.xlu0
    %v326 = vpop.trf.xlu0
    %v327 = vpop.trf.xlu0
    %v328 = vpop.trf.xlu0
    %v329 = vpop.trf.xlu0
    %v330 = vpop.trf.xlu0
    %v331 = vpop.trf.xlu0
    %v332 = vpop.trf.xlu0
    %v333 = vpop.trf.xlu0
    %v334 = vpop.trf.xlu0
    %v335 = vpop.trf.xlu0
    %v336 = vpop.trf.xlu0
    %v337 = vpop.trf.xlu0
    %v338 = vpop.trf.xlu0
    %339 = vset.pattern.permute.xlu0 21
    %340 = vperm.xlu0 %339, %v181
    %v341 = vpop.permute.xlu0 %340
    %343 = vset.pattern.permute.xlu0 21
    %344 = vperm.xlu0 %343, %v184
    %v345 = vpop.permute.xlu0 %344
    %347 = vset.pattern.permute.xlu0 21
    %348 = vperm.xlu0 %347, %v189
    %v349 = vpop.permute.xlu0 %348
    %351 = vset.pattern.permute.xlu0 21
    %352 = vperm.xlu0 %351, %v192
    %v353 = vpop.permute.xlu0 %352
    %355 = vset.pattern.permute.xlu0 21
    %356 = vperm.xlu0 %355, %v197
    %v357 = vpop.permute.xlu0 %356
    %359 = vset.pattern.permute.xlu0 21
    %360 = vperm.xlu0 %359, %v200
    %v361 = vpop.permute.xlu0 %360
    %363 = vset.pattern.permute.xlu0 21
    %364 = vperm.xlu0 %363, %v205
    %v365 = vpop.permute.xlu0 %364
    %367 = vset.pattern.permute.xlu0 21
    %368 = vperm.xlu0 %367, %v208
    %v369 = vpop.permute.xlu0 %368
    %371 = vset.pattern.permute.xlu0 21
    %372 = vperm.xlu0 %371, %v213
    %v373 = vpop.permute.xlu0 %372
    %375 = vset.pattern.permute.xlu0 21
    %376 = vperm.xlu0 %375, %v216
    %v377 = vpop.permute.xlu0 %376
    %379 = vset.pattern.permute.xlu0 21
    %380 = vperm.xlu0 %379, %v221
    %v381 = vpop.permute.xlu0 %380
    %383 = vset.pattern.permute.xlu0 21
    %384 = vperm.xlu0 %383, %v224
    %v385 = vpop.permute.xlu0 %384
    %387 = vset.pattern.permute.xlu0 21
    %388 = vperm.xlu0 %387, %v229
    %v389 = vpop.permute.xlu0 %388
    %391 = vset.pattern.permute.xlu0 21
    %392 = vperm.xlu0 %391, %v232
    %v393 = vpop.permute.xlu0 %392
    %395 = vset.pattern.permute.xlu0 21
    %396 = vperm.xlu0 %395, %v237
    %v397 = vpop.permute.xlu0 %396
    %399 = vset.pattern.permute.xlu0 21
    %400 = vperm.xlu0 %399, %v240
    %v401 = vpop.permute.xlu0 %400
    %v403 = vlaneseq
    %v404 = vshrl.u32 %v403, 7
    %v405 = vsub.s32 0, %v404
    %v406 = vrot.slane %v323, %v405
    %v407 = vadd.f32 %v341, %v406
    %v408 = vadd.f32 %v345, %v406
    %v409 = vadd.f32 %v349, %v406
    %v410 = vadd.f32 %v353, %v406
    %v411 = vadd.f32 %v357, %v406
    %v412 = vadd.f32 %v361, %v406
    %v413 = vadd.f32 %v365, %v406
    %v414 = vadd.f32 %v369, %v406
    %v415 = vadd.f32 %v373, %v406
    %v416 = vadd.f32 %v377, %v406
    %v417 = vadd.f32 %v381, %v406
    %v418 = vadd.f32 %v385, %v406
    %v419 = vadd.f32 %v389, %v406
    %v420 = vadd.f32 %v393, %v406
    %v421 = vadd.f32 %v397, %v406
    %v422 = vadd.f32 %v401, %v406
    %vm423 = vcmp.gt.f32.partialorder %v407, 0.0
    %vm424 = vcmp.gt.f32.partialorder %v408, 0.0
    %vm425 = vcmp.gt.f32.partialorder %v409, 0.0
    %vm426 = vcmp.gt.f32.partialorder %v410, 0.0
    %vm427 = vcmp.gt.f32.partialorder %v411, 0.0
    %vm428 = vcmp.gt.f32.partialorder %v412, 0.0
    %vm429 = vcmp.gt.f32.partialorder %v413, 0.0
    %vm430 = vcmp.gt.f32.partialorder %v414, 0.0
    %vm431 = vcmp.gt.f32.partialorder %v415, 0.0
    %vm432 = vcmp.gt.f32.partialorder %v416, 0.0
    %vm433 = vcmp.gt.f32.partialorder %v417, 0.0
    %vm434 = vcmp.gt.f32.partialorder %v418, 0.0
    %vm435 = vcmp.gt.f32.partialorder %v419, 0.0
    %vm436 = vcmp.gt.f32.partialorder %v420, 0.0
    %vm437 = vcmp.gt.f32.partialorder %v421, 0.0
    %vm438 = vcmp.gt.f32.partialorder %v422, 0.0
    %v439 = vmul.f32 %v407, 0.2
    %v440 = vmul.f32 %v408, 0.2
    %v441 = vmul.f32 %v409, 0.2
    %v442 = vmul.f32 %v410, 0.2
    %v443 = vmul.f32 %v411, 0.2
    %v444 = vmul.f32 %v412, 0.2
    %v445 = vmul.f32 %v413, 0.2
    %v446 = vmul.f32 %v414, 0.2
    %v447 = vmul.f32 %v415, 0.2
    %v448 = vmul.f32 %v416, 0.2
    %v449 = vmul.f32 %v417, 0.2
    %v450 = vmul.f32 %v418, 0.2
    %v451 = vmul.f32 %v419, 0.2
    %v452 = vmul.f32 %v420, 0.2
    %v453 = vmul.f32 %v421, 0.2
    %v454 = vmul.f32 %v422, 0.2
    %v455 = vsel %vm423, %v407, %v439
    %v456 = vsel %vm424, %v408, %v440
    %v457 = vsel %vm425, %v409, %v441
    %v458 = vsel %vm426, %v410, %v442
    %v459 = vsel %vm427, %v411, %v443
    %v460 = vsel %vm428, %v412, %v444
    %v461 = vsel %vm429, %v413, %v445
    %v462 = vsel %vm430, %v414, %v446
    %v463 = vsel %vm431, %v415, %v447
    %v464 = vsel %vm432, %v416, %v448
    %v465 = vsel %vm433, %v417, %v449
    %v466 = vsel %vm434, %v418, %v450
    %v467 = vsel %vm435, %v419, %v451
    %v468 = vsel %vm436, %v420, %v452
    %v469 = vsel %vm437, %v421, %v453
    %v470 = vsel %vm438, %v422, %v454
    %v471 = vsel %vm63, 65537, 0
    %v472 = vsel %vm64, 65537, 0
    %v473 = vsel %vm65, 65537, 0
    %v474 = vsel %vm66, 65537, 0
    %v475 = vsel %vm67, 65537, 0
    %v476 = vsel %vm68, 65537, 0
    %v477 = vsel %vm69, 65537, 0
    %v478 = vsel %vm70, 65537, 0
    %v479 = vsel %vm71, 65537, 0
    %v480 = vsel %vm72, 65537, 0
    %v481 = vsel %vm73, 65537, 0
    %v482 = vsel %vm74, 65537, 0
    %v483 = vsel %vm75, 65537, 0
    %v484 = vsel %vm76, 65537, 0
    %v485 = vsel %vm77, 65537, 0
    %v486 = vsel %vm78, 65537, 0
    %v487 = vunpack.c.l.b16 %v471
    %v488 = vunpack.c.l.b16 %v472
    %v489 = vunpack.c.l.b16 %v473
    %v490 = vunpack.c.l.b16 %v474
    %v491 = vunpack.c.l.b16 %v475
    %v492 = vunpack.c.l.b16 %v476
    %v493 = vunpack.c.l.b16 %v477
    %v494 = vunpack.c.l.b16 %v478
    %v495 = vunpack.c.l.b16 %v479
    %v496 = vunpack.c.l.b16 %v480
    %v497 = vunpack.c.l.b16 %v481
    %v498 = vunpack.c.l.b16 %v482
    %v499 = vunpack.c.l.b16 %v483
    %v500 = vunpack.c.l.b16 %v484
    %v501 = vunpack.c.l.b16 %v485
    %v502 = vunpack.c.l.b16 %v486
    %vm503 = vcmp.ne.s32.totalorder %v487, 0
    %vm504 = vcmp.ne.s32.totalorder %v488, 0
    %vm505 = vcmp.ne.s32.totalorder %v489, 0
    %vm506 = vcmp.ne.s32.totalorder %v490, 0
    %vm507 = vcmp.ne.s32.totalorder %v491, 0
    %vm508 = vcmp.ne.s32.totalorder %v492, 0
    %vm509 = vcmp.ne.s32.totalorder %v493, 0
    %vm510 = vcmp.ne.s32.totalorder %v494, 0
    %vm511 = vcmp.ne.s32.totalorder %v495, 0
    %vm512 = vcmp.ne.s32.totalorder %v496, 0
    %vm513 = vcmp.ne.s32.totalorder %v497, 0
    %vm514 = vcmp.ne.s32.totalorder %v498, 0
    %vm515 = vcmp.ne.s32.totalorder %v499, 0
    %vm516 = vcmp.ne.s32.totalorder %v500, 0
    %vm517 = vcmp.ne.s32.totalorder %v501, 0
    %vm518 = vcmp.ne.s32.totalorder %v502, 0
    %v519 = vsel %vm503, %v455, -1e+30
    %v520 = vsel %vm504, %v456, -1e+30
    %v521 = vsel %vm505, %v457, -1e+30
    %v522 = vsel %vm506, %v458, -1e+30
    %v523 = vsel %vm507, %v459, -1e+30
    %v524 = vsel %vm508, %v460, -1e+30
    %v525 = vsel %vm509, %v461, -1e+30
    %v526 = vsel %vm510, %v462, -1e+30
    %v527 = vsel %vm511, %v463, -1e+30
    %v528 = vsel %vm512, %v464, -1e+30
    %v529 = vsel %vm513, %v465, -1e+30
    %v530 = vsel %vm514, %v466, -1e+30
    %v531 = vsel %vm515, %v467, -1e+30
    %v532 = vsel %vm516, %v468, -1e+30
    %v533 = vsel %vm517, %v469, -1e+30
    %v534 = vsel %vm518, %v470, -1e+30
    %535 = vmax.xlane.f32.xlu0 %v519
    %v536 = vpop.xlane.xlu0 %535
    %537 = vmax.xlane.f32.xlu0 %v520
    %v538 = vpop.xlane.xlu0 %537
    %539 = vmax.xlane.f32.xlu0 %v521
    %v540 = vpop.xlane.xlu0 %539
    %541 = vmax.xlane.f32.xlu0 %v522
    %v542 = vpop.xlane.xlu0 %541
    %543 = vmax.xlane.f32.xlu0 %v523
    %v544 = vpop.xlane.xlu0 %543
    %545 = vmax.xlane.f32.xlu0 %v524
    %v546 = vpop.xlane.xlu0 %545
    %547 = vmax.xlane.f32.xlu0 %v525
    %v548 = vpop.xlane.xlu0 %547
    %549 = vmax.xlane.f32.xlu0 %v526
    %v550 = vpop.xlane.xlu0 %549
    %551 = vmax.xlane.f32.xlu0 %v527
    %v552 = vpop.xlane.xlu0 %551
    %553 = vmax.xlane.f32.xlu0 %v528
    %v554 = vpop.xlane.xlu0 %553
    %555 = vmax.xlane.f32.xlu0 %v529
    %v556 = vpop.xlane.xlu0 %555
    %557 = vmax.xlane.f32.xlu0 %v530
    %v558 = vpop.xlane.xlu0 %557
    %559 = vmax.xlane.f32.xlu0 %v531
    %v560 = vpop.xlane.xlu0 %559
    %561 = vmax.xlane.f32.xlu0 %v532
    %v562 = vpop.xlane.xlu0 %561
    %563 = vmax.xlane.f32.xlu0 %v533
    %v564 = vpop.xlane.xlu0 %563
    %565 = vmax.xlane.f32.xlu0 %v534
    %v566 = vpop.xlane.xlu0 %565
    %v567 = vsub.f32 %v519, %v536
    %v568 = vsub.f32 %v520, %v538
    %v569 = vsub.f32 %v521, %v540
    %v570 = vsub.f32 %v522, %v542
    %v571 = vsub.f32 %v523, %v544
    %v572 = vsub.f32 %v524, %v546
    %v573 = vsub.f32 %v525, %v548
    %v574 = vsub.f32 %v526, %v550
    %v575 = vsub.f32 %v527, %v552
    %v576 = vsub.f32 %v528, %v554
    %v577 = vsub.f32 %v529, %v556
    %v578 = vsub.f32 %v530, %v558
    %v579 = vsub.f32 %v531, %v560
    %v580 = vsub.f32 %v532, %v562
    %v581 = vsub.f32 %v533, %v564
    %v582 = vsub.f32 %v534, %v566
    %v583 = vmul.f32 %v567, 1.442695
    %v584 = vpow.pop %v583
    %v585 = vmul.f32 %v568, 1.442695
    %v586 = vpow.pop %v585
    %v587 = vmul.f32 %v569, 1.442695
    %v588 = vpow.pop %v587
    %v589 = vmul.f32 %v570, 1.442695
    %v590 = vpow.pop %v589
    %v591 = vmul.f32 %v571, 1.442695
    %v592 = vpow.pop %v591
    %v593 = vmul.f32 %v572, 1.442695
    %v594 = vpow.pop %v593
    %v595 = vmul.f32 %v573, 1.442695
    %v596 = vpow.pop %v595
    %v597 = vmul.f32 %v574, 1.442695
    %v598 = vpow.pop %v597
    %v599 = vmul.f32 %v575, 1.442695
    %v600 = vpow.pop %v599
    %v601 = vmul.f32 %v576, 1.442695
    %v602 = vpow.pop %v601
    %v603 = vmul.f32 %v577, 1.442695
    %v604 = vpow.pop %v603
    %v605 = vmul.f32 %v578, 1.442695
    %v606 = vpow.pop %v605
    %v607 = vmul.f32 %v579, 1.442695
    %v608 = vpow.pop %v607
    %v609 = vmul.f32 %v580, 1.442695
    %v610 = vpow.pop %v609
    %v611 = vmul.f32 %v581, 1.442695
    %v612 = vpow.pop %v611
    %v613 = vmul.f32 %v582, 1.442695
    %v614 = vpow.pop %v613
    %v615 = vsel %vm503, %v584, 0.0
    %v616 = vsel %vm504, %v586, 0.0
    %v617 = vsel %vm505, %v588, 0.0
    %v618 = vsel %vm506, %v590, 0.0
    %v619 = vsel %vm507, %v592, 0.0
    %v620 = vsel %vm508, %v594, 0.0
    %v621 = vsel %vm509, %v596, 0.0
    %v622 = vsel %vm510, %v598, 0.0
    %v623 = vsel %vm511, %v600, 0.0
    %v624 = vsel %vm512, %v602, 0.0
    %v625 = vsel %vm513, %v604, 0.0
    %v626 = vsel %vm514, %v606, 0.0
    %v627 = vsel %vm515, %v608, 0.0
    %v628 = vsel %vm516, %v610, 0.0
    %v629 = vsel %vm517, %v612, 0.0
    %v630 = vsel %vm518, %v614, 0.0
    %631 = vadd.xlane.f32.xlu0 %v615
    %v632 = vpop.xlane.xlu0 %631
    %633 = vadd.xlane.f32.xlu0 %v616
    %v634 = vpop.xlane.xlu0 %633
    %635 = vadd.xlane.f32.xlu0 %v617
    %v636 = vpop.xlane.xlu0 %635
    %637 = vadd.xlane.f32.xlu0 %v618
    %v638 = vpop.xlane.xlu0 %637
    %639 = vadd.xlane.f32.xlu0 %v619
    %v640 = vpop.xlane.xlu0 %639
    %641 = vadd.xlane.f32.xlu0 %v620
    %v642 = vpop.xlane.xlu0 %641
    %643 = vadd.xlane.f32.xlu0 %v621
    %v644 = vpop.xlane.xlu0 %643
    %645 = vadd.xlane.f32.xlu0 %v622
    %v646 = vpop.xlane.xlu0 %645
    %647 = vadd.xlane.f32.xlu0 %v623
    %v648 = vpop.xlane.xlu0 %647
    %649 = vadd.xlane.f32.xlu0 %v624
    %v650 = vpop.xlane.xlu0 %649
    %651 = vadd.xlane.f32.xlu0 %v625
    %v652 = vpop.xlane.xlu0 %651
    %653 = vadd.xlane.f32.xlu0 %v626
    %v654 = vpop.xlane.xlu0 %653
    %655 = vadd.xlane.f32.xlu0 %v627
    %v656 = vpop.xlane.xlu0 %655
    %657 = vadd.xlane.f32.xlu0 %v628
    %v658 = vpop.xlane.xlu0 %657
    %659 = vadd.xlane.f32.xlu0 %v629
    %v660 = vpop.xlane.xlu0 %659
    %661 = vadd.xlane.f32.xlu0 %v630
    %v662 = vpop.xlane.xlu0 %661
    %v663 = vmax.f32 %v632, 1e-30
    %v664 = vmax.f32 %v634, 1e-30
    %v665 = vmax.f32 %v636, 1e-30
    %v666 = vmax.f32 %v638, 1e-30
    %v667 = vmax.f32 %v640, 1e-30
    %v668 = vmax.f32 %v642, 1e-30
    %v669 = vmax.f32 %v644, 1e-30
    %v670 = vmax.f32 %v646, 1e-30
    %v671 = vmax.f32 %v648, 1e-30
    %v672 = vmax.f32 %v650, 1e-30
    %v673 = vmax.f32 %v652, 1e-30
    %v674 = vmax.f32 %v654, 1e-30
    %v675 = vmax.f32 %v656, 1e-30
    %v676 = vmax.f32 %v658, 1e-30
    %v677 = vmax.f32 %v660, 1e-30
    %v678 = vmax.f32 %v662, 1e-30
    %v679 = vrcp.pop %v663
    %v680 = vrcp.pop %v664
    %v681 = vrcp.pop %v665
    %v682 = vrcp.pop %v666
    %v683 = vrcp.pop %v667
    %v684 = vrcp.pop %v668
    %v685 = vrcp.pop %v669
    %v686 = vrcp.pop %v670
    %v687 = vrcp.pop %v671
    %v688 = vrcp.pop %v672
    %v689 = vrcp.pop %v673
    %v690 = vrcp.pop %v674
    %v691 = vrcp.pop %v675
    %v692 = vrcp.pop %v676
    %v693 = vrcp.pop %v677
    %v694 = vrcp.pop %v678
    %v695 = vmul.f32 %v615, %v679
    %v696 = vmul.f32 %v616, %v680
    %v697 = vmul.f32 %v617, %v681
    %v698 = vmul.f32 %v618, %v682
    %v699 = vmul.f32 %v619, %v683
    %v700 = vmul.f32 %v620, %v684
    %v701 = vmul.f32 %v621, %v685
    %v702 = vmul.f32 %v622, %v686
    %v703 = vmul.f32 %v623, %v687
    %v704 = vmul.f32 %v624, %v688
    %v705 = vmul.f32 %v625, %v689
    %v706 = vmul.f32 %v626, %v690
    %v707 = vmul.f32 %v627, %v691
    %v708 = vmul.f32 %v628, %v692
    %v709 = vmul.f32 %v629, %v693
    %v710 = vmul.f32 %v630, %v694
    %v711 = vpack.c.bf16 %v696, %v695
    %v712 = vpack.c.bf16 %v698, %v697
    %v713 = vpack.c.bf16 %v700, %v699
    %v714 = vpack.c.bf16 %v702, %v701
    %v715 = vpack.c.bf16 %v704, %v703
    %v716 = vpack.c.bf16 %v706, %v705
    %v717 = vpack.c.bf16 %v708, %v707
    %v718 = vpack.c.bf16 %v710, %v709
    %v719 = vpack.c.bf16 %v184, %v181
    %v720 = vpack.c.bf16 %v192, %v189
    %v721 = vpack.c.bf16 %v200, %v197
    %v722 = vpack.c.bf16 %v208, %v205
    %v723 = vpack.c.bf16 %v216, %v213
    %v724 = vpack.c.bf16 %v224, %v221
    %v725 = vpack.c.bf16 %v232, %v229
    %v726 = vpack.c.bf16 %v240, %v237
    %v727 = vlaneseq
    %v728 = vshrl.u32 %v727, 7
    %v729 = vsub.s32 0, %v728
    %v730 = vrot.slane %v95, %v729
    %731 = vmatprep.subr.bf16.mxu0 0
    %732 = vmatpush1.bf16.msra.mxu0 %v719
    %733 = vmatprep.subr.bf16.mxu0 0
    %734 = vmatpush1.bf16.msra.mxu0 %v720
    %735 = vmatprep.subr.bf16.mxu0 0
    %736 = vmatpush1.bf16.msra.mxu0 %v721
    %737 = vmatprep.subr.bf16.mxu0 0
    %738 = vmatpush1.bf16.msra.mxu0 %v722
    %739 = vmatprep.subr.bf16.mxu0 0
    %740 = vmatpush1.bf16.msra.mxu0 %v723
    %741 = vmatprep.subr.bf16.mxu0 0
    %742 = vmatpush1.bf16.msra.mxu0 %v724
    %743 = vmatprep.subr.bf16.mxu0 0
    %744 = vmatpush1.bf16.msra.mxu0 %v725
    %745 = vmatprep.subr.bf16.mxu0 0
    %746 = vmatpush1.bf16.msra.mxu0 %v726
    %747 = vmatprep.subr.bf16.mxu0 0
    %748 = vmatpush1.bf16.msra.mxu0 0
    %749 = vmatprep.subr.bf16.mxu0 0
    %750 = vmatpush1.bf16.msra.mxu0 0
    %751 = vmatprep.subr.bf16.mxu0 0
    %752 = vmatpush1.bf16.msra.mxu0 0
    %753 = vmatprep.subr.bf16.mxu0 0
    %754 = vmatpush1.bf16.msra.mxu0 0
    %755 = vmatprep.subr.bf16.mxu0 0
    %756 = vmatpush1.bf16.msra.mxu0 0
    %757 = vmatprep.subr.bf16.mxu0 0
    %758 = vmatpush1.bf16.msra.mxu0 0
    %759 = vmatprep.subr.bf16.mxu0 0
    %760 = vmatpush1.bf16.msra.mxu0 0
    %761 = vmatprep.subr.bf16.mxu0 0
    %762 = vmatpush1.bf16.msra.mxu0 0
    %763 = vmatprep.mubr.bf16.mxu0 0
    %764 = vmatmul.mubr.bf16.gmra.mrb[0].mxu0 %v711
    %v765 = vpop.f32.mrb[0].mxu0
    %v766 = vadd.f32 %v730, %v765
    %v767 = vpop.f32.mrb[0].mxu0
    %v768 = vpop.f32.mrb[0].mxu0
    %v769 = vadd.f32 %v730, %v768
    %v770 = vpop.f32.mrb[0].mxu0
    %771 = vmatprep.mubr.bf16.mxu0 0
    %772 = vmatmul.mubr.bf16.gmra.mrb[0].mxu0 %v712
    %v773 = vpop.f32.mrb[0].mxu0
    %v774 = vadd.f32 %v730, %v773
    %v775 = vpop.f32.mrb[0].mxu0
    %v776 = vpop.f32.mrb[0].mxu0
    %v777 = vadd.f32 %v730, %v776
    %v778 = vpop.f32.mrb[0].mxu0
    %779 = vmatprep.mubr.bf16.mxu0 0
    %780 = vmatmul.mubr.bf16.gmra.mrb[0].mxu0 %v713
    %v781 = vpop.f32.mrb[0].mxu0
    %v782 = vadd.f32 %v730, %v781
    %v783 = vpop.f32.mrb[0].mxu0
    %v784 = vpop.f32.mrb[0].mxu0
    %v785 = vadd.f32 %v730, %v784
    %v786 = vpop.f32.mrb[0].mxu0
    %787 = vmatprep.mubr.bf16.mxu0 0
    %788 = vmatmul.mubr.bf16.gmra.mrb[0].mxu0 %v714
    %v789 = vpop.f32.mrb[0].mxu0
    %v790 = vadd.f32 %v730, %v789
    %v791 = vpop.f32.mrb[0].mxu0
    %v792 = vpop.f32.mrb[0].mxu0
    %v793 = vadd.f32 %v730, %v792
    %v794 = vpop.f32.mrb[0].mxu0
    %795 = vmatprep.mubr.bf16.mxu0 0
    %796 = vmatmul.mubr.bf16.gmra.mrb[0].mxu0 %v715
    %v797 = vpop.f32.mrb[0].mxu0
    %v798 = vadd.f32 %v730, %v797
    %v799 = vpop.f32.mrb[0].mxu0
    %v800 = vpop.f32.mrb[0].mxu0
    %v801 = vadd.f32 %v730, %v800
    %v802 = vpop.f32.mrb[0].mxu0
    %803 = vmatprep.mubr.bf16.mxu0 0
    %804 = vmatmul.mubr.bf16.gmra.mrb[0].mxu0 %v716
    %v805 = vpop.f32.mrb[0].mxu0
    %v806 = vadd.f32 %v730, %v805
    %v807 = vpop.f32.mrb[0].mxu0
    %v808 = vpop.f32.mrb[0].mxu0
    %v809 = vadd.f32 %v730, %v808
    %v810 = vpop.f32.mrb[0].mxu0
    %811 = vmatprep.mubr.bf16.mxu0 0
    %812 = vmatmul.mubr.bf16.gmra.mrb[0].mxu0 %v717
    %v813 = vpop.f32.mrb[0].mxu0
    %v814 = vadd.f32 %v730, %v813
    %v815 = vpop.f32.mrb[0].mxu0
    %v816 = vpop.f32.mrb[0].mxu0
    %v817 = vadd.f32 %v730, %v816
    %v818 = vpop.f32.mrb[0].mxu0
    %819 = vmatprep.mubr.bf16.mxu0 0
    %820 = vmatmul.mubr.bf16.gmra.mrb[0].mxu0 %v718
    %v821 = vpop.f32.mrb[0].mxu0
    %v822 = vadd.f32 %v730, %v821
    %v823 = vpop.f32.mrb[0].mxu0
    %v824 = vpop.f32.mrb[0].mxu0
    %v825 = vadd.f32 %v730, %v824
    %v826 = vpop.f32.mrb[0].mxu0
    %827 = vdwg.mxu0
    %829 = vset.pattern.permute.xlu0 0
    %830 = vperm.xlu0 %829, %v79
    %v831 = vpop.permute.xlu0 %830
    %834 = vset.pattern.permute.xlu0 0
    %835 = vperm.xlu0 %834, %v80
    %v836 = vpop.permute.xlu0 %835
    %839 = vset.pattern.permute.xlu0 0
    %840 = vperm.xlu0 %839, %v81
    %v841 = vpop.permute.xlu0 %840
    %844 = vset.pattern.permute.xlu0 0
    %845 = vperm.xlu0 %844, %v82
    %v846 = vpop.permute.xlu0 %845
    %849 = vset.pattern.permute.xlu0 0
    %850 = vperm.xlu0 %849, %v83
    %v851 = vpop.permute.xlu0 %850
    %854 = vset.pattern.permute.xlu0 0
    %855 = vperm.xlu0 %854, %v84
    %v856 = vpop.permute.xlu0 %855
    %859 = vset.pattern.permute.xlu0 0
    %860 = vperm.xlu0 %859, %v85
    %v861 = vpop.permute.xlu0 %860
    %864 = vset.pattern.permute.xlu0 0
    %865 = vperm.xlu0 %864, %v86
    %v866 = vpop.permute.xlu0 %865
    %869 = vset.pattern.permute.xlu0 0
    %870 = vperm.xlu0 %869, %v87
    %v871 = vpop.permute.xlu0 %870
    %874 = vset.pattern.permute.xlu0 0
    %875 = vperm.xlu0 %874, %v88
    %v876 = vpop.permute.xlu0 %875
    %879 = vset.pattern.permute.xlu0 0
    %880 = vperm.xlu0 %879, %v89
    %v881 = vpop.permute.xlu0 %880
    %884 = vset.pattern.permute.xlu0 0
    %885 = vperm.xlu0 %884, %v90
    %v886 = vpop.permute.xlu0 %885
    %889 = vset.pattern.permute.xlu0 0
    %890 = vperm.xlu0 %889, %v91
    %v891 = vpop.permute.xlu0 %890
    %894 = vset.pattern.permute.xlu0 0
    %895 = vperm.xlu0 %894, %v92
    %v896 = vpop.permute.xlu0 %895
    %899 = vset.pattern.permute.xlu0 0
    %900 = vperm.xlu0 %899, %v93
    %v901 = vpop.permute.xlu0 %900
    %904 = vset.pattern.permute.xlu0 0
    %905 = vperm.xlu0 %904, %v94
    %v906 = vpop.permute.xlu0 %905
    %v908 = vmul.f32 %v766, %v831
    %v909 = vmul.f32 %v769, %v836
    %v910 = vmul.f32 %v774, %v841
    %v911 = vmul.f32 %v777, %v846
    %v912 = vmul.f32 %v782, %v851
    %v913 = vmul.f32 %v785, %v856
    %v914 = vmul.f32 %v790, %v861
    %v915 = vmul.f32 %v793, %v866
    %v916 = vmul.f32 %v798, %v871
    %v917 = vmul.f32 %v801, %v876
    %v918 = vmul.f32 %v806, %v881
    %v919 = vmul.f32 %v809, %v886
    %v920 = vmul.f32 %v814, %v891
    %v921 = vmul.f32 %v817, %v896
    %v922 = vmul.f32 %v822, %v901
    %v923 = vmul.f32 %v825, %v906
    %v924 = vsel %vm117, %v908, 0.0
    %v925 = vsel %vm117, %v909, 0.0
    %v926 = vadd.f32 %v924, %v925
    %v927 = vsel %vm117, %v910, 0.0
    %v928 = vadd.f32 %v926, %v927
    %v929 = vsel %vm117, %v911, 0.0
    %v930 = vadd.f32 %v928, %v929
    %v931 = vsel %vm117, %v912, 0.0
    %v932 = vadd.f32 %v930, %v931
    %v933 = vsel %vm117, %v913, 0.0
    %v934 = vadd.f32 %v932, %v933
    %v935 = vsel %vm117, %v914, 0.0
    %v936 = vadd.f32 %v934, %v935
    %v937 = vsel %vm117, %v915, 0.0
    %v938 = vadd.f32 %v936, %v937
    %v939 = vsel %vm117, %v916, 0.0
    %v940 = vadd.f32 %v938, %v939
    %v941 = vsel %vm117, %v917, 0.0
    %v942 = vadd.f32 %v940, %v941
    %v943 = vsel %vm117, %v918, 0.0
    %v944 = vadd.f32 %v942, %v943
    %v945 = vsel %vm117, %v919, 0.0
    %v946 = vadd.f32 %v944, %v945
    %v947 = vsel %vm117, %v920, 0.0
    %v948 = vadd.f32 %v946, %v947
    %v949 = vsel %vm117, %v921, 0.0
    %v950 = vadd.f32 %v948, %v949
    %v951 = vsel %vm117, %v922, 0.0
    %v952 = vadd.f32 %v950, %v951
    %v953 = vsel %vm117, %v923, 0.0
    %v954 = vadd.f32 %v952, %v953
    %v955 = vrot.slane %v954, 4
    %v956 = vadd.f32 %v954, %v955
    %v957 = vrot.slane %v956, 2
    %v958 = vadd.f32 %v956, %v957
    %v959 = vrot.slane %v958, 1
    %v960 = vadd.f32 %v958, %v959
    %v961 = vmul.f32 %v960, 0.0625
    %v962 = vsub.f32 %v766, %v961
    %v963 = vsub.f32 %v769, %v961
    %v964 = vsub.f32 %v774, %v961
    %v965 = vsub.f32 %v777, %v961
    %v966 = vsub.f32 %v782, %v961
    %v967 = vsub.f32 %v785, %v961
    %v968 = vsub.f32 %v790, %v961
    %v969 = vsub.f32 %v793, %v961
    %v970 = vsub.f32 %v798, %v961
    %v971 = vsub.f32 %v801, %v961
    %v972 = vsub.f32 %v806, %v961
    %v973 = vsub.f32 %v809, %v961
    %v974 = vsub.f32 %v814, %v961
    %v975 = vsub.f32 %v817, %v961
    %v976 = vsub.f32 %v822, %v961
    %v977 = vsub.f32 %v825, %v961
    %v978 = vmul.f32 %v962, %v831
    %v979 = vmul.f32 %v963, %v836
    %v980 = vmul.f32 %v964, %v841
    %v981 = vmul.f32 %v965, %v846
    %v982 = vmul.f32 %v966, %v851
    %v983 = vmul.f32 %v967, %v856
    %v984 = vmul.f32 %v968, %v861
    %v985 = vmul.f32 %v969, %v866
    %v986 = vmul.f32 %v970, %v871
    %v987 = vmul.f32 %v971, %v876
    %v988 = vmul.f32 %v972, %v881
    %v989 = vmul.f32 %v973, %v886
    %v990 = vmul.f32 %v974, %v891
    %v991 = vmul.f32 %v975, %v896
    %v992 = vmul.f32 %v976, %v901
    %v993 = vmul.f32 %v977, %v906
    %v994 = vmul.f32 %v978, %v978
    %v995 = vmul.f32 %v979, %v979
    %v996 = vmul.f32 %v980, %v980
    %v997 = vmul.f32 %v981, %v981
    %v998 = vmul.f32 %v982, %v982
    %v999 = vmul.f32 %v983, %v983
    %v1000 = vmul.f32 %v984, %v984
    %v1001 = vmul.f32 %v985, %v985
    %v1002 = vmul.f32 %v986, %v986
    %v1003 = vmul.f32 %v987, %v987
    %v1004 = vmul.f32 %v988, %v988
    %v1005 = vmul.f32 %v989, %v989
    %v1006 = vmul.f32 %v990, %v990
    %v1007 = vmul.f32 %v991, %v991
    %v1008 = vmul.f32 %v992, %v992
    %v1009 = vmul.f32 %v993, %v993
    %v1010 = vsel %vm117, %v994, 0.0
    %v1011 = vsel %vm117, %v995, 0.0
    %v1012 = vadd.f32 %v1010, %v1011
    %v1013 = vsel %vm117, %v996, 0.0
    %v1014 = vadd.f32 %v1012, %v1013
    %v1015 = vsel %vm117, %v997, 0.0
    %v1016 = vadd.f32 %v1014, %v1015
    %v1017 = vsel %vm117, %v998, 0.0
    %v1018 = vadd.f32 %v1016, %v1017
    %v1019 = vsel %vm117, %v999, 0.0
    %v1020 = vadd.f32 %v1018, %v1019
    %v1021 = vsel %vm117, %v1000, 0.0
    %v1022 = vadd.f32 %v1020, %v1021
    %v1023 = vsel %vm117, %v1001, 0.0
    %v1024 = vadd.f32 %v1022, %v1023
    %v1025 = vsel %vm117, %v1002, 0.0
    %v1026 = vadd.f32 %v1024, %v1025
    %v1027 = vsel %vm117, %v1003, 0.0
    %v1028 = vadd.f32 %v1026, %v1027
    %v1029 = vsel %vm117, %v1004, 0.0
    %v1030 = vadd.f32 %v1028, %v1029
    %v1031 = vsel %vm117, %v1005, 0.0
    %v1032 = vadd.f32 %v1030, %v1031
    %v1033 = vsel %vm117, %v1006, 0.0
    %v1034 = vadd.f32 %v1032, %v1033
    %v1035 = vsel %vm117, %v1007, 0.0
    %v1036 = vadd.f32 %v1034, %v1035
    %v1037 = vsel %vm117, %v1008, 0.0
    %v1038 = vadd.f32 %v1036, %v1037
    %v1039 = vsel %vm117, %v1009, 0.0
    %v1040 = vadd.f32 %v1038, %v1039
    %v1041 = vrot.slane %v1040, 4
    %v1042 = vadd.f32 %v1040, %v1041
    %v1043 = vrot.slane %v1042, 2
    %v1044 = vadd.f32 %v1042, %v1043
    %v1045 = vrot.slane %v1044, 1
    %v1046 = vadd.f32 %v1044, %v1045
    %v1047 = vmul.f32 %v1046, 0.0625
    %v1048 = vadd.f32 %v1047, 1e-05
    %v1049 = vrsqrt.pop %v1048
    %v1050 = vmul.f32 %v962, %v1049
    %v1051 = vmul.f32 %v963, %v1049
    %v1052 = vmul.f32 %v964, %v1049
    %v1053 = vmul.f32 %v965, %v1049
    %v1054 = vmul.f32 %v966, %v1049
    %v1055 = vmul.f32 %v967, %v1049
    %v1056 = vmul.f32 %v968, %v1049
    %v1057 = vmul.f32 %v969, %v1049
    %v1058 = vmul.f32 %v970, %v1049
    %v1059 = vmul.f32 %v971, %v1049
    %v1060 = vmul.f32 %v972, %v1049
    %v1061 = vmul.f32 %v973, %v1049
    %v1062 = vmul.f32 %v974, %v1049
    %v1063 = vmul.f32 %v975, %v1049
    %v1064 = vmul.f32 %v976, %v1049
    %v1065 = vmul.f32 %v977, %v1049
    %v1066 = vlaneseq
    %v1067 = vshrl.u32 %v1066, 7
    %v1068 = vsub.s32 1, %v1067
    %v1069 = vrot.slane %v95, %v1068
    %v1070 = vmul.f32 %v1050, %v1069
    %v1071 = vmul.f32 %v1051, %v1069
    %v1072 = vmul.f32 %v1052, %v1069
    %v1073 = vmul.f32 %v1053, %v1069
    %v1074 = vmul.f32 %v1054, %v1069
    %v1075 = vmul.f32 %v1055, %v1069
    %v1076 = vmul.f32 %v1056, %v1069
    %v1077 = vmul.f32 %v1057, %v1069
    %v1078 = vmul.f32 %v1058, %v1069
    %v1079 = vmul.f32 %v1059, %v1069
    %v1080 = vmul.f32 %v1060, %v1069
    %v1081 = vmul.f32 %v1061, %v1069
    %v1082 = vmul.f32 %v1062, %v1069
    %v1083 = vmul.f32 %v1063, %v1069
    %v1084 = vmul.f32 %v1064, %v1069
    %v1085 = vmul.f32 %v1065, %v1069
    %v1086 = vlaneseq
    %v1087 = vshrl.u32 %v1086, 7
    %v1088 = vsub.s32 2, %v1087
    %v1089 = vrot.slane %v95, %v1088
    %v1090 = vadd.f32 %v1070, %v1089
    %v1091 = vadd.f32 %v1071, %v1089
    %v1092 = vadd.f32 %v1072, %v1089
    %v1093 = vadd.f32 %v1073, %v1089
    %v1094 = vadd.f32 %v1074, %v1089
    %v1095 = vadd.f32 %v1075, %v1089
    %v1096 = vadd.f32 %v1076, %v1089
    %v1097 = vadd.f32 %v1077, %v1089
    %v1098 = vadd.f32 %v1078, %v1089
    %v1099 = vadd.f32 %v1079, %v1089
    %v1100 = vadd.f32 %v1080, %v1089
    %v1101 = vadd.f32 %v1081, %v1089
    %v1102 = vadd.f32 %v1082, %v1089
    %v1103 = vadd.f32 %v1083, %v1089
    %v1104 = vadd.f32 %v1084, %v1089
    %v1105 = vadd.f32 %v1085, %v1089
    %v1106 = vmax.f32 %v1090, 0.0
    %v1107 = vmax.f32 %v1091, 0.0
    %v1108 = vmax.f32 %v1092, 0.0
    %v1109 = vmax.f32 %v1093, 0.0
    %v1110 = vmax.f32 %v1094, 0.0
    %v1111 = vmax.f32 %v1095, 0.0
    %v1112 = vmax.f32 %v1096, 0.0
    %v1113 = vmax.f32 %v1097, 0.0
    %v1114 = vmax.f32 %v1098, 0.0
    %v1115 = vmax.f32 %v1099, 0.0
    %v1116 = vmax.f32 %v1100, 0.0
    %v1117 = vmax.f32 %v1101, 0.0
    %v1118 = vmax.f32 %v1102, 0.0
    %v1119 = vmax.f32 %v1103, 0.0
    %v1120 = vmax.f32 %v1104, 0.0
    %v1121 = vmax.f32 %v1105, 0.0
    %v1122 = vmul.f32 %v1106, %v831
    %v1123 = vmul.f32 %v1107, %v836
    %v1124 = vmul.f32 %v1108, %v841
    %v1125 = vmul.f32 %v1109, %v846
    %v1126 = vmul.f32 %v1110, %v851
    %v1127 = vmul.f32 %v1111, %v856
    %v1128 = vmul.f32 %v1112, %v861
    %v1129 = vmul.f32 %v1113, %v866
    %v1130 = vmul.f32 %v1114, %v871
    %v1131 = vmul.f32 %v1115, %v876
    %v1132 = vmul.f32 %v1116, %v881
    %v1133 = vmul.f32 %v1117, %v886
    %v1134 = vmul.f32 %v1118, %v891
    %v1135 = vmul.f32 %v1119, %v896
    %v1136 = vmul.f32 %v1120, %v901
    %v1137 = vmul.f32 %v1121, %v906
    %s1138 = scalar_lea.vmem %s3, 12
    %v1139 = vld [vmem:[%s1138] sm:$0xf]
    %v1140 = vld [vmem:[%s1138 + $0x4] sm:$0xf]
    %v1141 = vld [vmem:[%s1138 + $0x8] sm:$0x3]
    %v1142 = vpack.c.bf16 %v1123, %v1122
    %v1143 = vpack.c.bf16 %v1125, %v1124
    %v1144 = vpack.c.bf16 %v1127, %v1126
    %v1145 = vpack.c.bf16 %v1129, %v1128
    %v1146 = vpack.c.bf16 %v1131, %v1130
    %v1147 = vpack.c.bf16 %v1133, %v1132
    %v1148 = vpack.c.bf16 %v1135, %v1134
    %v1149 = vpack.c.bf16 %v1137, %v1136
    %v1153 = vunpack.c.l.b16 %v1139
    %v1154 = vunpack.c.l.b16 %v1140
    %v1155 = vunpack.c.l.b16 %v1141
    %v1156 = vpack.c.b16 %v1154, %v1153
    %v1157 = vpack.c.b16 %v1155, %v1155
    %v1160 = vsel %vm117, %v1142, 0
    %v1163 = vsel %vm117, %v1143, 0
    %v1166 = vsel %vm117, %v1144, 0
    %v1169 = vsel %vm117, %v1145, 0
    %v1172 = vsel %vm117, %v1146, 0
    %v1175 = vsel %vm117, %v1147, 0
    %v1178 = vsel %vm117, %v1148, 0
    %v1181 = vsel %vm117, %v1149, 0
    %v1184 = vsel %vm142, %v1157, 0
    %1186 = vmatprep.subr.bf16.mxu0 0
    %1187 = vmatpush1.bf16.msra.mxu0 %v1156
    %1188 = vmatprep.subr.bf16.mxu0 0
    %1189 = vmatpush1.bf16.msra.mxu0 %v1184
    %1190 = vmatprep.subr.bf16.mxu0 0
    %1191 = vmatpush1.bf16.msra.mxu0 0
    %1192 = vmatprep.subr.bf16.mxu0 0
    %1193 = vmatpush1.bf16.msra.mxu0 0
    %1194 = vmatprep.subr.bf16.mxu0 0
    %1195 = vmatpush1.bf16.msra.mxu0 0
    %1196 = vmatprep.subr.bf16.mxu0 0
    %1197 = vmatpush1.bf16.msra.mxu0 0
    %1198 = vmatprep.subr.bf16.mxu0 0
    %1199 = vmatpush1.bf16.msra.mxu0 0
    %1200 = vmatprep.subr.bf16.mxu0 0
    %1201 = vmatpush1.bf16.msra.mxu0 0
    %1202 = vmatprep.subr.bf16.mxu0 0
    %1203 = vmatpush1.bf16.msra.mxu0 0
    %1204 = vmatprep.subr.bf16.mxu0 0
    %1205 = vmatpush1.bf16.msra.mxu0 0
    %1206 = vmatprep.subr.bf16.mxu0 0
    %1207 = vmatpush1.bf16.msra.mxu0 0
    %1208 = vmatprep.subr.bf16.mxu0 0
    %1209 = vmatpush1.bf16.msra.mxu0 0
    %1210 = vmatprep.subr.bf16.mxu0 0
    %1211 = vmatpush1.bf16.msra.mxu0 0
    %1212 = vmatprep.subr.bf16.mxu0 0
    %1213 = vmatpush1.bf16.msra.mxu0 0
    %1214 = vmatprep.subr.bf16.mxu0 0
    %1215 = vmatpush1.bf16.msra.mxu0 0
    %1216 = vmatprep.subr.bf16.mxu0 0
    %1217 = vmatpush1.bf16.msra.mxu0 0
    %1218 = vmatprep.mubr.bf16.mxu0 0
    %1219 = vmatmul.mubr.bf16.gmra.mrb[0].mxu0 %v1160
    %v1220 = vpop.f32.mrb[0].mxu0
    %v1221 = vadd.f32 0.0, %v1220
    %v1222 = vpop.f32.mrb[0].mxu0
    %v1223 = vpop.f32.mrb[0].mxu0
    %v1224 = vadd.f32 0.0, %v1223
    %v1225 = vpop.f32.mrb[0].mxu0
    %1226 = vmatprep.mubr.bf16.mxu0 0
    %1227 = vmatmul.mubr.bf16.gmra.mrb[0].mxu0 %v1163
    %v1228 = vpop.f32.mrb[0].mxu0
    %v1229 = vadd.f32 0.0, %v1228
    %v1230 = vpop.f32.mrb[0].mxu0
    %v1231 = vpop.f32.mrb[0].mxu0
    %v1232 = vadd.f32 0.0, %v1231
    %v1233 = vpop.f32.mrb[0].mxu0
    %1234 = vmatprep.mubr.bf16.mxu0 0
    %1235 = vmatmul.mubr.bf16.gmra.mrb[0].mxu0 %v1166
    %v1236 = vpop.f32.mrb[0].mxu0
    %v1237 = vadd.f32 0.0, %v1236
    %v1238 = vpop.f32.mrb[0].mxu0
    %v1239 = vpop.f32.mrb[0].mxu0
    %v1240 = vadd.f32 0.0, %v1239
    %v1241 = vpop.f32.mrb[0].mxu0
    %1242 = vmatprep.mubr.bf16.mxu0 0
    %1243 = vmatmul.mubr.bf16.gmra.mrb[0].mxu0 %v1169
    %v1244 = vpop.f32.mrb[0].mxu0
    %v1245 = vadd.f32 0.0, %v1244
    %v1246 = vpop.f32.mrb[0].mxu0
    %v1247 = vpop.f32.mrb[0].mxu0
    %v1248 = vadd.f32 0.0, %v1247
    %v1249 = vpop.f32.mrb[0].mxu0
    %1250 = vmatprep.mubr.bf16.mxu0 0
    %1251 = vmatmul.mubr.bf16.gmra.mrb[0].mxu0 %v1172
    %v1252 = vpop.f32.mrb[0].mxu0
    %v1253 = vadd.f32 0.0, %v1252
    %v1254 = vpop.f32.mrb[0].mxu0
    %v1255 = vpop.f32.mrb[0].mxu0
    %v1256 = vadd.f32 0.0, %v1255
    %v1257 = vpop.f32.mrb[0].mxu0
    %1258 = vmatprep.mubr.bf16.mxu0 0
    %1259 = vmatmul.mubr.bf16.gmra.mrb[0].mxu0 %v1175
    %v1260 = vpop.f32.mrb[0].mxu0
    %v1261 = vadd.f32 0.0, %v1260
    %v1262 = vpop.f32.mrb[0].mxu0
    %v1263 = vpop.f32.mrb[0].mxu0
    %v1264 = vadd.f32 0.0, %v1263
    %v1265 = vpop.f32.mrb[0].mxu0
    %1266 = vmatprep.mubr.bf16.mxu0 0
    %1267 = vmatmul.mubr.bf16.gmra.mrb[0].mxu0 %v1178
    %v1268 = vpop.f32.mrb[0].mxu0
    %v1269 = vadd.f32 0.0, %v1268
    %v1270 = vpop.f32.mrb[0].mxu0
    %v1271 = vpop.f32.mrb[0].mxu0
    %v1272 = vadd.f32 0.0, %v1271
    %v1273 = vpop.f32.mrb[0].mxu0
    %1274 = vmatprep.mubr.bf16.mxu0 0
    %1275 = vmatmul.mubr.bf16.gmra.mrb[0].mxu0 %v1181
    %v1276 = vpop.f32.mrb[0].mxu0
    %v1277 = vadd.f32 0.0, %v1276
    %v1278 = vpop.f32.mrb[0].mxu0
    %v1279 = vpop.f32.mrb[0].mxu0
    %v1280 = vadd.f32 0.0, %v1279
    %v1281 = vpop.f32.mrb[0].mxu0
    %1282 = vdwg.mxu0
    %1299 = vrot.lane.b32.xlu0 %v1221, 108
    %v1300 = vpop.permute.xlu0 %1299
    %1301 = vrot.lane.b32.xlu0 %v1224, 108
    %v1302 = vpop.permute.xlu0 %1301
    %1303 = vrot.lane.b32.xlu0 %v1229, 108
    %v1304 = vpop.permute.xlu0 %1303
    %1305 = vrot.lane.b32.xlu0 %v1232, 108
    %v1306 = vpop.permute.xlu0 %1305
    %1307 = vrot.lane.b32.xlu0 %v1237, 108
    %v1308 = vpop.permute.xlu0 %1307
    %1309 = vrot.lane.b32.xlu0 %v1240, 108
    %v1310 = vpop.permute.xlu0 %1309
    %1311 = vrot.lane.b32.xlu0 %v1245, 108
    %v1312 = vpop.permute.xlu0 %1311
    %1313 = vrot.lane.b32.xlu0 %v1248, 108
    %v1314 = vpop.permute.xlu0 %1313
    %1315 = vrot.lane.b32.xlu0 %v1253, 108
    %v1316 = vpop.permute.xlu0 %1315
    %1317 = vrot.lane.b32.xlu0 %v1256, 108
    %v1318 = vpop.permute.xlu0 %1317
    %1319 = vrot.lane.b32.xlu0 %v1261, 108
    %v1320 = vpop.permute.xlu0 %1319
    %1321 = vrot.lane.b32.xlu0 %v1264, 108
    %v1322 = vpop.permute.xlu0 %1321
    %1323 = vrot.lane.b32.xlu0 %v1269, 108
    %v1324 = vpop.permute.xlu0 %1323
    %1325 = vrot.lane.b32.xlu0 %v1272, 108
    %v1326 = vpop.permute.xlu0 %1325
    %1327 = vrot.lane.b32.xlu0 %v1277, 108
    %v1328 = vpop.permute.xlu0 %1327
    %1329 = vrot.lane.b32.xlu0 %v1280, 108
    %v1330 = vpop.permute.xlu0 %1329
    %1347 = vxpose.xlu0.b32.start [1/16] %v1300, 128
    %1348 = vxpose.xlu0.b32.cont [2/16] %v1302, 128
    %1349 = vxpose.xlu0.b32.cont [3/16] %v1304, 128
    %1350 = vxpose.xlu0.b32.cont [4/16] %v1306, 128
    %1351 = vxpose.xlu0.b32.cont [5/16] %v1308, 128
    %1352 = vxpose.xlu0.b32.cont [6/16] %v1310, 128
    %1353 = vxpose.xlu0.b32.cont [7/16] %v1312, 128
    %1354 = vxpose.xlu0.b32.cont [8/16] %v1314, 128
    %1355 = vxpose.xlu0.b32.cont [9/16] %v1316, 128
    %1356 = vxpose.xlu0.b32.cont [10/16] %v1318, 128
    %1357 = vxpose.xlu0.b32.cont [11/16] %v1320, 128
    %1358 = vxpose.xlu0.b32.cont [12/16] %v1322, 128
    %1359 = vxpose.xlu0.b32.cont [13/16] %v1324, 128
    %1360 = vxpose.xlu0.b32.cont [14/16] %v1326, 128
    %1361 = vxpose.xlu0.b32.cont [15/16] %v1328, 128
    %1362 = vxpose.xlu0.b32.end [16/16] %v1330, 128
    %v1363 = vpop.trf.xlu0
    %v1364 = vpop.trf.xlu0
    %v1365 = vpop.trf.xlu0
    %v1366 = vpop.trf.xlu0
    %v1367 = vpop.trf.xlu0
    %v1368 = vpop.trf.xlu0
    %v1369 = vpop.trf.xlu0
    %v1370 = vpop.trf.xlu0
    %v1371 = vpop.trf.xlu0
    %v1372 = vpop.trf.xlu0
    %v1373 = vpop.trf.xlu0
    %v1374 = vpop.trf.xlu0
    %v1375 = vpop.trf.xlu0
    %v1376 = vpop.trf.xlu0
    %v1377 = vpop.trf.xlu0
    %v1378 = vpop.trf.xlu0
    %1379 = vset.pattern.permute.xlu0 21
    %1380 = vperm.xlu0 %1379, %v1221
    %v1381 = vpop.permute.xlu0 %1380
    %1383 = vset.pattern.permute.xlu0 21
    %1384 = vperm.xlu0 %1383, %v1224
    %v1385 = vpop.permute.xlu0 %1384
    %1387 = vset.pattern.permute.xlu0 21
    %1388 = vperm.xlu0 %1387, %v1229
    %v1389 = vpop.permute.xlu0 %1388
    %1391 = vset.pattern.permute.xlu0 21
    %1392 = vperm.xlu0 %1391, %v1232
    %v1393 = vpop.permute.xlu0 %1392
    %1395 = vset.pattern.permute.xlu0 21
    %1396 = vperm.xlu0 %1395, %v1237
    %v1397 = vpop.permute.xlu0 %1396
    %1399 = vset.pattern.permute.xlu0 21
    %1400 = vperm.xlu0 %1399, %v1240
    %v1401 = vpop.permute.xlu0 %1400
    %1403 = vset.pattern.permute.xlu0 21
    %1404 = vperm.xlu0 %1403, %v1245
    %v1405 = vpop.permute.xlu0 %1404
    %1407 = vset.pattern.permute.xlu0 21
    %1408 = vperm.xlu0 %1407, %v1248
    %v1409 = vpop.permute.xlu0 %1408
    %1411 = vset.pattern.permute.xlu0 21
    %1412 = vperm.xlu0 %1411, %v1253
    %v1413 = vpop.permute.xlu0 %1412
    %1415 = vset.pattern.permute.xlu0 21
    %1416 = vperm.xlu0 %1415, %v1256
    %v1417 = vpop.permute.xlu0 %1416
    %1419 = vset.pattern.permute.xlu0 21
    %1420 = vperm.xlu0 %1419, %v1261
    %v1421 = vpop.permute.xlu0 %1420
    %1423 = vset.pattern.permute.xlu0 21
    %1424 = vperm.xlu0 %1423, %v1264
    %v1425 = vpop.permute.xlu0 %1424
    %1427 = vset.pattern.permute.xlu0 21
    %1428 = vperm.xlu0 %1427, %v1269
    %v1429 = vpop.permute.xlu0 %1428
    %1431 = vset.pattern.permute.xlu0 21
    %1432 = vperm.xlu0 %1431, %v1272
    %v1433 = vpop.permute.xlu0 %1432
    %1435 = vset.pattern.permute.xlu0 21
    %1436 = vperm.xlu0 %1435, %v1277
    %v1437 = vpop.permute.xlu0 %1436
    %1439 = vset.pattern.permute.xlu0 21
    %1440 = vperm.xlu0 %1439, %v1280
    %v1441 = vpop.permute.xlu0 %1440
    %v1443 = vlaneseq
    %v1444 = vshrl.u32 %v1443, 7
    %v1445 = vsub.s32 0, %v1444
    %v1446 = vrot.slane %v1363, %v1445
    %v1447 = vadd.f32 %v1381, %v1446
    %v1448 = vadd.f32 %v1385, %v1446
    %v1449 = vadd.f32 %v1389, %v1446
    %v1450 = vadd.f32 %v1393, %v1446
    %v1451 = vadd.f32 %v1397, %v1446
    %v1452 = vadd.f32 %v1401, %v1446
    %v1453 = vadd.f32 %v1405, %v1446
    %v1454 = vadd.f32 %v1409, %v1446
    %v1455 = vadd.f32 %v1413, %v1446
    %v1456 = vadd.f32 %v1417, %v1446
    %v1457 = vadd.f32 %v1421, %v1446
    %v1458 = vadd.f32 %v1425, %v1446
    %v1459 = vadd.f32 %v1429, %v1446
    %v1460 = vadd.f32 %v1433, %v1446
    %v1461 = vadd.f32 %v1437, %v1446
    %v1462 = vadd.f32 %v1441, %v1446
    %vm1463 = vcmp.gt.f32.partialorder %v1447, 0.0
    %vm1464 = vcmp.gt.f32.partialorder %v1448, 0.0
    %vm1465 = vcmp.gt.f32.partialorder %v1449, 0.0
    %vm1466 = vcmp.gt.f32.partialorder %v1450, 0.0
    %vm1467 = vcmp.gt.f32.partialorder %v1451, 0.0
    %vm1468 = vcmp.gt.f32.partialorder %v1452, 0.0
    %vm1469 = vcmp.gt.f32.partialorder %v1453, 0.0
    %vm1470 = vcmp.gt.f32.partialorder %v1454, 0.0
    %vm1471 = vcmp.gt.f32.partialorder %v1455, 0.0
    %vm1472 = vcmp.gt.f32.partialorder %v1456, 0.0
    %vm1473 = vcmp.gt.f32.partialorder %v1457, 0.0
    %vm1474 = vcmp.gt.f32.partialorder %v1458, 0.0
    %vm1475 = vcmp.gt.f32.partialorder %v1459, 0.0
    %vm1476 = vcmp.gt.f32.partialorder %v1460, 0.0
    %vm1477 = vcmp.gt.f32.partialorder %v1461, 0.0
    %vm1478 = vcmp.gt.f32.partialorder %v1462, 0.0
    %v1479 = vmul.f32 %v1447, 0.2
    %v1480 = vmul.f32 %v1448, 0.2
    %v1481 = vmul.f32 %v1449, 0.2
    %v1482 = vmul.f32 %v1450, 0.2
    %v1483 = vmul.f32 %v1451, 0.2
    %v1484 = vmul.f32 %v1452, 0.2
    %v1485 = vmul.f32 %v1453, 0.2
    %v1486 = vmul.f32 %v1454, 0.2
    %v1487 = vmul.f32 %v1455, 0.2
    %v1488 = vmul.f32 %v1456, 0.2
    %v1489 = vmul.f32 %v1457, 0.2
    %v1490 = vmul.f32 %v1458, 0.2
    %v1491 = vmul.f32 %v1459, 0.2
    %v1492 = vmul.f32 %v1460, 0.2
    %v1493 = vmul.f32 %v1461, 0.2
    %v1494 = vmul.f32 %v1462, 0.2
    %v1495 = vsel %vm1463, %v1447, %v1479
    %v1496 = vsel %vm1464, %v1448, %v1480
    %v1497 = vsel %vm1465, %v1449, %v1481
    %v1498 = vsel %vm1466, %v1450, %v1482
    %v1499 = vsel %vm1467, %v1451, %v1483
    %v1500 = vsel %vm1468, %v1452, %v1484
    %v1501 = vsel %vm1469, %v1453, %v1485
    %v1502 = vsel %vm1470, %v1454, %v1486
    %v1503 = vsel %vm1471, %v1455, %v1487
    %v1504 = vsel %vm1472, %v1456, %v1488
    %v1505 = vsel %vm1473, %v1457, %v1489
    %v1506 = vsel %vm1474, %v1458, %v1490
    %v1507 = vsel %vm1475, %v1459, %v1491
    %v1508 = vsel %vm1476, %v1460, %v1492
    %v1509 = vsel %vm1477, %v1461, %v1493
    %v1510 = vsel %vm1478, %v1462, %v1494
    %v1511 = vsel %vm503, %v1495, -1e+30
    %v1512 = vsel %vm504, %v1496, -1e+30
    %v1513 = vsel %vm505, %v1497, -1e+30
    %v1514 = vsel %vm506, %v1498, -1e+30
    %v1515 = vsel %vm507, %v1499, -1e+30
    %v1516 = vsel %vm508, %v1500, -1e+30
    %v1517 = vsel %vm509, %v1501, -1e+30
    %v1518 = vsel %vm510, %v1502, -1e+30
    %v1519 = vsel %vm511, %v1503, -1e+30
    %v1520 = vsel %vm512, %v1504, -1e+30
    %v1521 = vsel %vm513, %v1505, -1e+30
    %v1522 = vsel %vm514, %v1506, -1e+30
    %v1523 = vsel %vm515, %v1507, -1e+30
    %v1524 = vsel %vm516, %v1508, -1e+30
    %v1525 = vsel %vm517, %v1509, -1e+30
    %v1526 = vsel %vm518, %v1510, -1e+30
    %1527 = vmax.xlane.f32.xlu0 %v1511
    %v1528 = vpop.xlane.xlu0 %1527
    %1529 = vmax.xlane.f32.xlu0 %v1512
    %v1530 = vpop.xlane.xlu0 %1529
    %1531 = vmax.xlane.f32.xlu0 %v1513
    %v1532 = vpop.xlane.xlu0 %1531
    %1533 = vmax.xlane.f32.xlu0 %v1514
    %v1534 = vpop.xlane.xlu0 %1533
    %1535 = vmax.xlane.f32.xlu0 %v1515
    %v1536 = vpop.xlane.xlu0 %1535
    %1537 = vmax.xlane.f32.xlu0 %v1516
    %v1538 = vpop.xlane.xlu0 %1537
    %1539 = vmax.xlane.f32.xlu0 %v1517
    %v1540 = vpop.xlane.xlu0 %1539
    %1541 = vmax.xlane.f32.xlu0 %v1518
    %v1542 = vpop.xlane.xlu0 %1541
    %1543 = vmax.xlane.f32.xlu0 %v1519
    %v1544 = vpop.xlane.xlu0 %1543
    %1545 = vmax.xlane.f32.xlu0 %v1520
    %v1546 = vpop.xlane.xlu0 %1545
    %1547 = vmax.xlane.f32.xlu0 %v1521
    %v1548 = vpop.xlane.xlu0 %1547
    %1549 = vmax.xlane.f32.xlu0 %v1522
    %v1550 = vpop.xlane.xlu0 %1549
    %1551 = vmax.xlane.f32.xlu0 %v1523
    %v1552 = vpop.xlane.xlu0 %1551
    %1553 = vmax.xlane.f32.xlu0 %v1524
    %v1554 = vpop.xlane.xlu0 %1553
    %1555 = vmax.xlane.f32.xlu0 %v1525
    %v1556 = vpop.xlane.xlu0 %1555
    %1557 = vmax.xlane.f32.xlu0 %v1526
    %v1558 = vpop.xlane.xlu0 %1557
    %v1559 = vsub.f32 %v1511, %v1528
    %v1560 = vsub.f32 %v1512, %v1530
    %v1561 = vsub.f32 %v1513, %v1532
    %v1562 = vsub.f32 %v1514, %v1534
    %v1563 = vsub.f32 %v1515, %v1536
    %v1564 = vsub.f32 %v1516, %v1538
    %v1565 = vsub.f32 %v1517, %v1540
    %v1566 = vsub.f32 %v1518, %v1542
    %v1567 = vsub.f32 %v1519, %v1544
    %v1568 = vsub.f32 %v1520, %v1546
    %v1569 = vsub.f32 %v1521, %v1548
    %v1570 = vsub.f32 %v1522, %v1550
    %v1571 = vsub.f32 %v1523, %v1552
    %v1572 = vsub.f32 %v1524, %v1554
    %v1573 = vsub.f32 %v1525, %v1556
    %v1574 = vsub.f32 %v1526, %v1558
    %v1575 = vmul.f32 %v1559, 1.442695
    %v1576 = vpow.pop %v1575
    %v1577 = vmul.f32 %v1560, 1.442695
    %v1578 = vpow.pop %v1577
    %v1579 = vmul.f32 %v1561, 1.442695
    %v1580 = vpow.pop %v1579
    %v1581 = vmul.f32 %v1562, 1.442695
    %v1582 = vpow.pop %v1581
    %v1583 = vmul.f32 %v1563, 1.442695
    %v1584 = vpow.pop %v1583
    %v1585 = vmul.f32 %v1564, 1.442695
    %v1586 = vpow.pop %v1585
    %v1587 = vmul.f32 %v1565, 1.442695
    %v1588 = vpow.pop %v1587
    %v1589 = vmul.f32 %v1566, 1.442695
    %v1590 = vpow.pop %v1589
    %v1591 = vmul.f32 %v1567, 1.442695
    %v1592 = vpow.pop %v1591
    %v1593 = vmul.f32 %v1568, 1.442695
    %v1594 = vpow.pop %v1593
    %v1595 = vmul.f32 %v1569, 1.442695
    %v1596 = vpow.pop %v1595
    %v1597 = vmul.f32 %v1570, 1.442695
    %v1598 = vpow.pop %v1597
    %v1599 = vmul.f32 %v1571, 1.442695
    %v1600 = vpow.pop %v1599
    %v1601 = vmul.f32 %v1572, 1.442695
    %v1602 = vpow.pop %v1601
    %v1603 = vmul.f32 %v1573, 1.442695
    %v1604 = vpow.pop %v1603
    %v1605 = vmul.f32 %v1574, 1.442695
    %v1606 = vpow.pop %v1605
    %v1607 = vsel %vm503, %v1576, 0.0
    %v1608 = vsel %vm504, %v1578, 0.0
    %v1609 = vsel %vm505, %v1580, 0.0
    %v1610 = vsel %vm506, %v1582, 0.0
    %v1611 = vsel %vm507, %v1584, 0.0
    %v1612 = vsel %vm508, %v1586, 0.0
    %v1613 = vsel %vm509, %v1588, 0.0
    %v1614 = vsel %vm510, %v1590, 0.0
    %v1615 = vsel %vm511, %v1592, 0.0
    %v1616 = vsel %vm512, %v1594, 0.0
    %v1617 = vsel %vm513, %v1596, 0.0
    %v1618 = vsel %vm514, %v1598, 0.0
    %v1619 = vsel %vm515, %v1600, 0.0
    %v1620 = vsel %vm516, %v1602, 0.0
    %v1621 = vsel %vm517, %v1604, 0.0
    %v1622 = vsel %vm518, %v1606, 0.0
    %1623 = vadd.xlane.f32.xlu0 %v1607
    %v1624 = vpop.xlane.xlu0 %1623
    %1625 = vadd.xlane.f32.xlu0 %v1608
    %v1626 = vpop.xlane.xlu0 %1625
    %1627 = vadd.xlane.f32.xlu0 %v1609
    %v1628 = vpop.xlane.xlu0 %1627
    %1629 = vadd.xlane.f32.xlu0 %v1610
    %v1630 = vpop.xlane.xlu0 %1629
    %1631 = vadd.xlane.f32.xlu0 %v1611
    %v1632 = vpop.xlane.xlu0 %1631
    %1633 = vadd.xlane.f32.xlu0 %v1612
    %v1634 = vpop.xlane.xlu0 %1633
    %1635 = vadd.xlane.f32.xlu0 %v1613
    %v1636 = vpop.xlane.xlu0 %1635
    %1637 = vadd.xlane.f32.xlu0 %v1614
    %v1638 = vpop.xlane.xlu0 %1637
    %1639 = vadd.xlane.f32.xlu0 %v1615
    %v1640 = vpop.xlane.xlu0 %1639
    %1641 = vadd.xlane.f32.xlu0 %v1616
    %v1642 = vpop.xlane.xlu0 %1641
    %1643 = vadd.xlane.f32.xlu0 %v1617
    %v1644 = vpop.xlane.xlu0 %1643
    %1645 = vadd.xlane.f32.xlu0 %v1618
    %v1646 = vpop.xlane.xlu0 %1645
    %1647 = vadd.xlane.f32.xlu0 %v1619
    %v1648 = vpop.xlane.xlu0 %1647
    %1649 = vadd.xlane.f32.xlu0 %v1620
    %v1650 = vpop.xlane.xlu0 %1649
    %1651 = vadd.xlane.f32.xlu0 %v1621
    %v1652 = vpop.xlane.xlu0 %1651
    %1653 = vadd.xlane.f32.xlu0 %v1622
    %v1654 = vpop.xlane.xlu0 %1653
    %v1655 = vmax.f32 %v1624, 1e-30
    %v1656 = vmax.f32 %v1626, 1e-30
    %v1657 = vmax.f32 %v1628, 1e-30
    %v1658 = vmax.f32 %v1630, 1e-30
    %v1659 = vmax.f32 %v1632, 1e-30
    %v1660 = vmax.f32 %v1634, 1e-30
    %v1661 = vmax.f32 %v1636, 1e-30
    %v1662 = vmax.f32 %v1638, 1e-30
    %v1663 = vmax.f32 %v1640, 1e-30
    %v1664 = vmax.f32 %v1642, 1e-30
    %v1665 = vmax.f32 %v1644, 1e-30
    %v1666 = vmax.f32 %v1646, 1e-30
    %v1667 = vmax.f32 %v1648, 1e-30
    %v1668 = vmax.f32 %v1650, 1e-30
    %v1669 = vmax.f32 %v1652, 1e-30
    %v1670 = vmax.f32 %v1654, 1e-30
    %v1671 = vrcp.pop %v1655
    %v1672 = vrcp.pop %v1656
    %v1673 = vrcp.pop %v1657
    %v1674 = vrcp.pop %v1658
    %v1675 = vrcp.pop %v1659
    %v1676 = vrcp.pop %v1660
    %v1677 = vrcp.pop %v1661
    %v1678 = vrcp.pop %v1662
    %v1679 = vrcp.pop %v1663
    %v1680 = vrcp.pop %v1664
    %v1681 = vrcp.pop %v1665
    %v1682 = vrcp.pop %v1666
    %v1683 = vrcp.pop %v1667
    %v1684 = vrcp.pop %v1668
    %v1685 = vrcp.pop %v1669
    %v1686 = vrcp.pop %v1670
    %v1687 = vmul.f32 %v1607, %v1671
    %v1688 = vmul.f32 %v1608, %v1672
    %v1689 = vmul.f32 %v1609, %v1673
    %v1690 = vmul.f32 %v1610, %v1674
    %v1691 = vmul.f32 %v1611, %v1675
    %v1692 = vmul.f32 %v1612, %v1676
    %v1693 = vmul.f32 %v1613, %v1677
    %v1694 = vmul.f32 %v1614, %v1678
    %v1695 = vmul.f32 %v1615, %v1679
    %v1696 = vmul.f32 %v1616, %v1680
    %v1697 = vmul.f32 %v1617, %v1681
    %v1698 = vmul.f32 %v1618, %v1682
    %v1699 = vmul.f32 %v1619, %v1683
    %v1700 = vmul.f32 %v1620, %v1684
    %v1701 = vmul.f32 %v1621, %v1685
    %v1702 = vmul.f32 %v1622, %v1686
    %v1703 = vpack.c.bf16 %v1688, %v1687
    %v1704 = vpack.c.bf16 %v1690, %v1689
    %v1705 = vpack.c.bf16 %v1692, %v1691
    %v1706 = vpack.c.bf16 %v1694, %v1693
    %v1707 = vpack.c.bf16 %v1696, %v1695
    %v1708 = vpack.c.bf16 %v1698, %v1697
    %v1709 = vpack.c.bf16 %v1700, %v1699
    %v1710 = vpack.c.bf16 %v1702, %v1701
    %v1711 = vpack.c.bf16 %v1224, %v1221
    %v1712 = vpack.c.bf16 %v1232, %v1229
    %v1713 = vpack.c.bf16 %v1240, %v1237
    %v1714 = vpack.c.bf16 %v1248, %v1245
    %v1715 = vpack.c.bf16 %v1256, %v1253
    %v1716 = vpack.c.bf16 %v1264, %v1261
    %v1717 = vpack.c.bf16 %v1272, %v1269
    %v1718 = vpack.c.bf16 %v1280, %v1277
    %v1719 = vlaneseq
    %v1720 = vshrl.u32 %v1719, 7
    %v1721 = vsub.s32 3, %v1720
    %v1722 = vrot.slane %v95, %v1721
    %1723 = vmatprep.subr.bf16.mxu0 0
    %1724 = vmatpush1.bf16.msra.mxu0 %v1711
    %1725 = vmatprep.subr.bf16.mxu0 0
    %1726 = vmatpush1.bf16.msra.mxu0 %v1712
    %1727 = vmatprep.subr.bf16.mxu0 0
    %1728 = vmatpush1.bf16.msra.mxu0 %v1713
    %1729 = vmatprep.subr.bf16.mxu0 0
    %1730 = vmatpush1.bf16.msra.mxu0 %v1714
    %1731 = vmatprep.subr.bf16.mxu0 0
    %1732 = vmatpush1.bf16.msra.mxu0 %v1715
    %1733 = vmatprep.subr.bf16.mxu0 0
    %1734 = vmatpush1.bf16.msra.mxu0 %v1716
    %1735 = vmatprep.subr.bf16.mxu0 0
    %1736 = vmatpush1.bf16.msra.mxu0 %v1717
    %1737 = vmatprep.subr.bf16.mxu0 0
    %1738 = vmatpush1.bf16.msra.mxu0 %v1718
    %1739 = vmatprep.subr.bf16.mxu0 0
    %1740 = vmatpush1.bf16.msra.mxu0 0
    %1741 = vmatprep.subr.bf16.mxu0 0
    %1742 = vmatpush1.bf16.msra.mxu0 0
    %1743 = vmatprep.subr.bf16.mxu0 0
    %1744 = vmatpush1.bf16.msra.mxu0 0
    %1745 = vmatprep.subr.bf16.mxu0 0
    %1746 = vmatpush1.bf16.msra.mxu0 0
    %1747 = vmatprep.subr.bf16.mxu0 0
    %1748 = vmatpush1.bf16.msra.mxu0 0
    %1749 = vmatprep.subr.bf16.mxu0 0
    %1750 = vmatpush1.bf16.msra.mxu0 0
    %1751 = vmatprep.subr.bf16.mxu0 0
    %1752 = vmatpush1.bf16.msra.mxu0 0
    %1753 = vmatprep.subr.bf16.mxu0 0
    %1754 = vmatpush1.bf16.msra.mxu0 0
    %1755 = vmatprep.mubr.bf16.mxu0 0
    %1756 = vmatmul.mubr.bf16.gmra.mrb[0].mxu0 %v1703
    %v1757 = vpop.f32.mrb[0].mxu0
    %v1758 = vadd.f32 %v1722, %v1757
    %v1759 = vpop.f32.mrb[0].mxu0
    %v1760 = vpop.f32.mrb[0].mxu0
    %v1761 = vadd.f32 %v1722, %v1760
    %v1762 = vpop.f32.mrb[0].mxu0
    %1763 = vmatprep.mubr.bf16.mxu0 0
    %1764 = vmatmul.mubr.bf16.gmra.mrb[0].mxu0 %v1704
    %v1765 = vpop.f32.mrb[0].mxu0
    %v1766 = vadd.f32 %v1722, %v1765
    %v1767 = vpop.f32.mrb[0].mxu0
    %v1768 = vpop.f32.mrb[0].mxu0
    %v1769 = vadd.f32 %v1722, %v1768
    %v1770 = vpop.f32.mrb[0].mxu0
    %1771 = vmatprep.mubr.bf16.mxu0 0
    %1772 = vmatmul.mubr.bf16.gmra.mrb[0].mxu0 %v1705
    %v1773 = vpop.f32.mrb[0].mxu0
    %v1774 = vadd.f32 %v1722, %v1773
    %v1775 = vpop.f32.mrb[0].mxu0
    %v1776 = vpop.f32.mrb[0].mxu0
    %v1777 = vadd.f32 %v1722, %v1776
    %v1778 = vpop.f32.mrb[0].mxu0
    %1779 = vmatprep.mubr.bf16.mxu0 0
    %1780 = vmatmul.mubr.bf16.gmra.mrb[0].mxu0 %v1706
    %v1781 = vpop.f32.mrb[0].mxu0
    %v1782 = vadd.f32 %v1722, %v1781
    %v1783 = vpop.f32.mrb[0].mxu0
    %v1784 = vpop.f32.mrb[0].mxu0
    %v1785 = vadd.f32 %v1722, %v1784
    %v1786 = vpop.f32.mrb[0].mxu0
    %1787 = vmatprep.mubr.bf16.mxu0 0
    %1788 = vmatmul.mubr.bf16.gmra.mrb[0].mxu0 %v1707
    %v1789 = vpop.f32.mrb[0].mxu0
    %v1790 = vadd.f32 %v1722, %v1789
    %v1791 = vpop.f32.mrb[0].mxu0
    %v1792 = vpop.f32.mrb[0].mxu0
    %v1793 = vadd.f32 %v1722, %v1792
    %v1794 = vpop.f32.mrb[0].mxu0
    %1795 = vmatprep.mubr.bf16.mxu0 0
    %1796 = vmatmul.mubr.bf16.gmra.mrb[0].mxu0 %v1708
    %v1797 = vpop.f32.mrb[0].mxu0
    %v1798 = vadd.f32 %v1722, %v1797
    %v1799 = vpop.f32.mrb[0].mxu0
    %v1800 = vpop.f32.mrb[0].mxu0
    %v1801 = vadd.f32 %v1722, %v1800
    %v1802 = vpop.f32.mrb[0].mxu0
    %1803 = vmatprep.mubr.bf16.mxu0 0
    %1804 = vmatmul.mubr.bf16.gmra.mrb[0].mxu0 %v1709
    %v1805 = vpop.f32.mrb[0].mxu0
    %v1806 = vadd.f32 %v1722, %v1805
    %v1807 = vpop.f32.mrb[0].mxu0
    %v1808 = vpop.f32.mrb[0].mxu0
    %v1809 = vadd.f32 %v1722, %v1808
    %v1810 = vpop.f32.mrb[0].mxu0
    %1811 = vmatprep.mubr.bf16.mxu0 0
    %1812 = vmatmul.mubr.bf16.gmra.mrb[0].mxu0 %v1710
    %v1813 = vpop.f32.mrb[0].mxu0
    %v1814 = vadd.f32 %v1722, %v1813
    %v1815 = vpop.f32.mrb[0].mxu0
    %v1816 = vpop.f32.mrb[0].mxu0
    %v1817 = vadd.f32 %v1722, %v1816
    %v1818 = vpop.f32.mrb[0].mxu0
    %1819 = vdwg.mxu0
    %v1820 = vmul.f32 %v1758, %v831
    %v1821 = vmul.f32 %v1761, %v836
    %v1822 = vmul.f32 %v1766, %v841
    %v1823 = vmul.f32 %v1769, %v846
    %v1824 = vmul.f32 %v1774, %v851
    %v1825 = vmul.f32 %v1777, %v856
    %v1826 = vmul.f32 %v1782, %v861
    %v1827 = vmul.f32 %v1785, %v866
    %v1828 = vmul.f32 %v1790, %v871
    %v1829 = vmul.f32 %v1793, %v876
    %v1830 = vmul.f32 %v1798, %v881
    %v1831 = vmul.f32 %v1801, %v886
    %v1832 = vmul.f32 %v1806, %v891
    %v1833 = vmul.f32 %v1809, %v896
    %v1834 = vmul.f32 %v1814, %v901
    %v1835 = vmul.f32 %v1817, %v906
    %v1836 = vsel %vm117, %v1820, 0.0
    %v1837 = vsel %vm117, %v1821, 0.0
    %v1838 = vadd.f32 %v1836, %v1837
    %v1839 = vsel %vm117, %v1822, 0.0
    %v1840 = vadd.f32 %v1838, %v1839
    %v1841 = vsel %vm117, %v1823, 0.0
    %v1842 = vadd.f32 %v1840, %v1841
    %v1843 = vsel %vm117, %v1824, 0.0
    %v1844 = vadd.f32 %v1842, %v1843
    %v1845 = vsel %vm117, %v1825, 0.0
    %v1846 = vadd.f32 %v1844, %v1845
    %v1847 = vsel %vm117, %v1826, 0.0
    %v1848 = vadd.f32 %v1846, %v1847
    %v1849 = vsel %vm117, %v1827, 0.0
    %v1850 = vadd.f32 %v1848, %v1849
    %v1851 = vsel %vm117, %v1828, 0.0
    %v1852 = vadd.f32 %v1850, %v1851
    %v1853 = vsel %vm117, %v1829, 0.0
    %v1854 = vadd.f32 %v1852, %v1853
    %v1855 = vsel %vm117, %v1830, 0.0
    %v1856 = vadd.f32 %v1854, %v1855
    %v1857 = vsel %vm117, %v1831, 0.0
    %v1858 = vadd.f32 %v1856, %v1857
    %v1859 = vsel %vm117, %v1832, 0.0
    %v1860 = vadd.f32 %v1858, %v1859
    %v1861 = vsel %vm117, %v1833, 0.0
    %v1862 = vadd.f32 %v1860, %v1861
    %v1863 = vsel %vm117, %v1834, 0.0
    %v1864 = vadd.f32 %v1862, %v1863
    %v1865 = vsel %vm117, %v1835, 0.0
    %v1866 = vadd.f32 %v1864, %v1865
    %v1867 = vrot.slane %v1866, 4
    %v1868 = vadd.f32 %v1866, %v1867
    %v1869 = vrot.slane %v1868, 2
    %v1870 = vadd.f32 %v1868, %v1869
    %v1871 = vrot.slane %v1870, 1
    %v1872 = vadd.f32 %v1870, %v1871
    %v1873 = vmul.f32 %v1872, 0.0625
    %v1874 = vsub.f32 %v1758, %v1873
    %v1875 = vsub.f32 %v1761, %v1873
    %v1876 = vsub.f32 %v1766, %v1873
    %v1877 = vsub.f32 %v1769, %v1873
    %v1878 = vsub.f32 %v1774, %v1873
    %v1879 = vsub.f32 %v1777, %v1873
    %v1880 = vsub.f32 %v1782, %v1873
    %v1881 = vsub.f32 %v1785, %v1873
    %v1882 = vsub.f32 %v1790, %v1873
    %v1883 = vsub.f32 %v1793, %v1873
    %v1884 = vsub.f32 %v1798, %v1873
    %v1885 = vsub.f32 %v1801, %v1873
    %v1886 = vsub.f32 %v1806, %v1873
    %v1887 = vsub.f32 %v1809, %v1873
    %v1888 = vsub.f32 %v1814, %v1873
    %v1889 = vsub.f32 %v1817, %v1873
    %v1890 = vmul.f32 %v1874, %v831
    %v1891 = vmul.f32 %v1875, %v836
    %v1892 = vmul.f32 %v1876, %v841
    %v1893 = vmul.f32 %v1877, %v846
    %v1894 = vmul.f32 %v1878, %v851
    %v1895 = vmul.f32 %v1879, %v856
    %v1896 = vmul.f32 %v1880, %v861
    %v1897 = vmul.f32 %v1881, %v866
    %v1898 = vmul.f32 %v1882, %v871
    %v1899 = vmul.f32 %v1883, %v876
    %v1900 = vmul.f32 %v1884, %v881
    %v1901 = vmul.f32 %v1885, %v886
    %v1902 = vmul.f32 %v1886, %v891
    %v1903 = vmul.f32 %v1887, %v896
    %v1904 = vmul.f32 %v1888, %v901
    %v1905 = vmul.f32 %v1889, %v906
    %v1906 = vmul.f32 %v1890, %v1890
    %v1907 = vmul.f32 %v1891, %v1891
    %v1908 = vmul.f32 %v1892, %v1892
    %v1909 = vmul.f32 %v1893, %v1893
    %v1910 = vmul.f32 %v1894, %v1894
    %v1911 = vmul.f32 %v1895, %v1895
    %v1912 = vmul.f32 %v1896, %v1896
    %v1913 = vmul.f32 %v1897, %v1897
    %v1914 = vmul.f32 %v1898, %v1898
    %v1915 = vmul.f32 %v1899, %v1899
    %v1916 = vmul.f32 %v1900, %v1900
    %v1917 = vmul.f32 %v1901, %v1901
    %v1918 = vmul.f32 %v1902, %v1902
    %v1919 = vmul.f32 %v1903, %v1903
    %v1920 = vmul.f32 %v1904, %v1904
    %v1921 = vmul.f32 %v1905, %v1905
    %v1922 = vsel %vm117, %v1906, 0.0
    %v1923 = vsel %vm117, %v1907, 0.0
    %v1924 = vadd.f32 %v1922, %v1923
    %v1925 = vsel %vm117, %v1908, 0.0
    %v1926 = vadd.f32 %v1924, %v1925
    %v1927 = vsel %vm117, %v1909, 0.0
    %v1928 = vadd.f32 %v1926, %v1927
    %v1929 = vsel %vm117, %v1910, 0.0
    %v1930 = vadd.f32 %v1928, %v1929
    %v1931 = vsel %vm117, %v1911, 0.0
    %v1932 = vadd.f32 %v1930, %v1931
    %v1933 = vsel %vm117, %v1912, 0.0
    %v1934 = vadd.f32 %v1932, %v1933
    %v1935 = vsel %vm117, %v1913, 0.0
    %v1936 = vadd.f32 %v1934, %v1935
    %v1937 = vsel %vm117, %v1914, 0.0
    %v1938 = vadd.f32 %v1936, %v1937
    %v1939 = vsel %vm117, %v1915, 0.0
    %v1940 = vadd.f32 %v1938, %v1939
    %v1941 = vsel %vm117, %v1916, 0.0
    %v1942 = vadd.f32 %v1940, %v1941
    %v1943 = vsel %vm117, %v1917, 0.0
    %v1944 = vadd.f32 %v1942, %v1943
    %v1945 = vsel %vm117, %v1918, 0.0
    %v1946 = vadd.f32 %v1944, %v1945
    %v1947 = vsel %vm117, %v1919, 0.0
    %v1948 = vadd.f32 %v1946, %v1947
    %v1949 = vsel %vm117, %v1920, 0.0
    %v1950 = vadd.f32 %v1948, %v1949
    %v1951 = vsel %vm117, %v1921, 0.0
    %v1952 = vadd.f32 %v1950, %v1951
    %v1953 = vrot.slane %v1952, 4
    %v1954 = vadd.f32 %v1952, %v1953
    %v1955 = vrot.slane %v1954, 2
    %v1956 = vadd.f32 %v1954, %v1955
    %v1957 = vrot.slane %v1956, 1
    %v1958 = vadd.f32 %v1956, %v1957
    %v1959 = vmul.f32 %v1958, 0.0625
    %v1960 = vadd.f32 %v1959, 1e-05
    %v1961 = vrsqrt.pop %v1960
    %v1962 = vmul.f32 %v1874, %v1961
    %v1963 = vmul.f32 %v1875, %v1961
    %v1964 = vmul.f32 %v1876, %v1961
    %v1965 = vmul.f32 %v1877, %v1961
    %v1966 = vmul.f32 %v1878, %v1961
    %v1967 = vmul.f32 %v1879, %v1961
    %v1968 = vmul.f32 %v1880, %v1961
    %v1969 = vmul.f32 %v1881, %v1961
    %v1970 = vmul.f32 %v1882, %v1961
    %v1971 = vmul.f32 %v1883, %v1961
    %v1972 = vmul.f32 %v1884, %v1961
    %v1973 = vmul.f32 %v1885, %v1961
    %v1974 = vmul.f32 %v1886, %v1961
    %v1975 = vmul.f32 %v1887, %v1961
    %v1976 = vmul.f32 %v1888, %v1961
    %v1977 = vmul.f32 %v1889, %v1961
    %v1978 = vlaneseq
    %v1979 = vshrl.u32 %v1978, 7
    %v1980 = vsub.s32 4, %v1979
    %v1981 = vrot.slane %v95, %v1980
    %v1982 = vmul.f32 %v1962, %v1981
    %v1983 = vmul.f32 %v1963, %v1981
    %v1984 = vmul.f32 %v1964, %v1981
    %v1985 = vmul.f32 %v1965, %v1981
    %v1986 = vmul.f32 %v1966, %v1981
    %v1987 = vmul.f32 %v1967, %v1981
    %v1988 = vmul.f32 %v1968, %v1981
    %v1989 = vmul.f32 %v1969, %v1981
    %v1990 = vmul.f32 %v1970, %v1981
    %v1991 = vmul.f32 %v1971, %v1981
    %v1992 = vmul.f32 %v1972, %v1981
    %v1993 = vmul.f32 %v1973, %v1981
    %v1994 = vmul.f32 %v1974, %v1981
    %v1995 = vmul.f32 %v1975, %v1981
    %v1996 = vmul.f32 %v1976, %v1981
    %v1997 = vmul.f32 %v1977, %v1981
    %v1998 = vlaneseq
    %v1999 = vshrl.u32 %v1998, 7
    %v2000 = vsub.s32 5, %v1999
    %v2001 = vrot.slane %v95, %v2000
    %v2002 = vadd.f32 %v1982, %v2001
    %v2003 = vadd.f32 %v1983, %v2001
    %v2004 = vadd.f32 %v1984, %v2001
    %v2005 = vadd.f32 %v1985, %v2001
    %v2006 = vadd.f32 %v1986, %v2001
    %v2007 = vadd.f32 %v1987, %v2001
    %v2008 = vadd.f32 %v1988, %v2001
    %v2009 = vadd.f32 %v1989, %v2001
    %v2010 = vadd.f32 %v1990, %v2001
    %v2011 = vadd.f32 %v1991, %v2001
    %v2012 = vadd.f32 %v1992, %v2001
    %v2013 = vadd.f32 %v1993, %v2001
    %v2014 = vadd.f32 %v1994, %v2001
    %v2015 = vadd.f32 %v1995, %v2001
    %v2016 = vadd.f32 %v1996, %v2001
    %v2017 = vadd.f32 %v1997, %v2001
    %v2018 = vmax.f32 %v2002, 0.0
    %v2019 = vmax.f32 %v2003, 0.0
    %v2020 = vmax.f32 %v2004, 0.0
    %v2021 = vmax.f32 %v2005, 0.0
    %v2022 = vmax.f32 %v2006, 0.0
    %v2023 = vmax.f32 %v2007, 0.0
    %v2024 = vmax.f32 %v2008, 0.0
    %v2025 = vmax.f32 %v2009, 0.0
    %v2026 = vmax.f32 %v2010, 0.0
    %v2027 = vmax.f32 %v2011, 0.0
    %v2028 = vmax.f32 %v2012, 0.0
    %v2029 = vmax.f32 %v2013, 0.0
    %v2030 = vmax.f32 %v2014, 0.0
    %v2031 = vmax.f32 %v2015, 0.0
    %v2032 = vmax.f32 %v2016, 0.0
    %v2033 = vmax.f32 %v2017, 0.0
    %v2034 = vmul.f32 %v2018, %v831
    %v2035 = vmul.f32 %v2019, %v836
    %v2036 = vmul.f32 %v2020, %v841
    %v2037 = vmul.f32 %v2021, %v846
    %v2038 = vmul.f32 %v2022, %v851
    %v2039 = vmul.f32 %v2023, %v856
    %v2040 = vmul.f32 %v2024, %v861
    %v2041 = vmul.f32 %v2025, %v866
    %v2042 = vmul.f32 %v2026, %v871
    %v2043 = vmul.f32 %v2027, %v876
    %v2044 = vmul.f32 %v2028, %v881
    %v2045 = vmul.f32 %v2029, %v886
    %v2046 = vmul.f32 %v2030, %v891
    %v2047 = vmul.f32 %v2031, %v896
    %v2048 = vmul.f32 %v2032, %v901
    %v2049 = vmul.f32 %v2033, %v906
    %s2050 = scalar_lea.vmem %s3, 24
    %v2051 = vld [vmem:[%s2050] sm:$0xf]
    %v2052 = vld [vmem:[%s2050 + $0x4] sm:$0xf]
    %v2053 = vld [vmem:[%s2050 + $0x8] sm:$0x3]
    %v2054 = vpack.c.bf16 %v2035, %v2034
    %v2055 = vpack.c.bf16 %v2037, %v2036
    %v2056 = vpack.c.bf16 %v2039, %v2038
    %v2057 = vpack.c.bf16 %v2041, %v2040
    %v2058 = vpack.c.bf16 %v2043, %v2042
    %v2059 = vpack.c.bf16 %v2045, %v2044
    %v2060 = vpack.c.bf16 %v2047, %v2046
    %v2061 = vpack.c.bf16 %v2049, %v2048
    %v2065 = vunpack.c.l.b16 %v2051
    %v2066 = vunpack.c.l.b16 %v2052
    %v2067 = vunpack.c.l.b16 %v2053
    %v2068 = vpack.c.b16 %v2066, %v2065
    %v2069 = vpack.c.b16 %v2067, %v2067
    %v2072 = vsel %vm117, %v2054, 0
    %v2075 = vsel %vm117, %v2055, 0
    %v2078 = vsel %vm117, %v2056, 0
    %v2081 = vsel %vm117, %v2057, 0
    %v2084 = vsel %vm117, %v2058, 0
    %v2087 = vsel %vm117, %v2059, 0
    %v2090 = vsel %vm117, %v2060, 0
    %v2093 = vsel %vm117, %v2061, 0
    %v2096 = vsel %vm142, %v2069, 0
    %2098 = vmatprep.subr.bf16.mxu0 0
    %2099 = vmatpush1.bf16.msra.mxu0 %v2068
    %2100 = vmatprep.subr.bf16.mxu0 0
    %2101 = vmatpush1.bf16.msra.mxu0 %v2096
    %2102 = vmatprep.subr.bf16.mxu0 0
    %2103 = vmatpush1.bf16.msra.mxu0 0
    %2104 = vmatprep.subr.bf16.mxu0 0
    %2105 = vmatpush1.bf16.msra.mxu0 0
    %2106 = vmatprep.subr.bf16.mxu0 0
    %2107 = vmatpush1.bf16.msra.mxu0 0
    %2108 = vmatprep.subr.bf16.mxu0 0
    %2109 = vmatpush1.bf16.msra.mxu0 0
    %2110 = vmatprep.subr.bf16.mxu0 0
    %2111 = vmatpush1.bf16.msra.mxu0 0
    %2112 = vmatprep.subr.bf16.mxu0 0
    %2113 = vmatpush1.bf16.msra.mxu0 0
    %2114 = vmatprep.subr.bf16.mxu0 0
    %2115 = vmatpush1.bf16.msra.mxu0 0
    %2116 = vmatprep.subr.bf16.mxu0 0
    %2117 = vmatpush1.bf16.msra.mxu0 0
    %2118 = vmatprep.subr.bf16.mxu0 0
    %2119 = vmatpush1.bf16.msra.mxu0 0
    %2120 = vmatprep.subr.bf16.mxu0 0
    %2121 = vmatpush1.bf16.msra.mxu0 0
    %2122 = vmatprep.subr.bf16.mxu0 0
    %2123 = vmatpush1.bf16.msra.mxu0 0
    %2124 = vmatprep.subr.bf16.mxu0 0
    %2125 = vmatpush1.bf16.msra.mxu0 0
    %2126 = vmatprep.subr.bf16.mxu0 0
    %2127 = vmatpush1.bf16.msra.mxu0 0
    %2128 = vmatprep.subr.bf16.mxu0 0
    %2129 = vmatpush1.bf16.msra.mxu0 0
    %2130 = vmatprep.mubr.bf16.mxu0 0
    %2131 = vmatmul.mubr.bf16.gmra.mrb[0].mxu0 %v2072
    %v2132 = vpop.f32.mrb[0].mxu0
    %v2133 = vadd.f32 0.0, %v2132
    %v2134 = vpop.f32.mrb[0].mxu0
    %v2135 = vpop.f32.mrb[0].mxu0
    %v2136 = vadd.f32 0.0, %v2135
    %v2137 = vpop.f32.mrb[0].mxu0
    %2138 = vmatprep.mubr.bf16.mxu0 0
    %2139 = vmatmul.mubr.bf16.gmra.mrb[0].mxu0 %v2075
    %v2140 = vpop.f32.mrb[0].mxu0
    %v2141 = vadd.f32 0.0, %v2140
    %v2142 = vpop.f32.mrb[0].mxu0
    %v2143 = vpop.f32.mrb[0].mxu0
    %v2144 = vadd.f32 0.0, %v2143
    %v2145 = vpop.f32.mrb[0].mxu0
    %2146 = vmatprep.mubr.bf16.mxu0 0
    %2147 = vmatmul.mubr.bf16.gmra.mrb[0].mxu0 %v2078
    %v2148 = vpop.f32.mrb[0].mxu0
    %v2149 = vadd.f32 0.0, %v2148
    %v2150 = vpop.f32.mrb[0].mxu0
    %v2151 = vpop.f32.mrb[0].mxu0
    %v2152 = vadd.f32 0.0, %v2151
    %v2153 = vpop.f32.mrb[0].mxu0
    %2154 = vmatprep.mubr.bf16.mxu0 0
    %2155 = vmatmul.mubr.bf16.gmra.mrb[0].mxu0 %v2081
    %v2156 = vpop.f32.mrb[0].mxu0
    %v2157 = vadd.f32 0.0, %v2156
    %v2158 = vpop.f32.mrb[0].mxu0
    %v2159 = vpop.f32.mrb[0].mxu0
    %v2160 = vadd.f32 0.0, %v2159
    %v2161 = vpop.f32.mrb[0].mxu0
    %2162 = vmatprep.mubr.bf16.mxu0 0
    %2163 = vmatmul.mubr.bf16.gmra.mrb[0].mxu0 %v2084
    %v2164 = vpop.f32.mrb[0].mxu0
    %v2165 = vadd.f32 0.0, %v2164
    %v2166 = vpop.f32.mrb[0].mxu0
    %v2167 = vpop.f32.mrb[0].mxu0
    %v2168 = vadd.f32 0.0, %v2167
    %v2169 = vpop.f32.mrb[0].mxu0
    %2170 = vmatprep.mubr.bf16.mxu0 0
    %2171 = vmatmul.mubr.bf16.gmra.mrb[0].mxu0 %v2087
    %v2172 = vpop.f32.mrb[0].mxu0
    %v2173 = vadd.f32 0.0, %v2172
    %v2174 = vpop.f32.mrb[0].mxu0
    %v2175 = vpop.f32.mrb[0].mxu0
    %v2176 = vadd.f32 0.0, %v2175
    %v2177 = vpop.f32.mrb[0].mxu0
    %2178 = vmatprep.mubr.bf16.mxu0 0
    %2179 = vmatmul.mubr.bf16.gmra.mrb[0].mxu0 %v2090
    %v2180 = vpop.f32.mrb[0].mxu0
    %v2181 = vadd.f32 0.0, %v2180
    %v2182 = vpop.f32.mrb[0].mxu0
    %v2183 = vpop.f32.mrb[0].mxu0
    %v2184 = vadd.f32 0.0, %v2183
    %v2185 = vpop.f32.mrb[0].mxu0
    %2186 = vmatprep.mubr.bf16.mxu0 0
    %2187 = vmatmul.mubr.bf16.gmra.mrb[0].mxu0 %v2093
    %v2188 = vpop.f32.mrb[0].mxu0
    %v2189 = vadd.f32 0.0, %v2188
    %v2190 = vpop.f32.mrb[0].mxu0
    %v2191 = vpop.f32.mrb[0].mxu0
    %v2192 = vadd.f32 0.0, %v2191
    %v2193 = vpop.f32.mrb[0].mxu0
    %2194 = vdwg.mxu0
    %2211 = vrot.lane.b32.xlu0 %v2133, 108
    %v2212 = vpop.permute.xlu0 %2211
    %2213 = vrot.lane.b32.xlu0 %v2136, 108
    %v2214 = vpop.permute.xlu0 %2213
    %2215 = vrot.lane.b32.xlu0 %v2141, 108
    %v2216 = vpop.permute.xlu0 %2215
    %2217 = vrot.lane.b32.xlu0 %v2144, 108
    %v2218 = vpop.permute.xlu0 %2217
    %2219 = vrot.lane.b32.xlu0 %v2149, 108
    %v2220 = vpop.permute.xlu0 %2219
    %2221 = vrot.lane.b32.xlu0 %v2152, 108
    %v2222 = vpop.permute.xlu0 %2221
    %2223 = vrot.lane.b32.xlu0 %v2157, 108
    %v2224 = vpop.permute.xlu0 %2223
    %2225 = vrot.lane.b32.xlu0 %v2160, 108
    %v2226 = vpop.permute.xlu0 %2225
    %2227 = vrot.lane.b32.xlu0 %v2165, 108
    %v2228 = vpop.permute.xlu0 %2227
    %2229 = vrot.lane.b32.xlu0 %v2168, 108
    %v2230 = vpop.permute.xlu0 %2229
    %2231 = vrot.lane.b32.xlu0 %v2173, 108
    %v2232 = vpop.permute.xlu0 %2231
    %2233 = vrot.lane.b32.xlu0 %v2176, 108
    %v2234 = vpop.permute.xlu0 %2233
    %2235 = vrot.lane.b32.xlu0 %v2181, 108
    %v2236 = vpop.permute.xlu0 %2235
    %2237 = vrot.lane.b32.xlu0 %v2184, 108
    %v2238 = vpop.permute.xlu0 %2237
    %2239 = vrot.lane.b32.xlu0 %v2189, 108
    %v2240 = vpop.permute.xlu0 %2239
    %2241 = vrot.lane.b32.xlu0 %v2192, 108
    %v2242 = vpop.permute.xlu0 %2241
    %2259 = vxpose.xlu0.b32.start [1/16] %v2212, 128
    %2260 = vxpose.xlu0.b32.cont [2/16] %v2214, 128
    %2261 = vxpose.xlu0.b32.cont [3/16] %v2216, 128
    %2262 = vxpose.xlu0.b32.cont [4/16] %v2218, 128
    %2263 = vxpose.xlu0.b32.cont [5/16] %v2220, 128
    %2264 = vxpose.xlu0.b32.cont [6/16] %v2222, 128
    %2265 = vxpose.xlu0.b32.cont [7/16] %v2224, 128
    %2266 = vxpose.xlu0.b32.cont [8/16] %v2226, 128
    %2267 = vxpose.xlu0.b32.cont [9/16] %v2228, 128
    %2268 = vxpose.xlu0.b32.cont [10/16] %v2230, 128
    %2269 = vxpose.xlu0.b32.cont [11/16] %v2232, 128
    %2270 = vxpose.xlu0.b32.cont [12/16] %v2234, 128
    %2271 = vxpose.xlu0.b32.cont [13/16] %v2236, 128
    %2272 = vxpose.xlu0.b32.cont [14/16] %v2238, 128
    %2273 = vxpose.xlu0.b32.cont [15/16] %v2240, 128
    %2274 = vxpose.xlu0.b32.end [16/16] %v2242, 128
    %v2275 = vpop.trf.xlu0
    %v2276 = vpop.trf.xlu0
    %v2277 = vpop.trf.xlu0
    %v2278 = vpop.trf.xlu0
    %v2279 = vpop.trf.xlu0
    %v2280 = vpop.trf.xlu0
    %v2281 = vpop.trf.xlu0
    %v2282 = vpop.trf.xlu0
    %v2283 = vpop.trf.xlu0
    %v2284 = vpop.trf.xlu0
    %v2285 = vpop.trf.xlu0
    %v2286 = vpop.trf.xlu0
    %v2287 = vpop.trf.xlu0
    %v2288 = vpop.trf.xlu0
    %v2289 = vpop.trf.xlu0
    %v2290 = vpop.trf.xlu0
    %2291 = vset.pattern.permute.xlu0 21
    %2292 = vperm.xlu0 %2291, %v2133
    %v2293 = vpop.permute.xlu0 %2292
    %2295 = vset.pattern.permute.xlu0 21
    %2296 = vperm.xlu0 %2295, %v2136
    %v2297 = vpop.permute.xlu0 %2296
    %2299 = vset.pattern.permute.xlu0 21
    %2300 = vperm.xlu0 %2299, %v2141
    %v2301 = vpop.permute.xlu0 %2300
    %2303 = vset.pattern.permute.xlu0 21
    %2304 = vperm.xlu0 %2303, %v2144
    %v2305 = vpop.permute.xlu0 %2304
    %2307 = vset.pattern.permute.xlu0 21
    %2308 = vperm.xlu0 %2307, %v2149
    %v2309 = vpop.permute.xlu0 %2308
    %2311 = vset.pattern.permute.xlu0 21
    %2312 = vperm.xlu0 %2311, %v2152
    %v2313 = vpop.permute.xlu0 %2312
    %2315 = vset.pattern.permute.xlu0 21
    %2316 = vperm.xlu0 %2315, %v2157
    %v2317 = vpop.permute.xlu0 %2316
    %2319 = vset.pattern.permute.xlu0 21
    %2320 = vperm.xlu0 %2319, %v2160
    %v2321 = vpop.permute.xlu0 %2320
    %2323 = vset.pattern.permute.xlu0 21
    %2324 = vperm.xlu0 %2323, %v2165
    %v2325 = vpop.permute.xlu0 %2324
    %2327 = vset.pattern.permute.xlu0 21
    %2328 = vperm.xlu0 %2327, %v2168
    %v2329 = vpop.permute.xlu0 %2328
    %2331 = vset.pattern.permute.xlu0 21
    %2332 = vperm.xlu0 %2331, %v2173
    %v2333 = vpop.permute.xlu0 %2332
    %2335 = vset.pattern.permute.xlu0 21
    %2336 = vperm.xlu0 %2335, %v2176
    %v2337 = vpop.permute.xlu0 %2336
    %2339 = vset.pattern.permute.xlu0 21
    %2340 = vperm.xlu0 %2339, %v2181
    %v2341 = vpop.permute.xlu0 %2340
    %2343 = vset.pattern.permute.xlu0 21
    %2344 = vperm.xlu0 %2343, %v2184
    %v2345 = vpop.permute.xlu0 %2344
    %2347 = vset.pattern.permute.xlu0 21
    %2348 = vperm.xlu0 %2347, %v2189
    %v2349 = vpop.permute.xlu0 %2348
    %2351 = vset.pattern.permute.xlu0 21
    %2352 = vperm.xlu0 %2351, %v2192
    %v2353 = vpop.permute.xlu0 %2352
    %v2355 = vlaneseq
    %v2356 = vshrl.u32 %v2355, 7
    %v2357 = vsub.s32 0, %v2356
    %v2358 = vrot.slane %v2275, %v2357
    %v2359 = vadd.f32 %v2293, %v2358
    %v2360 = vadd.f32 %v2297, %v2358
    %v2361 = vadd.f32 %v2301, %v2358
    %v2362 = vadd.f32 %v2305, %v2358
    %v2363 = vadd.f32 %v2309, %v2358
    %v2364 = vadd.f32 %v2313, %v2358
    %v2365 = vadd.f32 %v2317, %v2358
    %v2366 = vadd.f32 %v2321, %v2358
    %v2367 = vadd.f32 %v2325, %v2358
    %v2368 = vadd.f32 %v2329, %v2358
    %v2369 = vadd.f32 %v2333, %v2358
    %v2370 = vadd.f32 %v2337, %v2358
    %v2371 = vadd.f32 %v2341, %v2358
    %v2372 = vadd.f32 %v2345, %v2358
    %v2373 = vadd.f32 %v2349, %v2358
    %v2374 = vadd.f32 %v2353, %v2358
    %vm2375 = vcmp.gt.f32.partialorder %v2359, 0.0
    %vm2376 = vcmp.gt.f32.partialorder %v2360, 0.0
    %vm2377 = vcmp.gt.f32.partialorder %v2361, 0.0
    %vm2378 = vcmp.gt.f32.partialorder %v2362, 0.0
    %vm2379 = vcmp.gt.f32.partialorder %v2363, 0.0
    %vm2380 = vcmp.gt.f32.partialorder %v2364, 0.0
    %vm2381 = vcmp.gt.f32.partialorder %v2365, 0.0
    %vm2382 = vcmp.gt.f32.partialorder %v2366, 0.0
    %vm2383 = vcmp.gt.f32.partialorder %v2367, 0.0
    %vm2384 = vcmp.gt.f32.partialorder %v2368, 0.0
    %vm2385 = vcmp.gt.f32.partialorder %v2369, 0.0
    %vm2386 = vcmp.gt.f32.partialorder %v2370, 0.0
    %vm2387 = vcmp.gt.f32.partialorder %v2371, 0.0
    %vm2388 = vcmp.gt.f32.partialorder %v2372, 0.0
    %vm2389 = vcmp.gt.f32.partialorder %v2373, 0.0
    %vm2390 = vcmp.gt.f32.partialorder %v2374, 0.0
    %v2391 = vmul.f32 %v2359, 0.2
    %v2392 = vmul.f32 %v2360, 0.2
    %v2393 = vmul.f32 %v2361, 0.2
    %v2394 = vmul.f32 %v2362, 0.2
    %v2395 = vmul.f32 %v2363, 0.2
    %v2396 = vmul.f32 %v2364, 0.2
    %v2397 = vmul.f32 %v2365, 0.2
    %v2398 = vmul.f32 %v2366, 0.2
    %v2399 = vmul.f32 %v2367, 0.2
    %v2400 = vmul.f32 %v2368, 0.2
    %v2401 = vmul.f32 %v2369, 0.2
    %v2402 = vmul.f32 %v2370, 0.2
    %v2403 = vmul.f32 %v2371, 0.2
    %v2404 = vmul.f32 %v2372, 0.2
    %v2405 = vmul.f32 %v2373, 0.2
    %v2406 = vmul.f32 %v2374, 0.2
    %v2407 = vsel %vm2375, %v2359, %v2391
    %v2408 = vsel %vm2376, %v2360, %v2392
    %v2409 = vsel %vm2377, %v2361, %v2393
    %v2410 = vsel %vm2378, %v2362, %v2394
    %v2411 = vsel %vm2379, %v2363, %v2395
    %v2412 = vsel %vm2380, %v2364, %v2396
    %v2413 = vsel %vm2381, %v2365, %v2397
    %v2414 = vsel %vm2382, %v2366, %v2398
    %v2415 = vsel %vm2383, %v2367, %v2399
    %v2416 = vsel %vm2384, %v2368, %v2400
    %v2417 = vsel %vm2385, %v2369, %v2401
    %v2418 = vsel %vm2386, %v2370, %v2402
    %v2419 = vsel %vm2387, %v2371, %v2403
    %v2420 = vsel %vm2388, %v2372, %v2404
    %v2421 = vsel %vm2389, %v2373, %v2405
    %v2422 = vsel %vm2390, %v2374, %v2406
    %v2423 = vsel %vm503, %v2407, -1e+30
    %v2424 = vsel %vm504, %v2408, -1e+30
    %v2425 = vsel %vm505, %v2409, -1e+30
    %v2426 = vsel %vm506, %v2410, -1e+30
    %v2427 = vsel %vm507, %v2411, -1e+30
    %v2428 = vsel %vm508, %v2412, -1e+30
    %v2429 = vsel %vm509, %v2413, -1e+30
    %v2430 = vsel %vm510, %v2414, -1e+30
    %v2431 = vsel %vm511, %v2415, -1e+30
    %v2432 = vsel %vm512, %v2416, -1e+30
    %v2433 = vsel %vm513, %v2417, -1e+30
    %v2434 = vsel %vm514, %v2418, -1e+30
    %v2435 = vsel %vm515, %v2419, -1e+30
    %v2436 = vsel %vm516, %v2420, -1e+30
    %v2437 = vsel %vm517, %v2421, -1e+30
    %v2438 = vsel %vm518, %v2422, -1e+30
    %2439 = vmax.xlane.f32.xlu0 %v2423
    %v2440 = vpop.xlane.xlu0 %2439
    %2441 = vmax.xlane.f32.xlu0 %v2424
    %v2442 = vpop.xlane.xlu0 %2441
    %2443 = vmax.xlane.f32.xlu0 %v2425
    %v2444 = vpop.xlane.xlu0 %2443
    %2445 = vmax.xlane.f32.xlu0 %v2426
    %v2446 = vpop.xlane.xlu0 %2445
    %2447 = vmax.xlane.f32.xlu0 %v2427
    %v2448 = vpop.xlane.xlu0 %2447
    %2449 = vmax.xlane.f32.xlu0 %v2428
    %v2450 = vpop.xlane.xlu0 %2449
    %2451 = vmax.xlane.f32.xlu0 %v2429
    %v2452 = vpop.xlane.xlu0 %2451
    %2453 = vmax.xlane.f32.xlu0 %v2430
    %v2454 = vpop.xlane.xlu0 %2453
    %2455 = vmax.xlane.f32.xlu0 %v2431
    %v2456 = vpop.xlane.xlu0 %2455
    %2457 = vmax.xlane.f32.xlu0 %v2432
    %v2458 = vpop.xlane.xlu0 %2457
    %2459 = vmax.xlane.f32.xlu0 %v2433
    %v2460 = vpop.xlane.xlu0 %2459
    %2461 = vmax.xlane.f32.xlu0 %v2434
    %v2462 = vpop.xlane.xlu0 %2461
    %2463 = vmax.xlane.f32.xlu0 %v2435
    %v2464 = vpop.xlane.xlu0 %2463
    %2465 = vmax.xlane.f32.xlu0 %v2436
    %v2466 = vpop.xlane.xlu0 %2465
    %2467 = vmax.xlane.f32.xlu0 %v2437
    %v2468 = vpop.xlane.xlu0 %2467
    %2469 = vmax.xlane.f32.xlu0 %v2438
    %v2470 = vpop.xlane.xlu0 %2469
    %v2471 = vsub.f32 %v2423, %v2440
    %v2472 = vsub.f32 %v2424, %v2442
    %v2473 = vsub.f32 %v2425, %v2444
    %v2474 = vsub.f32 %v2426, %v2446
    %v2475 = vsub.f32 %v2427, %v2448
    %v2476 = vsub.f32 %v2428, %v2450
    %v2477 = vsub.f32 %v2429, %v2452
    %v2478 = vsub.f32 %v2430, %v2454
    %v2479 = vsub.f32 %v2431, %v2456
    %v2480 = vsub.f32 %v2432, %v2458
    %v2481 = vsub.f32 %v2433, %v2460
    %v2482 = vsub.f32 %v2434, %v2462
    %v2483 = vsub.f32 %v2435, %v2464
    %v2484 = vsub.f32 %v2436, %v2466
    %v2485 = vsub.f32 %v2437, %v2468
    %v2486 = vsub.f32 %v2438, %v2470
    %v2487 = vmul.f32 %v2471, 1.442695
    %v2488 = vpow.pop %v2487
    %v2489 = vmul.f32 %v2472, 1.442695
    %v2490 = vpow.pop %v2489
    %v2491 = vmul.f32 %v2473, 1.442695
    %v2492 = vpow.pop %v2491
    %v2493 = vmul.f32 %v2474, 1.442695
    %v2494 = vpow.pop %v2493
    %v2495 = vmul.f32 %v2475, 1.442695
    %v2496 = vpow.pop %v2495
    %v2497 = vmul.f32 %v2476, 1.442695
    %v2498 = vpow.pop %v2497
    %v2499 = vmul.f32 %v2477, 1.442695
    %v2500 = vpow.pop %v2499
    %v2501 = vmul.f32 %v2478, 1.442695
    %v2502 = vpow.pop %v2501
    %v2503 = vmul.f32 %v2479, 1.442695
    %v2504 = vpow.pop %v2503
    %v2505 = vmul.f32 %v2480, 1.442695
    %v2506 = vpow.pop %v2505
    %v2507 = vmul.f32 %v2481, 1.442695
    %v2508 = vpow.pop %v2507
    %v2509 = vmul.f32 %v2482, 1.442695
    %v2510 = vpow.pop %v2509
    %v2511 = vmul.f32 %v2483, 1.442695
    %v2512 = vpow.pop %v2511
    %v2513 = vmul.f32 %v2484, 1.442695
    %v2514 = vpow.pop %v2513
    %v2515 = vmul.f32 %v2485, 1.442695
    %v2516 = vpow.pop %v2515
    %v2517 = vmul.f32 %v2486, 1.442695
    %v2518 = vpow.pop %v2517
    %v2519 = vsel %vm503, %v2488, 0.0
    %v2520 = vsel %vm504, %v2490, 0.0
    %v2521 = vsel %vm505, %v2492, 0.0
    %v2522 = vsel %vm506, %v2494, 0.0
    %v2523 = vsel %vm507, %v2496, 0.0
    %v2524 = vsel %vm508, %v2498, 0.0
    %v2525 = vsel %vm509, %v2500, 0.0
    %v2526 = vsel %vm510, %v2502, 0.0
    %v2527 = vsel %vm511, %v2504, 0.0
    %v2528 = vsel %vm512, %v2506, 0.0
    %v2529 = vsel %vm513, %v2508, 0.0
    %v2530 = vsel %vm514, %v2510, 0.0
    %v2531 = vsel %vm515, %v2512, 0.0
    %v2532 = vsel %vm516, %v2514, 0.0
    %v2533 = vsel %vm517, %v2516, 0.0
    %v2534 = vsel %vm518, %v2518, 0.0
    %2535 = vadd.xlane.f32.xlu0 %v2519
    %v2536 = vpop.xlane.xlu0 %2535
    %2537 = vadd.xlane.f32.xlu0 %v2520
    %v2538 = vpop.xlane.xlu0 %2537
    %2539 = vadd.xlane.f32.xlu0 %v2521
    %v2540 = vpop.xlane.xlu0 %2539
    %2541 = vadd.xlane.f32.xlu0 %v2522
    %v2542 = vpop.xlane.xlu0 %2541
    %2543 = vadd.xlane.f32.xlu0 %v2523
    %v2544 = vpop.xlane.xlu0 %2543
    %2545 = vadd.xlane.f32.xlu0 %v2524
    %v2546 = vpop.xlane.xlu0 %2545
    %2547 = vadd.xlane.f32.xlu0 %v2525
    %v2548 = vpop.xlane.xlu0 %2547
    %2549 = vadd.xlane.f32.xlu0 %v2526
    %v2550 = vpop.xlane.xlu0 %2549
    %2551 = vadd.xlane.f32.xlu0 %v2527
    %v2552 = vpop.xlane.xlu0 %2551
    %2553 = vadd.xlane.f32.xlu0 %v2528
    %v2554 = vpop.xlane.xlu0 %2553
    %2555 = vadd.xlane.f32.xlu0 %v2529
    %v2556 = vpop.xlane.xlu0 %2555
    %2557 = vadd.xlane.f32.xlu0 %v2530
    %v2558 = vpop.xlane.xlu0 %2557
    %2559 = vadd.xlane.f32.xlu0 %v2531
    %v2560 = vpop.xlane.xlu0 %2559
    %2561 = vadd.xlane.f32.xlu0 %v2532
    %v2562 = vpop.xlane.xlu0 %2561
    %2563 = vadd.xlane.f32.xlu0 %v2533
    %v2564 = vpop.xlane.xlu0 %2563
    %2565 = vadd.xlane.f32.xlu0 %v2534
    %v2566 = vpop.xlane.xlu0 %2565
    %v2567 = vmax.f32 %v2536, 1e-30
    %v2568 = vmax.f32 %v2538, 1e-30
    %v2569 = vmax.f32 %v2540, 1e-30
    %v2570 = vmax.f32 %v2542, 1e-30
    %v2571 = vmax.f32 %v2544, 1e-30
    %v2572 = vmax.f32 %v2546, 1e-30
    %v2573 = vmax.f32 %v2548, 1e-30
    %v2574 = vmax.f32 %v2550, 1e-30
    %v2575 = vmax.f32 %v2552, 1e-30
    %v2576 = vmax.f32 %v2554, 1e-30
    %v2577 = vmax.f32 %v2556, 1e-30
    %v2578 = vmax.f32 %v2558, 1e-30
    %v2579 = vmax.f32 %v2560, 1e-30
    %v2580 = vmax.f32 %v2562, 1e-30
    %v2581 = vmax.f32 %v2564, 1e-30
    %v2582 = vmax.f32 %v2566, 1e-30
    %v2583 = vrcp.pop %v2567
    %v2584 = vrcp.pop %v2568
    %v2585 = vrcp.pop %v2569
    %v2586 = vrcp.pop %v2570
    %v2587 = vrcp.pop %v2571
    %v2588 = vrcp.pop %v2572
    %v2589 = vrcp.pop %v2573
    %v2590 = vrcp.pop %v2574
    %v2591 = vrcp.pop %v2575
    %v2592 = vrcp.pop %v2576
    %v2593 = vrcp.pop %v2577
    %v2594 = vrcp.pop %v2578
    %v2595 = vrcp.pop %v2579
    %v2596 = vrcp.pop %v2580
    %v2597 = vrcp.pop %v2581
    %v2598 = vrcp.pop %v2582
    %v2599 = vmul.f32 %v2519, %v2583
    %v2600 = vmul.f32 %v2520, %v2584
    %v2601 = vmul.f32 %v2521, %v2585
    %v2602 = vmul.f32 %v2522, %v2586
    %v2603 = vmul.f32 %v2523, %v2587
    %v2604 = vmul.f32 %v2524, %v2588
    %v2605 = vmul.f32 %v2525, %v2589
    %v2606 = vmul.f32 %v2526, %v2590
    %v2607 = vmul.f32 %v2527, %v2591
    %v2608 = vmul.f32 %v2528, %v2592
    %v2609 = vmul.f32 %v2529, %v2593
    %v2610 = vmul.f32 %v2530, %v2594
    %v2611 = vmul.f32 %v2531, %v2595
    %v2612 = vmul.f32 %v2532, %v2596
    %v2613 = vmul.f32 %v2533, %v2597
    %v2614 = vmul.f32 %v2534, %v2598
    %v2615 = vpack.c.bf16 %v2600, %v2599
    %v2616 = vpack.c.bf16 %v2602, %v2601
    %v2617 = vpack.c.bf16 %v2604, %v2603
    %v2618 = vpack.c.bf16 %v2606, %v2605
    %v2619 = vpack.c.bf16 %v2608, %v2607
    %v2620 = vpack.c.bf16 %v2610, %v2609
    %v2621 = vpack.c.bf16 %v2612, %v2611
    %v2622 = vpack.c.bf16 %v2614, %v2613
    %v2623 = vpack.c.bf16 %v2136, %v2133
    %v2624 = vpack.c.bf16 %v2144, %v2141
    %v2625 = vpack.c.bf16 %v2152, %v2149
    %v2626 = vpack.c.bf16 %v2160, %v2157
    %v2627 = vpack.c.bf16 %v2168, %v2165
    %v2628 = vpack.c.bf16 %v2176, %v2173
    %v2629 = vpack.c.bf16 %v2184, %v2181
    %v2630 = vpack.c.bf16 %v2192, %v2189
    %v2631 = vlaneseq
    %v2632 = vshrl.u32 %v2631, 7
    %v2633 = vsub.s32 6, %v2632
    %v2634 = vrot.slane %v95, %v2633
    %2635 = vmatprep.subr.bf16.mxu0 0
    %2636 = vmatpush1.bf16.msra.mxu0 %v2623
    %2637 = vmatprep.subr.bf16.mxu0 0
    %2638 = vmatpush1.bf16.msra.mxu0 %v2624
    %2639 = vmatprep.subr.bf16.mxu0 0
    %2640 = vmatpush1.bf16.msra.mxu0 %v2625
    %2641 = vmatprep.subr.bf16.mxu0 0
    %2642 = vmatpush1.bf16.msra.mxu0 %v2626
    %2643 = vmatprep.subr.bf16.mxu0 0
    %2644 = vmatpush1.bf16.msra.mxu0 %v2627
    %2645 = vmatprep.subr.bf16.mxu0 0
    %2646 = vmatpush1.bf16.msra.mxu0 %v2628
    %2647 = vmatprep.subr.bf16.mxu0 0
    %2648 = vmatpush1.bf16.msra.mxu0 %v2629
    %2649 = vmatprep.subr.bf16.mxu0 0
    %2650 = vmatpush1.bf16.msra.mxu0 %v2630
    %2651 = vmatprep.subr.bf16.mxu0 0
    %2652 = vmatpush1.bf16.msra.mxu0 0
    %2653 = vmatprep.subr.bf16.mxu0 0
    %2654 = vmatpush1.bf16.msra.mxu0 0
    %2655 = vmatprep.subr.bf16.mxu0 0
    %2656 = vmatpush1.bf16.msra.mxu0 0
    %2657 = vmatprep.subr.bf16.mxu0 0
    %2658 = vmatpush1.bf16.msra.mxu0 0
    %2659 = vmatprep.subr.bf16.mxu0 0
    %2660 = vmatpush1.bf16.msra.mxu0 0
    %2661 = vmatprep.subr.bf16.mxu0 0
    %2662 = vmatpush1.bf16.msra.mxu0 0
    %2663 = vmatprep.subr.bf16.mxu0 0
    %2664 = vmatpush1.bf16.msra.mxu0 0
    %2665 = vmatprep.subr.bf16.mxu0 0
    %2666 = vmatpush1.bf16.msra.mxu0 0
    %2667 = vmatprep.mubr.bf16.mxu0 0
    %2668 = vmatmul.mubr.bf16.gmra.mrb[0].mxu0 %v2615
    %v2669 = vpop.f32.mrb[0].mxu0
    %v2670 = vadd.f32 %v2634, %v2669
    %v2671 = vpop.f32.mrb[0].mxu0
    %v2672 = vpop.f32.mrb[0].mxu0
    %v2673 = vadd.f32 %v2634, %v2672
    %v2674 = vpop.f32.mrb[0].mxu0
    %2675 = vmatprep.mubr.bf16.mxu0 0
    %2676 = vmatmul.mubr.bf16.gmra.mrb[0].mxu0 %v2616
    %v2677 = vpop.f32.mrb[0].mxu0
    %v2678 = vadd.f32 %v2634, %v2677
    %v2679 = vpop.f32.mrb[0].mxu0
    %v2680 = vpop.f32.mrb[0].mxu0
    %v2681 = vadd.f32 %v2634, %v2680
    %v2682 = vpop.f32.mrb[0].mxu0
    %2683 = vmatprep.mubr.bf16.mxu0 0
    %2684 = vmatmul.mubr.bf16.gmra.mrb[0].mxu0 %v2617
    %v2685 = vpop.f32.mrb[0].mxu0
    %v2686 = vadd.f32 %v2634, %v2685
    %v2687 = vpop.f32.mrb[0].mxu0
    %v2688 = vpop.f32.mrb[0].mxu0
    %v2689 = vadd.f32 %v2634, %v2688
    %v2690 = vpop.f32.mrb[0].mxu0
    %2691 = vmatprep.mubr.bf16.mxu0 0
    %2692 = vmatmul.mubr.bf16.gmra.mrb[0].mxu0 %v2618
    %v2693 = vpop.f32.mrb[0].mxu0
    %v2694 = vadd.f32 %v2634, %v2693
    %v2695 = vpop.f32.mrb[0].mxu0
    %v2696 = vpop.f32.mrb[0].mxu0
    %v2697 = vadd.f32 %v2634, %v2696
    %v2698 = vpop.f32.mrb[0].mxu0
    %2699 = vmatprep.mubr.bf16.mxu0 0
    %2700 = vmatmul.mubr.bf16.gmra.mrb[0].mxu0 %v2619
    %v2701 = vpop.f32.mrb[0].mxu0
    %v2702 = vadd.f32 %v2634, %v2701
    %v2703 = vpop.f32.mrb[0].mxu0
    %v2704 = vpop.f32.mrb[0].mxu0
    %v2705 = vadd.f32 %v2634, %v2704
    %v2706 = vpop.f32.mrb[0].mxu0
    %2707 = vmatprep.mubr.bf16.mxu0 0
    %2708 = vmatmul.mubr.bf16.gmra.mrb[0].mxu0 %v2620
    %v2709 = vpop.f32.mrb[0].mxu0
    %v2710 = vadd.f32 %v2634, %v2709
    %v2711 = vpop.f32.mrb[0].mxu0
    %v2712 = vpop.f32.mrb[0].mxu0
    %v2713 = vadd.f32 %v2634, %v2712
    %v2714 = vpop.f32.mrb[0].mxu0
    %2715 = vmatprep.mubr.bf16.mxu0 0
    %2716 = vmatmul.mubr.bf16.gmra.mrb[0].mxu0 %v2621
    %v2717 = vpop.f32.mrb[0].mxu0
    %v2718 = vadd.f32 %v2634, %v2717
    %v2719 = vpop.f32.mrb[0].mxu0
    %v2720 = vpop.f32.mrb[0].mxu0
    %v2721 = vadd.f32 %v2634, %v2720
    %v2722 = vpop.f32.mrb[0].mxu0
    %2723 = vmatprep.mubr.bf16.mxu0 0
    %2724 = vmatmul.mubr.bf16.gmra.mrb[0].mxu0 %v2622
    %v2725 = vpop.f32.mrb[0].mxu0
    %v2726 = vadd.f32 %v2634, %v2725
    %v2727 = vpop.f32.mrb[0].mxu0
    %v2728 = vpop.f32.mrb[0].mxu0
    %v2729 = vadd.f32 %v2634, %v2728
    %v2730 = vpop.f32.mrb[0].mxu0
    %2731 = vdwg.mxu0
    %v2732 = vmul.f32 %v2670, %v831
    %v2733 = vmul.f32 %v2673, %v836
    %v2734 = vmul.f32 %v2678, %v841
    %v2735 = vmul.f32 %v2681, %v846
    %v2736 = vmul.f32 %v2686, %v851
    %v2737 = vmul.f32 %v2689, %v856
    %v2738 = vmul.f32 %v2694, %v861
    %v2739 = vmul.f32 %v2697, %v866
    %v2740 = vmul.f32 %v2702, %v871
    %v2741 = vmul.f32 %v2705, %v876
    %v2742 = vmul.f32 %v2710, %v881
    %v2743 = vmul.f32 %v2713, %v886
    %v2744 = vmul.f32 %v2718, %v891
    %v2745 = vmul.f32 %v2721, %v896
    %v2746 = vmul.f32 %v2726, %v901
    %v2747 = vmul.f32 %v2729, %v906
    %v2748 = vsel %vm117, %v2732, 0.0
    %v2749 = vsel %vm117, %v2733, 0.0
    %v2750 = vadd.f32 %v2748, %v2749
    %v2751 = vsel %vm117, %v2734, 0.0
    %v2752 = vadd.f32 %v2750, %v2751
    %v2753 = vsel %vm117, %v2735, 0.0
    %v2754 = vadd.f32 %v2752, %v2753
    %v2755 = vsel %vm117, %v2736, 0.0
    %v2756 = vadd.f32 %v2754, %v2755
    %v2757 = vsel %vm117, %v2737, 0.0
    %v2758 = vadd.f32 %v2756, %v2757
    %v2759 = vsel %vm117, %v2738, 0.0
    %v2760 = vadd.f32 %v2758, %v2759
    %v2761 = vsel %vm117, %v2739, 0.0
    %v2762 = vadd.f32 %v2760, %v2761
    %v2763 = vsel %vm117, %v2740, 0.0
    %v2764 = vadd.f32 %v2762, %v2763
    %v2765 = vsel %vm117, %v2741, 0.0
    %v2766 = vadd.f32 %v2764, %v2765
    %v2767 = vsel %vm117, %v2742, 0.0
    %v2768 = vadd.f32 %v2766, %v2767
    %v2769 = vsel %vm117, %v2743, 0.0
    %v2770 = vadd.f32 %v2768, %v2769
    %v2771 = vsel %vm117, %v2744, 0.0
    %v2772 = vadd.f32 %v2770, %v2771
    %v2773 = vsel %vm117, %v2745, 0.0
    %v2774 = vadd.f32 %v2772, %v2773
    %v2775 = vsel %vm117, %v2746, 0.0
    %v2776 = vadd.f32 %v2774, %v2775
    %v2777 = vsel %vm117, %v2747, 0.0
    %v2778 = vadd.f32 %v2776, %v2777
    %v2779 = vrot.slane %v2778, 4
    %v2780 = vadd.f32 %v2778, %v2779
    %v2781 = vrot.slane %v2780, 2
    %v2782 = vadd.f32 %v2780, %v2781
    %v2783 = vrot.slane %v2782, 1
    %v2784 = vadd.f32 %v2782, %v2783
    %v2785 = vmul.f32 %v2784, 0.0625
    %v2786 = vsub.f32 %v2670, %v2785
    %v2787 = vsub.f32 %v2673, %v2785
    %v2788 = vsub.f32 %v2678, %v2785
    %v2789 = vsub.f32 %v2681, %v2785
    %v2790 = vsub.f32 %v2686, %v2785
    %v2791 = vsub.f32 %v2689, %v2785
    %v2792 = vsub.f32 %v2694, %v2785
    %v2793 = vsub.f32 %v2697, %v2785
    %v2794 = vsub.f32 %v2702, %v2785
    %v2795 = vsub.f32 %v2705, %v2785
    %v2796 = vsub.f32 %v2710, %v2785
    %v2797 = vsub.f32 %v2713, %v2785
    %v2798 = vsub.f32 %v2718, %v2785
    %v2799 = vsub.f32 %v2721, %v2785
    %v2800 = vsub.f32 %v2726, %v2785
    %v2801 = vsub.f32 %v2729, %v2785
    %v2802 = vmul.f32 %v2786, %v831
    %v2803 = vmul.f32 %v2787, %v836
    %v2804 = vmul.f32 %v2788, %v841
    %v2805 = vmul.f32 %v2789, %v846
    %v2806 = vmul.f32 %v2790, %v851
    %v2807 = vmul.f32 %v2791, %v856
    %v2808 = vmul.f32 %v2792, %v861
    %v2809 = vmul.f32 %v2793, %v866
    %v2810 = vmul.f32 %v2794, %v871
    %v2811 = vmul.f32 %v2795, %v876
    %v2812 = vmul.f32 %v2796, %v881
    %v2813 = vmul.f32 %v2797, %v886
    %v2814 = vmul.f32 %v2798, %v891
    %v2815 = vmul.f32 %v2799, %v896
    %v2816 = vmul.f32 %v2800, %v901
    %v2817 = vmul.f32 %v2801, %v906
    %v2818 = vmul.f32 %v2802, %v2802
    %v2819 = vmul.f32 %v2803, %v2803
    %v2820 = vmul.f32 %v2804, %v2804
    %v2821 = vmul.f32 %v2805, %v2805
    %v2822 = vmul.f32 %v2806, %v2806
    %v2823 = vmul.f32 %v2807, %v2807
    %v2824 = vmul.f32 %v2808, %v2808
    %v2825 = vmul.f32 %v2809, %v2809
    %v2826 = vmul.f32 %v2810, %v2810
    %v2827 = vmul.f32 %v2811, %v2811
    %v2828 = vmul.f32 %v2812, %v2812
    %v2829 = vmul.f32 %v2813, %v2813
    %v2830 = vmul.f32 %v2814, %v2814
    %v2831 = vmul.f32 %v2815, %v2815
    %v2832 = vmul.f32 %v2816, %v2816
    %v2833 = vmul.f32 %v2817, %v2817
    %v2834 = vsel %vm117, %v2818, 0.0
    %v2835 = vsel %vm117, %v2819, 0.0
    %v2836 = vadd.f32 %v2834, %v2835
    %v2837 = vsel %vm117, %v2820, 0.0
    %v2838 = vadd.f32 %v2836, %v2837
    %v2839 = vsel %vm117, %v2821, 0.0
    %v2840 = vadd.f32 %v2838, %v2839
    %v2841 = vsel %vm117, %v2822, 0.0
    %v2842 = vadd.f32 %v2840, %v2841
    %v2843 = vsel %vm117, %v2823, 0.0
    %v2844 = vadd.f32 %v2842, %v2843
    %v2845 = vsel %vm117, %v2824, 0.0
    %v2846 = vadd.f32 %v2844, %v2845
    %v2847 = vsel %vm117, %v2825, 0.0
    %v2848 = vadd.f32 %v2846, %v2847
    %v2849 = vsel %vm117, %v2826, 0.0
    %v2850 = vadd.f32 %v2848, %v2849
    %v2851 = vsel %vm117, %v2827, 0.0
    %v2852 = vadd.f32 %v2850, %v2851
    %v2853 = vsel %vm117, %v2828, 0.0
    %v2854 = vadd.f32 %v2852, %v2853
    %v2855 = vsel %vm117, %v2829, 0.0
    %v2856 = vadd.f32 %v2854, %v2855
    %v2857 = vsel %vm117, %v2830, 0.0
    %v2858 = vadd.f32 %v2856, %v2857
    %v2859 = vsel %vm117, %v2831, 0.0
    %v2860 = vadd.f32 %v2858, %v2859
    %v2861 = vsel %vm117, %v2832, 0.0
    %v2862 = vadd.f32 %v2860, %v2861
    %v2863 = vsel %vm117, %v2833, 0.0
    %v2864 = vadd.f32 %v2862, %v2863
    %v2865 = vrot.slane %v2864, 4
    %v2866 = vadd.f32 %v2864, %v2865
    %v2867 = vrot.slane %v2866, 2
    %v2868 = vadd.f32 %v2866, %v2867
    %v2869 = vrot.slane %v2868, 1
    %v2870 = vadd.f32 %v2868, %v2869
    %v2871 = vmul.f32 %v2870, 0.0625
    %v2872 = vadd.f32 %v2871, 1e-05
    %v2873 = vrsqrt.pop %v2872
    %v2874 = vmul.f32 %v2786, %v2873
    %v2875 = vmul.f32 %v2787, %v2873
    %v2876 = vmul.f32 %v2788, %v2873
    %v2877 = vmul.f32 %v2789, %v2873
    %v2878 = vmul.f32 %v2790, %v2873
    %v2879 = vmul.f32 %v2791, %v2873
    %v2880 = vmul.f32 %v2792, %v2873
    %v2881 = vmul.f32 %v2793, %v2873
    %v2882 = vmul.f32 %v2794, %v2873
    %v2883 = vmul.f32 %v2795, %v2873
    %v2884 = vmul.f32 %v2796, %v2873
    %v2885 = vmul.f32 %v2797, %v2873
    %v2886 = vmul.f32 %v2798, %v2873
    %v2887 = vmul.f32 %v2799, %v2873
    %v2888 = vmul.f32 %v2800, %v2873
    %v2889 = vmul.f32 %v2801, %v2873
    %v2890 = vlaneseq
    %v2891 = vshrl.u32 %v2890, 7
    %v2892 = vsub.s32 7, %v2891
    %v2893 = vrot.slane %v95, %v2892
    %v2894 = vmul.f32 %v2874, %v2893
    %v2895 = vmul.f32 %v2875, %v2893
    %v2896 = vmul.f32 %v2876, %v2893
    %v2897 = vmul.f32 %v2877, %v2893
    %v2898 = vmul.f32 %v2878, %v2893
    %v2899 = vmul.f32 %v2879, %v2893
    %v2900 = vmul.f32 %v2880, %v2893
    %v2901 = vmul.f32 %v2881, %v2893
    %v2902 = vmul.f32 %v2882, %v2893
    %v2903 = vmul.f32 %v2883, %v2893
    %v2904 = vmul.f32 %v2884, %v2893
    %v2905 = vmul.f32 %v2885, %v2893
    %v2906 = vmul.f32 %v2886, %v2893
    %v2907 = vmul.f32 %v2887, %v2893
    %v2908 = vmul.f32 %v2888, %v2893
    %v2909 = vmul.f32 %v2889, %v2893
    %v2910 = vlaneseq
    %v2911 = vshrl.u32 %v2910, 7
    %v2912 = vsub.s32 0, %v2911
    %v2913 = vrot.slane %v96, %v2912
    %v2914 = vadd.f32 %v2894, %v2913
    %v2915 = vadd.f32 %v2895, %v2913
    %v2916 = vadd.f32 %v2896, %v2913
    %v2917 = vadd.f32 %v2897, %v2913
    %v2918 = vadd.f32 %v2898, %v2913
    %v2919 = vadd.f32 %v2899, %v2913
    %v2920 = vadd.f32 %v2900, %v2913
    %v2921 = vadd.f32 %v2901, %v2913
    %v2922 = vadd.f32 %v2902, %v2913
    %v2923 = vadd.f32 %v2903, %v2913
    %v2924 = vadd.f32 %v2904, %v2913
    %v2925 = vadd.f32 %v2905, %v2913
    %v2926 = vadd.f32 %v2906, %v2913
    %v2927 = vadd.f32 %v2907, %v2913
    %v2928 = vadd.f32 %v2908, %v2913
    %v2929 = vadd.f32 %v2909, %v2913
    %v2930 = vmax.f32 %v2914, 0.0
    %v2931 = vmax.f32 %v2915, 0.0
    %v2932 = vmax.f32 %v2916, 0.0
    %v2933 = vmax.f32 %v2917, 0.0
    %v2934 = vmax.f32 %v2918, 0.0
    %v2935 = vmax.f32 %v2919, 0.0
    %v2936 = vmax.f32 %v2920, 0.0
    %v2937 = vmax.f32 %v2921, 0.0
    %v2938 = vmax.f32 %v2922, 0.0
    %v2939 = vmax.f32 %v2923, 0.0
    %v2940 = vmax.f32 %v2924, 0.0
    %v2941 = vmax.f32 %v2925, 0.0
    %v2942 = vmax.f32 %v2926, 0.0
    %v2943 = vmax.f32 %v2927, 0.0
    %v2944 = vmax.f32 %v2928, 0.0
    %v2945 = vmax.f32 %v2929, 0.0
    %v2946 = vmul.f32 %v2930, %v831
    %v2947 = vmul.f32 %v2931, %v836
    %v2948 = vmul.f32 %v2932, %v841
    %v2949 = vmul.f32 %v2933, %v846
    %v2950 = vmul.f32 %v2934, %v851
    %v2951 = vmul.f32 %v2935, %v856
    %v2952 = vmul.f32 %v2936, %v861
    %v2953 = vmul.f32 %v2937, %v866
    %v2954 = vmul.f32 %v2938, %v871
    %v2955 = vmul.f32 %v2939, %v876
    %v2956 = vmul.f32 %v2940, %v881
    %v2957 = vmul.f32 %v2941, %v886
    %v2958 = vmul.f32 %v2942, %v891
    %v2959 = vmul.f32 %v2943, %v896
    %v2960 = vmul.f32 %v2944, %v901
    %v2961 = vmul.f32 %v2945, %v906
    %v2962 = vsel %vm117, %v2946, 0.0
    %v2963 = vsel %vm117, %v2947, 0.0
    %v2964 = vsel %vm117, %v2948, 0.0
    %v2965 = vsel %vm117, %v2949, 0.0
    %v2966 = vsel %vm117, %v2950, 0.0
    %v2967 = vsel %vm117, %v2951, 0.0
    %v2968 = vsel %vm117, %v2952, 0.0
    %v2969 = vsel %vm117, %v2953, 0.0
    %v2970 = vsel %vm117, %v2954, 0.0
    %v2971 = vsel %vm117, %v2955, 0.0
    %v2972 = vsel %vm117, %v2956, 0.0
    %v2973 = vsel %vm117, %v2957, 0.0
    %v2974 = vsel %vm117, %v2958, 0.0
    %v2975 = vsel %vm117, %v2959, 0.0
    %v2976 = vsel %vm117, %v2960, 0.0
    %v2977 = vsel %vm117, %v2961, 0.0
    %2978 = vst [vmem:[#allocation4] sm:$0xff] %v2962
    %2979 = vst [vmem:[#allocation4 + $0x8] sm:$0xff] %v2963
    %2980 = vst [vmem:[#allocation4 + $0x10] sm:$0xff] %v2964
    %2981 = vst [vmem:[#allocation4 + $0x18] sm:$0xff] %v2965
    %2982 = vst [vmem:[#allocation4 + $0x20] sm:$0xff] %v2966
    %2983 = vst [vmem:[#allocation4 + $0x28] sm:$0xff] %v2967
    %2984 = vst [vmem:[#allocation4 + $0x30] sm:$0xff] %v2968
    %2985 = vst [vmem:[#allocation4 + $0x38] sm:$0xff] %v2969
    %2986 = vst [vmem:[#allocation4 + $0x40] sm:$0xff] %v2970
    %2987 = vst [vmem:[#allocation4 + $0x48] sm:$0xff] %v2971
    %2988 = vst [vmem:[#allocation4 + $0x50] sm:$0xff] %v2972
    %2989 = vst [vmem:[#allocation4 + $0x58] sm:$0xff] %v2973
    %2990 = vst [vmem:[#allocation4 + $0x60] sm:$0xff] %v2974
    %2991 = vst [vmem:[#allocation4 + $0x68] sm:$0xff] %v2975
    %2992 = vst [vmem:[#allocation4 + $0x70] sm:$0xff] %v2976
    %2993 = vst [vmem:[#allocation4 + $0x78] sm:$0xff] %v2977
    %v2994 = vrot.slane %v2962, 4
    %v2995 = vadd.f32 %v2962, %v2994
    %v2996 = vrot.slane %v2995, 2
    %v2997 = vadd.f32 %v2995, %v2996
    %v2998 = vrot.slane %v2997, 1
    %v2999 = vadd.f32 %v2997, %v2998
    %v3000 = vrot.slane %v2963, 4
    %v3001 = vadd.f32 %v2963, %v3000
    %v3002 = vrot.slane %v3001, 2
    %v3003 = vadd.f32 %v3001, %v3002
    %v3004 = vrot.slane %v3003, 1
    %v3005 = vadd.f32 %v3003, %v3004
    %v3006 = vrot.slane %v2964, 4
    %v3007 = vadd.f32 %v2964, %v3006
    %v3008 = vrot.slane %v3007, 2
    %v3009 = vadd.f32 %v3007, %v3008
    %v3010 = vrot.slane %v3009, 1
    %v3011 = vadd.f32 %v3009, %v3010
    %v3012 = vrot.slane %v2965, 4
    %v3013 = vadd.f32 %v2965, %v3012
    %v3014 = vrot.slane %v3013, 2
    %v3015 = vadd.f32 %v3013, %v3014
    %v3016 = vrot.slane %v3015, 1
    %v3017 = vadd.f32 %v3015, %v3016
    %v3018 = vrot.slane %v2966, 4
    %v3019 = vadd.f32 %v2966, %v3018
    %v3020 = vrot.slane %v3019, 2
    %v3021 = vadd.f32 %v3019, %v3020
    %v3022 = vrot.slane %v3021, 1
    %v3023 = vadd.f32 %v3021, %v3022
    %v3024 = vrot.slane %v2967, 4
    %v3025 = vadd.f32 %v2967, %v3024
    %v3026 = vrot.slane %v3025, 2
    %v3027 = vadd.f32 %v3025, %v3026
    %v3028 = vrot.slane %v3027, 1
    %v3029 = vadd.f32 %v3027, %v3028
    %v3030 = vrot.slane %v2968, 4
    %v3031 = vadd.f32 %v2968, %v3030
    %v3032 = vrot.slane %v3031, 2
    %v3033 = vadd.f32 %v3031, %v3032
    %v3034 = vrot.slane %v3033, 1
    %v3035 = vadd.f32 %v3033, %v3034
    %v3036 = vrot.slane %v2969, 4
    %v3037 = vadd.f32 %v2969, %v3036
    %v3038 = vrot.slane %v3037, 2
    %v3039 = vadd.f32 %v3037, %v3038
    %v3040 = vrot.slane %v3039, 1
    %v3041 = vadd.f32 %v3039, %v3040
    %v3042 = vrot.slane %v2970, 4
    %v3043 = vadd.f32 %v2970, %v3042
    %v3044 = vrot.slane %v3043, 2
    %v3045 = vadd.f32 %v3043, %v3044
    %v3046 = vrot.slane %v3045, 1
    %v3047 = vadd.f32 %v3045, %v3046
    %v3048 = vrot.slane %v2971, 4
    %v3049 = vadd.f32 %v2971, %v3048
    %v3050 = vrot.slane %v3049, 2
    %v3051 = vadd.f32 %v3049, %v3050
    %v3052 = vrot.slane %v3051, 1
    %v3053 = vadd.f32 %v3051, %v3052
    %v3054 = vrot.slane %v2972, 4
    %v3055 = vadd.f32 %v2972, %v3054
    %v3056 = vrot.slane %v3055, 2
    %v3057 = vadd.f32 %v3055, %v3056
    %v3058 = vrot.slane %v3057, 1
    %v3059 = vadd.f32 %v3057, %v3058
    %v3060 = vrot.slane %v2973, 4
    %v3061 = vadd.f32 %v2973, %v3060
    %v3062 = vrot.slane %v3061, 2
    %v3063 = vadd.f32 %v3061, %v3062
    %v3064 = vrot.slane %v3063, 1
    %v3065 = vadd.f32 %v3063, %v3064
    %v3066 = vrot.slane %v2974, 4
    %v3067 = vadd.f32 %v2974, %v3066
    %v3068 = vrot.slane %v3067, 2
    %v3069 = vadd.f32 %v3067, %v3068
    %v3070 = vrot.slane %v3069, 1
    %v3071 = vadd.f32 %v3069, %v3070
    %v3072 = vrot.slane %v2975, 4
    %v3073 = vadd.f32 %v2975, %v3072
    %v3074 = vrot.slane %v3073, 2
    %v3075 = vadd.f32 %v3073, %v3074
    %v3076 = vrot.slane %v3075, 1
    %v3077 = vadd.f32 %v3075, %v3076
    %v3078 = vrot.slane %v2976, 4
    %v3079 = vadd.f32 %v2976, %v3078
    %v3080 = vrot.slane %v3079, 2
    %v3081 = vadd.f32 %v3079, %v3080
    %v3082 = vrot.slane %v3081, 1
    %v3083 = vadd.f32 %v3081, %v3082
    %v3084 = vrot.slane %v2977, 4
    %v3085 = vadd.f32 %v2977, %v3084
    %v3086 = vrot.slane %v3085, 2
    %v3087 = vadd.f32 %v3085, %v3086
    %v3088 = vrot.slane %v3087, 1
    %v3089 = vadd.f32 %v3087, %v3088
    %vm3106 = vcmask 1041409
    %v3107 = vsel %vm3106, %v3005, %v2999
    %vm3108 = vcmask 1042434
    %v3109 = vsel %vm3108, %v3011, %v3107
    %vm3110 = vcmask 1043459
    %v3111 = vsel %vm3110, %v3017, %v3109
    %vm3112 = vcmask 1044484
    %v3113 = vsel %vm3112, %v3023, %v3111
    %vm3114 = vcmask 1045509
    %v3115 = vsel %vm3114, %v3029, %v3113
    %vm3116 = vcmask 1046534
    %v3117 = vsel %vm3116, %v3035, %v3115
    %vm3118 = vcmask 1047559
    %v3119 = vsel %vm3118, %v3041, %v3117
    %v3120 = vsel %vm3106, %v3053, %v3047
    %v3121 = vsel %vm3108, %v3059, %v3120
    %v3122 = vsel %vm3110, %v3065, %v3121
    %v3123 = vsel %vm3112, %v3071, %v3122
    %v3124 = vsel %vm3114, %v3077, %v3123
    %v3125 = vsel %vm3116, %v3083, %v3124
    %v3126 = vsel %vm3118, %v3089, %v3125
    %v3129 = vsel %vm117, %v3119, 0.0
    %v3130 = vsel %vm117, %v3126, 0.0
    %3131 = vst [vmem:[#allocation6] sm:$0xff] %v3129
    %3132 = vst [vmem:[#allocation6 + $0x8] sm:$0xff] %v3130
    %v3133 = vld [vmem:[%s5] sm:$0xf]
    %v3134 = vld [vmem:[%s5 + $0x4] sm:$0xf]
    %v3135 = vld [vmem:[%s5 + $0x8] sm:$0x7]
    %v3136 = vpack.c.bf16 %v2999, %v2999
    %v3137 = vpack.c.bf16 %v3005, %v3005
    %v3138 = vpack.c.bf16 %v3011, %v3011
    %v3139 = vpack.c.bf16 %v3017, %v3017
    %v3140 = vpack.c.bf16 %v3023, %v3023
    %v3141 = vpack.c.bf16 %v3029, %v3029
    %v3142 = vpack.c.bf16 %v3035, %v3035
    %v3143 = vpack.c.bf16 %v3041, %v3041
    %v3144 = vpack.c.bf16 %v3047, %v3047
    %v3145 = vpack.c.bf16 %v3053, %v3053
    %v3146 = vpack.c.bf16 %v3059, %v3059
    %v3147 = vpack.c.bf16 %v3065, %v3065
    %v3148 = vpack.c.bf16 %v3071, %v3071
    %v3149 = vpack.c.bf16 %v3077, %v3077
    %v3150 = vpack.c.bf16 %v3083, %v3083
    %v3151 = vpack.c.bf16 %v3089, %v3089
    %v3152 = vunpack.c.l.bf16 %v3135
    %v3153 = vlaneseq
    %v3154 = vshrl.u32 %v3153, 7
    %v3155 = vsub.s32 4, %v3154
    %v3156 = vrot.slane %v3152, %v3155
    %v3173 = vunpack.c.l.b16 %v3136
    %v3174 = vunpack.c.l.b16 %v3137
    %v3175 = vunpack.c.l.b16 %v3138
    %v3176 = vunpack.c.l.b16 %v3139
    %v3177 = vunpack.c.l.b16 %v3140
    %v3178 = vunpack.c.l.b16 %v3141
    %v3179 = vunpack.c.l.b16 %v3142
    %v3180 = vunpack.c.l.b16 %v3143
    %v3181 = vunpack.c.l.b16 %v3144
    %v3182 = vunpack.c.l.b16 %v3145
    %v3183 = vunpack.c.l.b16 %v3146
    %v3184 = vunpack.c.l.b16 %v3147
    %v3185 = vunpack.c.l.b16 %v3148
    %v3186 = vunpack.c.l.b16 %v3149
    %v3187 = vunpack.c.l.b16 %v3150
    %v3188 = vunpack.c.l.b16 %v3151
    %v3189 = vsel %vm3106, %v3174, %v3173
    %v3190 = vsel %vm3108, %v3175, %v3189
    %v3191 = vsel %vm3110, %v3176, %v3190
    %v3192 = vsel %vm3112, %v3177, %v3191
    %v3193 = vsel %vm3114, %v3178, %v3192
    %v3194 = vsel %vm3116, %v3179, %v3193
    %v3195 = vsel %vm3118, %v3180, %v3194
    %v3196 = vsel %vm3106, %v3182, %v3181
    %v3197 = vsel %vm3108, %v3183, %v3196
    %v3198 = vsel %vm3110, %v3184, %v3197
    %v3199 = vsel %vm3112, %v3185, %v3198
    %v3200 = vsel %vm3114, %v3186, %v3199
    %v3201 = vsel %vm3116, %v3187, %v3200
    %v3202 = vsel %vm3118, %v3188, %v3201
    %v3203 = vpack.c.b16 %v3202, %v3195
    %v3207 = vunpack.c.l.b16 %v3133
    %v3208 = vunpack.c.l.b16 %v3134
    %v3209 = vunpack.c.l.b16 %v3135
    %v3210 = vpack.c.b16 %v3208, %v3207
    %v3211 = vpack.c.b16 %v3209, %v3209
    %v3214 = vsel %vm117, %v3203, 0
    %v3217 = vsel %vm142, %v3211, 0
    %3219 = vmatprep.subr.bf16.mxu0 0
    %3220 = vmatpush1.bf16.msra.mxu0 %v3210
    %3221 = vmatprep.subr.bf16.mxu0 0
    %3222 = vmatpush1.bf16.msra.mxu0 %v3217
    %3223 = vmatprep.subr.bf16.mxu0 0
    %3224 = vmatpush1.bf16.msra.mxu0 0
    %3225 = vmatprep.subr.bf16.mxu0 0
    %3226 = vmatpush1.bf16.msra.mxu0 0
    %3227 = vmatprep.subr.bf16.mxu0 0
    %3228 = vmatpush1.bf16.msra.mxu0 0
    %3229 = vmatprep.subr.bf16.mxu0 0
    %3230 = vmatpush1.bf16.msra.mxu0 0
    %3231 = vmatprep.subr.bf16.mxu0 0
    %3232 = vmatpush1.bf16.msra.mxu0 0
    %3233 = vmatprep.subr.bf16.mxu0 0
    %3234 = vmatpush1.bf16.msra.mxu0 0
    %3235 = vmatprep.subr.bf16.mxu0 0
    %3236 = vmatpush1.bf16.msra.mxu0 0
    %3237 = vmatprep.subr.bf16.mxu0 0
    %3238 = vmatpush1.bf16.msra.mxu0 0
    %3239 = vmatprep.subr.bf16.mxu0 0
    %3240 = vmatpush1.bf16.msra.mxu0 0
    %3241 = vmatprep.subr.bf16.mxu0 0
    %3242 = vmatpush1.bf16.msra.mxu0 0
    %3243 = vmatprep.subr.bf16.mxu0 0
    %3244 = vmatpush1.bf16.msra.mxu0 0
    %3245 = vmatprep.subr.bf16.mxu0 0
    %3246 = vmatpush1.bf16.msra.mxu0 0
    %3247 = vmatprep.subr.bf16.mxu0 0
    %3248 = vmatpush1.bf16.msra.mxu0 0
    %3249 = vmatprep.subr.bf16.mxu0 0
    %3250 = vmatpush1.bf16.msra.mxu0 0
    %3251 = vmatprep.mubr.bf16.mxu0 0
    %3252 = vmatmul.mubr.bf16.gmra.mrb[0].mxu0 %v3214
    %v3253 = vpop.f32.mrb[0].mxu0
    %v3254 = vadd.f32 %v3156, %v3253
    %v3255 = vpop.f32.mrb[0].mxu0
    %v3256 = vpop.f32.mrb[0].mxu0
    %v3257 = vadd.f32 %v3156, %v3256
    %v3258 = vpop.f32.mrb[0].mxu0
    %3259 = vdwg.mxu0
    %3260 = vst [vmem:[#allocation2] sm:$0xff] %v3254
    %3261 = vst [vmem:[#allocation2 + $0x8] sm:$0xff] %v3257
    // Predicated region
    $region26: #{tpu_custom_call.1} parent=1 // pred_check
      _
    $region27: #{tpu_custom_call.1} parent=1 // pred_check_branch
      %3263 = sbr.rel (0) target = $region29
    $region28: #{tpu_custom_call.1} parent=1 // pred_region
      %s3265 = ssub.s32 256, 256
      %3266 = vsyncadd [#allocation3], %s3265
      %s3267 = sshll.u32 [#allocation2], 4
      %s3268 = int_to_ptr.vmem [resolvable:$true] %s3267
      %3273 = dma.vmem_to_hbm [thread:$0]  %s3268, 256, %s6, [#allocation3], 128, 128, 8
    $region29: #{tpu_custom_call.1} parent=1 // pred_fallthru
      _
    // Predicated region
    $region30: #{tpu_custom_call.1} parent=1 // pred_check
      _
    $region31: #{tpu_custom_call.1} parent=1 // pred_check_branch
      %3275 = sbr.rel (0) target = $region33
    $region32: #{tpu_custom_call.1} parent=1 // pred_region
      %s3277 = ssub.s32 2048, 2048
      %3278 = vsyncadd [#allocation5], %s3277
      %s3279 = sshll.u32 [#allocation4], 4
      %s3280 = int_to_ptr.vmem [resolvable:$true] %s3279
      %3285 = dma.vmem_to_hbm [thread:$0]  %s3280, 2048, %s7, [#allocation5], 128, 128, 8
    $region33: #{tpu_custom_call.1} parent=1 // pred_fallthru
      _
    // Predicated region
    $region34: #{tpu_custom_call.1} parent=1 // pred_check
      _
    $region35: #{tpu_custom_call.1} parent=1 // pred_check_branch
      %3287 = sbr.rel (0) target = $region37
    $region36: #{tpu_custom_call.1} parent=1 // pred_region
      %s3289 = ssub.s32 256, 256
      %3290 = vsyncadd [#allocation5], %s3289
      %s3291 = sshll.u32 [#allocation6], 4
      %s3292 = int_to_ptr.vmem [resolvable:$true] %s3291
      %3297 = dma.vmem_to_hbm [thread:$0]  %s3292, 256, %s8, [#allocation5], 128, 128, 8
    $region37: #{tpu_custom_call.1} parent=1 // pred_fallthru
      _
    // Predicated region
    $region38: #{tpu_custom_call.1} parent=1 // pred_check
      _
    $region39: #{tpu_custom_call.1} parent=1 // pred_check_branch
      %3299 = sbr.rel (0) target = $region41
    $region40: #{tpu_custom_call.1} parent=1 // pred_region
      %3300 = dma.done [#allocation3], 256
    $region41: #{tpu_custom_call.1} parent=1 // pred_fallthru
      _
    // Predicated region
    $region42: #{tpu_custom_call.1} parent=1 // pred_check
      _
    $region43: #{tpu_custom_call.1} parent=1 // pred_check_branch
      %3302 = sbr.rel (0) target = $region45
    $region44: #{tpu_custom_call.1} parent=1 // pred_region
      %3303 = dma.done [#allocation5], 2048
    $region45: #{tpu_custom_call.1} parent=1 // pred_fallthru
      _
    // Predicated region
    $region46: #{tpu_custom_call.1} parent=1 // pred_check
      _
    $region47: #{tpu_custom_call.1} parent=1 // pred_check_branch
      %3305 = sbr.rel (0) target = $region49
    $region48: #{tpu_custom_call.1} parent=1 // pred_region
      %3306 = dma.done [#allocation5], 256
    $region49: #{tpu_custom_call.1} parent=1 // pred_fallthru
      _
    %3307 = vsyncpa [#allocation3], 1
    %3308 = vsyncpa [#allocation5], 1

</llo_original>
